<compile_context>
chip_gen: v6e
topology: v6e:2x2x1
jax: 0.10.0
libtpu: 0.0.40
codegen_flags: <defaults>
</compile_context>

<pallas_src>
import functools

import jax
import jax.numpy as jnp
from jax import lax
from jax.experimental import pallas as pl
from jax.experimental.pallas import tpu as pltpu


# ----------------------------------------------------------------------------
# Helpers
# ----------------------------------------------------------------------------
def _round_up(x, m):
    return (x + m - 1) // m * m


def _pick_tile(dim, candidates, align):
    """Largest candidate tile that divides `dim` (no padding); otherwise a padded
    tile of at most max(candidates)."""
    for c in candidates:
        if dim % c == 0:
            return c
    return min(max(candidates), _round_up(dim, align))


def _pick_tm(m):
    """Row tile: full (rounded) extent for small M, else the candidate with the
    least padding waste (ties -> larger tile)."""
    if m <= 256:
        return _round_up(m, 8)
    best_tm, best_waste = None, None
    for c in (256, 128, 64):
        waste = _round_up(m, c) - m
        if best_waste is None or waste < best_waste:
            best_tm, best_waste = c, waste
    return best_tm


# ----------------------------------------------------------------------------
# Fused matmul kernel:
#   out = maybe_layernorm(maybe_relu(lhs @ rhs + bias [+ residual]))
#   * lhs / rhs are bf16 MXU operands, accumulator is f32 in VMEM
#   * LayerNorm fusion requires tn == N so the epilogue owns full rows
# ----------------------------------------------------------------------------
def _make_mm_kernel(relu, add_res, fuse_ln, ln_eps):
    def kernel(*refs):
        x_ref, w_ref, b_ref = refs[0], refs[1], refs[2]
        n = 3
        r_ref = g_ref = lb_ref = None
        if add_res:
            r_ref = refs[n]
            n += 1
        if fuse_ln:
            g_ref, lb_ref = refs[n], refs[n + 1]
            n += 2
        o_ref, acc_ref = refs[n], refs[n + 1]

        k = pl.program_id(2)

        @pl.when(k == 0)
        def _():
            acc_ref[...] = jnp.zeros_like(acc_ref)

        acc_ref[...] += jnp.dot(x_ref[...], w_ref[...],
                                preferred_element_type=jnp.float32)

        @pl.when(k == pl.num_programs(2) - 1)
        def _():
            y = acc_ref[...] + b_ref[...].astype(jnp.float32)
            if add_res:
                y = y + r_ref[...].astype(jnp.float32)   # residual added in f32
            if relu:
                y = jnp.maximum(y, 0.0)
            if fuse_ln:
                mu = jnp.mean(y, axis=-1, keepdims=True)
                yc = y - mu
                var = jnp.mean(yc * yc, axis=-1, keepdims=True)
                y = yc * lax.rsqrt(var + ln_eps) * g_ref[...] + lb_ref[...]
            o_ref[...] = y.astype(o_ref.dtype)

    return kernel


def fused_matmul(lhs, rhs, *, bias=None, residual=None, relu=False,
                 ln_gamma=None, ln_beta=None, ln_eps=1e-5,
                 out_dtype=jnp.float32):
    """lhs: (M, K), rhs: (K, N) -> (M, N) with fused bias/residual/ReLU/LN epilogue."""
    M, K = lhs.shape
    K2, N = rhs.shape
    assert K == K2
    if bias is None:
        bias = jnp.zeros((N,), jnp.float32)

    fuse_ln = ln_gamma is not None
    if fuse_ln:
        assert N % 128 == 0, "LayerNorm fusion needs N % 128 == 0"
        tn = N                      # epilogue must own the full row
    else:
        tn = _pick_tile(N, (256, 128), 128)
    tk = _pick_tile(K, (512, 256, 128), 128)
    tm = _pick_tm(M)
    Mp = _round_up(M, tm)
    Np = _round_up(N, tn)
    Kp = _round_up(K, tk)

    # bf16 MXU operands; cast only if not already bf16 (weights are stored bf16).
    lhs_b = lhs if lhs.dtype == jnp.bfloat16 else lhs.astype(jnp.bfloat16)
    rhs_b = rhs if rhs.dtype == jnp.bfloat16 else rhs.astype(jnp.bfloat16)
    if (Mp, Kp) != (M, K):
        lhs_b = jnp.pad(lhs_b, ((0, Mp - M), (0, Kp - K)))
    if (Kp, Np) != (K, N):
        rhs_b = jnp.pad(rhs_b, ((0, Kp - K), (0, Np - N)))
    b_p = bias.astype(jnp.float32).reshape(1, N)
    if Np != N:
        b_p = jnp.pad(b_p, ((0, 0), (0, Np - N)))

    add_res = residual is not None
    inputs = [lhs_b, rhs_b, b_p]
    in_specs = [
        pl.BlockSpec((tm, tk), lambda i, j, k: (i, k)),
        pl.BlockSpec((tk, tn), lambda i, j, k: (k, j)),
        pl.BlockSpec((1, tn), lambda i, j, k: (0, j)),
    ]
    if add_res:
        r_b = residual                       # keep the residual in its own dtype
        if (Mp, Np) != (M, N):
            r_b = jnp.pad(r_b, ((0, Mp - M), (0, Np - N)))
        inputs.append(r_b)
        in_specs.append(pl.BlockSpec((tm, tn), lambda i, j, k: (i, j)))
    if fuse_ln:
        g_p = ln_gamma.astype(jnp.float32).reshape(1, N)
        lb_p = ln_beta.astype(jnp.float32).reshape(1, N)
        inputs += [g_p, lb_p]
        in_specs += [pl.BlockSpec((1, tn), lambda i, j, k: (0, j)),
                     pl.BlockSpec((1, tn), lambda i, j, k: (0, j))]

    grid = (Mp // tm, Np // tn, Kp // tk)
    out = pl.pallas_call(
        _make_mm_kernel(relu, add_res, fuse_ln, ln_eps),
        out_shape=jax.ShapeDtypeStruct((Mp, Np), out_dtype),
        grid_spec=pltpu.PrefetchScalarGridSpec(
            num_scalar_prefetch=0,
            grid=grid,
            in_specs=in_specs,
            out_specs=pl.BlockSpec((tm, tn), lambda i, j, k: (i, j)),
            scratch_shapes=[pltpu.VMEM((tm, tn), jnp.float32)],
        ),
        compiler_params=pltpu.CompilerParams(
            dimension_semantics=("parallel", "parallel", "arbitrary")),
    )(*inputs)
    if (Mp, Np) != (M, N):
        out = out[:M, :N]
    return out


# ----------------------------------------------------------------------------
# Standalone LayerNorm kernel (fallback only, when embed_dim % 128 != 0)
# ----------------------------------------------------------------------------
def _ln_kernel(x_ref, g_ref, b_ref, o_ref, *, eps):
    x = x_ref[...].astype(jnp.float32)
    mu = jnp.mean(x, axis=-1, keepdims=True)
    xc = x - mu
    var = jnp.mean(xc * xc, axis=-1, keepdims=True)
    o_ref[...] = (xc * lax.rsqrt(var + eps) * g_ref[...]
                  + b_ref[...]).astype(o_ref.dtype)


def layer_norm(x, gamma, beta, eps=1e-5, out_dtype=jnp.float32):
    R, D = x.shape
    tr = min(512, _round_up(R, 8))           # large row tile: LN is HBM-bound
    Rp = _round_up(R, tr)
    xp = x if Rp == R else jnp.pad(x, ((0, Rp - R), (0, 0)))
    out = pl.pallas_call(
        functools.partial(_ln_kernel, eps=eps),
        out_shape=jax.ShapeDtypeStruct((Rp, D), out_dtype),
        grid_spec=pltpu.PrefetchScalarGridSpec(
            num_scalar_prefetch=0,
            grid=(Rp // tr,),
            in_specs=[pl.BlockSpec((tr, D), lambda i: (i, 0)),
                      pl.BlockSpec((1, D), lambda i: (0, 0)),
                      pl.BlockSpec((1, D), lambda i: (0, 0))],
            out_specs=pl.BlockSpec((tr, D), lambda i: (i, 0)),
        ),
        compiler_params=pltpu.CompilerParams(
            dimension_semantics=("parallel",)),
    )(xp, gamma.reshape(1, D).astype(jnp.float32),
      beta.reshape(1, D).astype(jnp.float32))
    return out[:R] if Rp != R else out


# ----------------------------------------------------------------------------
# Multi-head attention core, gridded over batch; fed the packed (B, S, 3d) qkv
# tensor directly (q/k/v selected by the BlockSpec index maps -> no XLA slices).
# Heads are a static loop on lane slices; bf16 MXU operands, f32 accumulation,
# per-head results written straight into their output lane slice (no concat).
# sm_scale is already folded into the q columns of the in-projection.
# ----------------------------------------------------------------------------
def _attn_kernel(q_ref, k_ref, v_ref, o_ref, *, num_heads):
    q = q_ref[...]                      # (1, S, d) bf16
    k = k_ref[...]
    v = v_ref[...]
    d = q.shape[-1]
    hd = d // num_heads
    for h in range(num_heads):          # static head loop, static lane slices
        sl = slice(h * hd, (h + 1) * hd)
        qh = q[..., sl]
        kh = k[..., sl]
        vh = v[..., sl]
        s = jnp.einsum('bqd,bkd->bqk', qh, kh,
                       preferred_element_type=jnp.float32)
        s = s - jnp.max(s, axis=-1, keepdims=True)
        p = jnp.exp(s)
        p = p / jnp.sum(p, axis=-1, keepdims=True)          # exact softmax
        oh = jnp.einsum('bqk,bkd->bqd', p.astype(jnp.bfloat16), vh,
                        preferred_element_type=jnp.float32)
        o_ref[:, :, h * hd:(h + 1) * hd] = oh.astype(o_ref.dtype)


def attention(qkv, *, num_heads):
    """qkv: (B, S, 3d) packed bf16 -> (B, S, d) bf16."""
    B, S, d3 = qkv.shape
    d = d3 // 3
    return pl.pallas_call(
        functools.partial(_attn_kernel, num_heads=num_heads),
        out_shape=jax.ShapeDtypeStruct((B, S, d), jnp.bfloat16),
        grid_spec=pltpu.PrefetchScalarGridSpec(
            num_scalar_prefetch=0,
            grid=(B,),
            in_specs=[pl.BlockSpec((1, S, d), lambda b: (b, 0, 0)),   # q slice
                      pl.BlockSpec((1, S, d), lambda b: (b, 0, 1)),   # k slice
                      pl.BlockSpec((1, S, d), lambda b: (b, 0, 2))],  # v slice
            out_specs=pl.BlockSpec((1, S, d), lambda b: (b, 0, 0)),
        ),
        compiler_params=pltpu.CompilerParams(
            dimension_semantics=("parallel",)),
    )(qkv, qkv, qkv)


# ----------------------------------------------------------------------------
# Patch embedding: Conv3d(1, E, kernel=stride=patch) == reshape + matmul
# ----------------------------------------------------------------------------
def patch_embed(x, w, b, patch_size):
    # x: (B, C=1, D, H, W)  NCDHW, like the PyTorch module.
    B, C, D, H, W = x.shape
    ps = patch_size
    nD, nH, nW = D // ps, H // ps, W // ps
    xb = x.astype(jnp.bfloat16)                              # halve transpose traffic
    xp = xb.reshape(B, C, nD, ps, nH, ps, nW, ps)
    xp = jnp.transpose(xp, (0, 2, 4, 6, 3, 5, 7, 1))         # (B,nD,nH,nW,ps,ps,ps,C)
    patches = xp.reshape(B * nD * nH * nW, ps * ps * ps * C)
    out = fused_matmul(patches, w, bias=b, out_dtype=jnp.float32)
    # token order == PyTorch x.flatten(2).transpose(1, 2): (d_idx, h_idx, w_idx)
    return out.reshape(B, nD * nH * nW, -1)


# ----------------------------------------------------------------------------
# TransformerEncoderLayer (batch_first, post-norm, ReLU MLP, eval-mode dropout)
# ----------------------------------------------------------------------------
def transformer_layer(x, p, num_heads):
    B, S, d = x.shape
    xf = x.reshape(B * S, d)                                  # bf16 activations

    qkv = fused_matmul(xf, p['in_w'], bias=p['in_b'],
                       out_dtype=jnp.bfloat16).reshape(B, S, 3 * d)
    o = attention(qkv, num_heads=num_heads).reshape(B * S, d)  # (B*S, d) bf16

    fuse_ln = (d % 128 == 0)
    if fuse_ln:
        # x + out_proj(attn), then LayerNorm1 -- both fused in the matmul epilogue
        x1 = fused_matmul(o, p['out_w'], bias=p['out_b'], residual=xf,
                          ln_gamma=p['ln1_g'], ln_beta=p['ln1_b'],
                          out_dtype=jnp.bfloat16)
        h = fused_matmul(x1, p['ff1_w'], bias=p['ff1_b'], relu=True,
                         out_dtype=jnp.bfloat16)
        x2 = fused_matmul(h, p['ff2_w'], bias=p['ff2_b'], residual=x1,
                          ln_gamma=p['ln2_g'], ln_beta=p['ln2_b'],
                          out_dtype=jnp.bfloat16)
    else:
        x1 = fused_matmul(o, p['out_w'], bias=p['out_b'], residual=xf)
        x1 = layer_norm(x1, p['ln1_g'], p['ln1_b'], out_dtype=jnp.bfloat16)
        h = fused_matmul(x1, p['ff1_w'], bias=p['ff1_b'], relu=True,
                         out_dtype=jnp.bfloat16)
        x2 = fused_matmul(h, p['ff2_w'], bias=p['ff2_b'], residual=x1)
        x2 = layer_norm(x2, p['ln2_g'], p['ln2_b'], out_dtype=jnp.bfloat16)
    return x2.reshape(B, S, d)


# ----------------------------------------------------------------------------
# Full MRI3DViT forward
# ----------------------------------------------------------------------------
def mri_3d_vit_forward(x, params, *, num_heads, patch_size):
    B = x.shape[0]
    tokens = patch_embed(x, params['patch_w'], params['patch_b'],
                         patch_size)                            # (B, P, E) f32
    d = tokens.shape[-1]
    cls = jnp.broadcast_to(params['cls_token'].astype(jnp.float32), (B, 1, d))
    x = jnp.concatenate([cls, tokens], axis=1)                  # (B, 1 + P, E)
    x = x + params['pos_embed'].astype(jnp.float32)             # pos added after cls cat
    x = x.astype(jnp.bfloat16)                                  # bf16 activations in stack

    for lp in params['tr_layers']:
        x = transformer_layer(x, lp, num_heads)

    return x[:, 0].astype(jnp.float32)                          # (B, E)


# ----------------------------------------------------------------------------
# Deterministic synthetic parameter init (module shapes; not a checkpoint load).
# Weights stored in bf16 once; 1/sqrt(head_dim) folded into in_proj q columns.
# ----------------------------------------------------------------------------
def init_params(key, *, image_size, patch_size, embed_dim, depth, num_heads, dff):
    keys = jax.random.split(key, 16 + depth * 16)
    kit = iter(keys)

    def nrm(shape, s=0.02, dtype=jnp.float32):
        return (s * jax.random.normal(next(kit), shape, jnp.float32)).astype(dtype)

    num_patches = (image_size // patch_size) ** 3
    sm_scale = 1.0 / float(embed_dim // num_heads) ** 0.5
    params = {
        # (patch^3 * Cin, embed_dim), first axis ordered (kd, kh, kw, cin)
        'patch_w': nrm((patch_size ** 3 * 1, embed_dim), dtype=jnp.bfloat16),
        'patch_b': nrm((embed_dim,)),
        # pos_embed covers cls + patches, like the PyTorch module
        'pos_embed': nrm((1, num_patches + 1, embed_dim)),
        'cls_token': nrm((1, 1, embed_dim)),
    }
    tr = []
    for _ in range(depth):
        in_w = nrm((embed_dim, 3 * embed_dim))
        in_b = nrm((3 * embed_dim,))
        # Fold the attention scale into the q slice of the in-projection (free).
        in_w = in_w.at[:, :embed_dim].multiply(sm_scale)
        in_b = in_b.at[:embed_dim].multiply(sm_scale)
        tr.append({
            'in_w': in_w.astype(jnp.bfloat16),
            'in_b': in_b,
            'out_w': nrm((embed_dim, embed_dim), dtype=jnp.bfloat16),
            'out_b': nrm((embed_dim,)),
            'ln1_g': jnp.ones((embed_dim,), jnp.float32),
            'ln1_b': jnp.zeros((embed_dim,), jnp.float32),
            'ff1_w': nrm((embed_dim, dff), dtype=jnp.bfloat16),
            'ff1_b': nrm((dff,)),
            'ff2_w': nrm((dff, embed_dim), dtype=jnp.bfloat16),
            'ff2_b': nrm((embed_dim,)),
            'ln2_g': jnp.ones((embed_dim,), jnp.float32),
            'ln2_b': jnp.zeros((embed_dim,), jnp.float32),
        })
    params['tr_layers'] = tr
    return params


if __name__ == "__main__":
    # Small config consistent with the module (scaled-down embed_dim / depth / dff;
    # head_dim = 64 matches the original 768/12).
    image_size = 32
    patch_size = 16
    embed_dim = 128
    depth = 2
    num_heads = 2
    dff = 256          # scaled-down dim_feedforward (PyTorch default is 2048)
    B = 2

    key = jax.random.PRNGKey(0)
    pkey, xkey = jax.random.split(key)
    params = init_params(pkey, image_size=image_size, patch_size=patch_size,
                         embed_dim=embed_dim, depth=depth, num_heads=num_heads,
                         dff=dff)

    # NCDHW input, single channel: (B, 1, D, H, W)
    x = jax.random.normal(
        xkey, (B, 1, image_size, image_size, image_size), jnp.float32)

    fwd = jax.jit(functools.partial(mri_3d_vit_forward,
                                    num_heads=num_heads, patch_size=patch_size))
    out = jax.block_until_ready(fwd(x, params))
    assert out.shape == (B, embed_dim), out.shape
    print("KERNEL_OK")
</pallas_src>

<mosaic_0001>
module attributes {stable_mosaic.version = 11 : i64} {
  func.func @kernel(%arg0: i32, %arg1: i32, %arg2: i32, %arg3: memref<16x512xbf16, #tpu.memory_space<vmem>>, %arg4: memref<512x128xbf16, #tpu.memory_space<vmem>>, %arg5: memref<1x128xf32, #tpu.memory_space<vmem>>, %arg6: memref<16x128xf32, #tpu.memory_space<vmem>>, %arg7: memref<16x128xf32, #tpu.memory_space<vmem>>) attributes {dimension_semantics = [#tpu.dimension_semantics<parallel>, #tpu.dimension_semantics<parallel>, #tpu.dimension_semantics<arbitrary>], iteration_bounds = array<i64: 1, 1, 8>, scalar_prefetch = 0 : i64, scratch_operands = 1 : i64, tpu.core_type = #tpu.core_type<tc>, window_params = [{transform_indices = @transform_0, window_bounds = array<i64: 16, 512>}, {transform_indices = @transform_1, window_bounds = array<i64: 512, 128>}, {transform_indices = @transform_2, window_bounds = array<i64: 1, 128>}, {transform_indices = @transform_3, window_bounds = array<i64: 16, 128>}]} {
    %c0_i32 = arith.constant 0 : i32
    %0 = arith.cmpi eq, %arg2, %c0_i32 : i32
    %1 = arith.extui %0 : i1 to i32
    %c0_i32_0 = arith.constant 0 : i32
    %2 = arith.cmpi ne, %1, %c0_i32_0 : i32
    scf.if %2 {
      %cst_9 = arith.constant 0.000000e+00 : f32
      %12 = vector.broadcast %cst_9 : f32 to vector<16x128xf32>
      %c0_10 = arith.constant 0 : index
      %c0_11 = arith.constant 0 : index
      %13 = vector.load %arg7[%c0_10, %c0_11] : memref<16x128xf32, #tpu.memory_space<vmem>>, vector<16x128xf32>
      tpu.vector_store %arg7[%c0_10, %c0_11], %12 {strides = array<i32>} : memref<16x128xf32, #tpu.memory_space<vmem>>, vector<16x128xf32>,
    } else {
    }
    %c0 = arith.constant 0 : index
    %c0_1 = arith.constant 0 : index
    %3 = vector.load %arg7[%c0, %c0_1] : memref<16x128xf32, #tpu.memory_space<vmem>>, vector<16x128xf32>
    %c0_2 = arith.constant 0 : index
    %c0_3 = arith.constant 0 : index
    %4 = vector.load %arg3[%c0_2, %c0_3] : memref<16x512xbf16, #tpu.memory_space<vmem>>, vector<16x512xbf16>
    %c0_4 = arith.constant 0 : index
    %c0_5 = arith.constant 0 : index
    %5 = vector.load %arg4[%c0_4, %c0_5] : memref<512x128xbf16, #tpu.memory_space<vmem>>, vector<512x128xbf16>
    %cst = arith.constant dense<0.000000e+00> : vector<16x128xf32>
    %6 = tpu.matmul %4, %5, %cst {dimension_numbers = #tpu.dot_dimension_numbers<[1], [0], [0], [1], [0, 0, 1, 1], [], []>} : vector<16x512xbf16>, vector<512x128xbf16>, vector<16x128xf32> -> vector<16x128xf32>
    %7 = arith.addf %3, %6 : vector<16x128xf32>
    %c0_6 = arith.constant 0 : index
    %c0_7 = arith.constant 0 : index
    %8 = vector.load %arg7[%c0_6, %c0_7] : memref<16x128xf32, #tpu.memory_space<vmem>>, vector<16x128xf32>
    tpu.vector_store %arg7[%c0_6, %c0_7], %7 {strides = array<i32>} : memref<16x128xf32, #tpu.memory_space<vmem>>, vector<16x128xf32>,
    %c7_i32 = arith.constant 7 : i32
    %9 = arith.cmpi eq, %arg2, %c7_i32 : i32
    %10 = arith.extui %9 : i1 to i32
    %c0_i32_8 = arith.constant 0 : i32
    %11 = arith.cmpi ne, %10, %c0_i32_8 : i32
    scf.if %11 {
      %c0_9 = arith.constant 0 : index
      %c0_10 = arith.constant 0 : index
      %12 = vector.load %arg7[%c0_9, %c0_10] : memref<16x128xf32, #tpu.memory_space<vmem>>, vector<16x128xf32>
      %c0_11 = arith.constant 0 : index
      %c0_12 = arith.constant 0 : index
      %13 = vector.load %arg5[%c0_11, %c0_12] : memref<1x128xf32, #tpu.memory_space<vmem>>, vector<1x128xf32>
      %14 = vector.broadcast %13 : vector<1x128xf32> to vector<16x128xf32>
      %15 = arith.addf %12, %14 : vector<16x128xf32>
      %c0_13 = arith.constant 0 : index
      %c0_14 = arith.constant 0 : index
      %16 = vector.load %arg6[%c0_13, %c0_14] : memref<16x128xf32, #tpu.memory_space<vmem>>, vector<16x128xf32>
      tpu.vector_store %arg6[%c0_13, %c0_14], %15 {strides = array<i32>} : memref<16x128xf32, #tpu.memory_space<vmem>>, vector<16x128xf32>,
    } else {
    }
    return
  }
  func.func @transform_0(%arg0: i32, %arg1: i32, %arg2: i32) -> (i32, i32) {
    %c0_i32 = arith.constant 0 : i32
    return %arg0, %arg2 : i32, i32
  }
  func.func @transform_1(%arg0: i32, %arg1: i32, %arg2: i32) -> (i32, i32) {
    %c0_i32 = arith.constant 0 : i32
    return %arg2, %arg1 : i32, i32
  }
  func.func @transform_2(%arg0: i32, %arg1: i32, %arg2: i32) -> (i32, i32) {
    %c0_i32 = arith.constant 0 : i32
    %c0_i32_0 = arith.constant 0 : i32
    return %c0_i32, %arg1 : i32, i32
  }
  func.func @transform_3(%arg0: i32, %arg1: i32, %arg2: i32) -> (i32, i32) {
    %c0_i32 = arith.constant 0 : i32
    return %arg0, %arg1 : i32, i32
  }
}

module attributes {stable_mosaic.version = 11 : i64} {
  func.func @kernel(%arg0: i32, %arg1: i32, %arg2: i32, %arg3: memref<24x128xbf16, #tpu.memory_space<vmem>>, %arg4: memref<128x128xbf16, #tpu.memory_space<vmem>>, %arg5: memref<1x128xf32, #tpu.memory_space<vmem>>, %arg6: memref<24x128xbf16, #tpu.memory_space<vmem>>, %arg7: memref<24x128xf32, #tpu.memory_space<vmem>>) attributes {dimension_semantics = [#tpu.dimension_semantics<parallel>, #tpu.dimension_semantics<parallel>, #tpu.dimension_semantics<arbitrary>], iteration_bounds = array<i64: 1, 3, 1>, scalar_prefetch = 0 : i64, scratch_operands = 1 : i64, tpu.core_type = #tpu.core_type<tc>, window_params = [{transform_indices = @transform_0, window_bounds = array<i64: 24, 128>}, {transform_indices = @transform_1, window_bounds = array<i64: 128, 128>}, {transform_indices = @transform_2, window_bounds = array<i64: 1, 128>}, {transform_indices = @transform_3, window_bounds = array<i64: 24, 128>}]} {
    %c0_i32 = arith.constant 0 : i32
    %0 = arith.cmpi eq, %arg2, %c0_i32 : i32
    %1 = arith.extui %0 : i1 to i32
    %c0_i32_0 = arith.constant 0 : i32
    %2 = arith.cmpi ne, %1, %c0_i32_0 : i32
    scf.if %2 {
      %cst_10 = arith.constant 0.000000e+00 : f32
      %12 = vector.broadcast %cst_10 : f32 to vector<24x128xf32>
      %c0_11 = arith.constant 0 : index
      %c0_12 = arith.constant 0 : index
      %13 = vector.load %arg7[%c0_11, %c0_12] : memref<24x128xf32, #tpu.memory_space<vmem>>, vector<24x128xf32>
      tpu.vector_store %arg7[%c0_11, %c0_12], %12 {strides = array<i32>} : memref<24x128xf32, #tpu.memory_space<vmem>>, vector<24x128xf32>,
    } else {
    }
    %c0 = arith.constant 0 : index
    %c0_1 = arith.constant 0 : index
    %3 = vector.load %arg7[%c0, %c0_1] : memref<24x128xf32, #tpu.memory_space<vmem>>, vector<24x128xf32>
    %c0_2 = arith.constant 0 : index
    %c0_3 = arith.constant 0 : index
    %4 = vector.load %arg3[%c0_2, %c0_3] : memref<24x128xbf16, #tpu.memory_space<vmem>>, vector<24x128xbf16>
    %c0_4 = arith.constant 0 : index
    %c0_5 = arith.constant 0 : index
    %5 = vector.load %arg4[%c0_4, %c0_5] : memref<128x128xbf16, #tpu.memory_space<vmem>>, vector<128x128xbf16>
    %cst = arith.constant dense<0.000000e+00> : vector<24x128xf32>
    %6 = tpu.matmul %4, %5, %cst {dimension_numbers = #tpu.dot_dimension_numbers<[1], [0], [0], [1], [0, 0, 1, 1], [], []>} : vector<24x128xbf16>, vector<128x128xbf16>, vector<24x128xf32> -> vector<24x128xf32>
    %7 = arith.addf %3, %6 : vector<24x128xf32>
    %c0_6 = arith.constant 0 : index
    %c0_7 = arith.constant 0 : index
    %8 = vector.load %arg7[%c0_6, %c0_7] : memref<24x128xf32, #tpu.memory_space<vmem>>, vector<24x128xf32>
    tpu.vector_store %arg7[%c0_6, %c0_7], %7 {strides = array<i32>} : memref<24x128xf32, #tpu.memory_space<vmem>>, vector<24x128xf32>,
    %c0_i32_8 = arith.constant 0 : i32
    %9 = arith.cmpi eq, %arg2, %c0_i32_8 : i32
    %10 = arith.extui %9 : i1 to i32
    %c0_i32_9 = arith.constant 0 : i32
    %11 = arith.cmpi ne, %10, %c0_i32_9 : i32
    scf.if %11 {
      %c0_10 = arith.constant 0 : index
      %c0_11 = arith.constant 0 : index
      %12 = vector.load %arg7[%c0_10, %c0_11] : memref<24x128xf32, #tpu.memory_space<vmem>>, vector<24x128xf32>
      %c0_12 = arith.constant 0 : index
      %c0_13 = arith.constant 0 : index
      %13 = vector.load %arg5[%c0_12, %c0_13] : memref<1x128xf32, #tpu.memory_space<vmem>>, vector<1x128xf32>
      %14 = vector.broadcast %13 : vector<1x128xf32> to vector<24x128xf32>
      %15 = arith.addf %12, %14 : vector<24x128xf32>
      %16 = arith.truncf %15 : vector<24x128xf32> to vector<24x128xbf16>
      %c0_14 = arith.constant 0 : index
      %c0_15 = arith.constant 0 : index
      %17 = vector.load %arg6[%c0_14, %c0_15] : memref<24x128xbf16, #tpu.memory_space<vmem>>, vector<24x128xbf16>
      tpu.vector_store %arg6[%c0_14, %c0_15], %16 {strides = array<i32>} : memref<24x128xbf16, #tpu.memory_space<vmem>>, vector<24x128xbf16>,
    } else {
    }
    return
  }
  func.func @transform_0(%arg0: i32, %arg1: i32, %arg2: i32) -> (i32, i32) {
    %c0_i32 = arith.constant 0 : i32
    return %arg0, %arg2 : i32, i32
  }
  func.func @transform_1(%arg0: i32, %arg1: i32, %arg2: i32) -> (i32, i32) {
    %c0_i32 = arith.constant 0 : i32
    return %arg2, %arg1 : i32, i32
  }
  func.func @transform_2(%arg0: i32, %arg1: i32, %arg2: i32) -> (i32, i32) {
    %c0_i32 = arith.constant 0 : i32
    %c0_i32_0 = arith.constant 0 : i32
    return %c0_i32, %arg1 : i32, i32
  }
  func.func @transform_3(%arg0: i32, %arg1: i32, %arg2: i32) -> (i32, i32) {
    %c0_i32 = arith.constant 0 : i32
    return %arg0, %arg1 : i32, i32
  }
}

module attributes {stable_mosaic.version = 11 : i64} {
  func.func @_attn_kernel(%arg0: i32, %arg1: memref<1x9x128xbf16, #tpu.memory_space<vmem>>, %arg2: memref<1x9x128xbf16, #tpu.memory_space<vmem>>, %arg3: memref<1x9x128xbf16, #tpu.memory_space<vmem>>, %arg4: memref<1x9x128xbf16, #tpu.memory_space<vmem>>) attributes {dimension_semantics = [#tpu.dimension_semantics<parallel>], iteration_bounds = array<i64: 2>, scalar_prefetch = 0 : i64, scratch_operands = 0 : i64, tpu.core_type = #tpu.core_type<tc>, window_params = [{transform_indices = @transform_0, window_bounds = array<i64: 1, 9, 128>}, {transform_indices = @transform_1, window_bounds = array<i64: 1, 9, 128>}, {transform_indices = @transform_2, window_bounds = array<i64: 1, 9, 128>}, {transform_indices = @transform_3, window_bounds = array<i64: 1, 9, 128>}]} {
    %c0 = arith.constant 0 : index
    %c0_0 = arith.constant 0 : index
    %c0_1 = arith.constant 0 : index
    %0 = vector.load %arg1[%c0, %c0_0, %c0_1] : memref<1x9x128xbf16, #tpu.memory_space<vmem>>, vector<1x9x128xbf16>
    %c0_2 = arith.constant 0 : index
    %c0_3 = arith.constant 0 : index
    %c0_4 = arith.constant 0 : index
    %1 = vector.load %arg2[%c0_2, %c0_3, %c0_4] : memref<1x9x128xbf16, #tpu.memory_space<vmem>>, vector<1x9x128xbf16>
    %c0_5 = arith.constant 0 : index
    %c0_6 = arith.constant 0 : index
    %c0_7 = arith.constant 0 : index
    %2 = vector.load %arg3[%c0_5, %c0_6, %c0_7] : memref<1x9x128xbf16, #tpu.memory_space<vmem>>, vector<1x9x128xbf16>
    %3 = vector.extract_strided_slice %0 {offsets = [0, 0, 0], sizes = [1, 9, 64], strides = [1, 1, 1]} : vector<1x9x128xbf16> to vector<1x9x64xbf16>
    %4 = vector.extract_strided_slice %1 {offsets = [0, 0, 0], sizes = [1, 9, 64], strides = [1, 1, 1]} : vector<1x9x128xbf16> to vector<1x9x64xbf16>
    %5 = vector.extract_strided_slice %2 {offsets = [0, 0, 0], sizes = [1, 9, 64], strides = [1, 1, 1]} : vector<1x9x128xbf16> to vector<1x9x64xbf16>
    "tpu.trace_start"() <{level = 10 : i32, message = "bqd,bkd->bqk"}> : () -> ()
    %cst = arith.constant dense<0.000000e+00> : vector<1x9x9xf32>
    %6 = tpu.matmul %3, %4, %cst {dimension_numbers = #tpu.dot_dimension_numbers<[2], [2], [1], [1], [0, 0, 0, 1, 1, 1], [0], [0]>} : vector<1x9x64xbf16>, vector<1x9x64xbf16>, vector<1x9x9xf32> -> vector<1x9x9xf32>
    "tpu.trace_stop"() : () -> ()
    %cst_8 = arith.constant dense<0xFF800000> : vector<1x9xf32>
    %7 = vector.multi_reduction <maximumf>, %6, %cst_8 [2] : vector<1x9x9xf32> to vector<1x9xf32>
    %8 = vector.shape_cast %7 : vector<1x9xf32> to vector<1x9x1xf32>
    %9 = vector.broadcast %8 : vector<1x9x1xf32> to vector<1x9x9xf32>
    %10 = arith.subf %6, %9 : vector<1x9x9xf32>
    %11 = math.exp %10 : vector<1x9x9xf32>
    %cst_9 = arith.constant dense<0.000000e+00> : vector<1x9xf32>
    %12 = vector.multi_reduction <add>, %11, %cst_9 [2] : vector<1x9x9xf32> to vector<1x9xf32>
    %13 = vector.shape_cast %12 : vector<1x9xf32> to vector<1x9x1xf32>
    %14 = vector.broadcast %13 : vector<1x9x1xf32> to vector<1x9x9xf32>
    %15 = arith.divf %11, %14 : vector<1x9x9xf32>
    %16 = arith.truncf %15 : vector<1x9x9xf32> to vector<1x9x9xbf16>
    "tpu.trace_start"() <{level = 10 : i32, message = "bqk,bkd->bqd"}> : () -> ()
    %cst_10 = arith.constant dense<0.000000e+00> : vector<1x9x64xf32>
    %17 = tpu.matmul %16, %5, %cst_10 {dimension_numbers = #tpu.dot_dimension_numbers<[2], [1], [1], [2], [0, 0, 0, 1, 1, 2], [0], [0]>} : vector<1x9x9xbf16>, vector<1x9x64xbf16>, vector<1x9x64xf32> -> vector<1x9x64xf32>
    "tpu.trace_stop"() : () -> ()
    %18 = arith.truncf %17 : vector<1x9x64xf32> to vector<1x9x64xbf16>
    %c0_11 = arith.constant 0 : index
    %c0_12 = arith.constant 0 : index
    %c0_13 = arith.constant 0 : index
    %19 = vector.load %arg4[%c0_11, %c0_12, %c0_13] : memref<1x9x128xbf16, #tpu.memory_space<vmem>>, vector<1x9x64xbf16>
    tpu.vector_store %arg4[%c0_11, %c0_12, %c0_13], %18 {strides = array<i32>} : memref<1x9x128xbf16, #tpu.memory_space<vmem>>, vector<1x9x64xbf16>,
    %20 = vector.extract_strided_slice %0 {offsets = [0, 0, 64], sizes = [1, 9, 64], strides = [1, 1, 1]} : vector<1x9x128xbf16> to vector<1x9x64xbf16>
    %21 = vector.extract_strided_slice %1 {offsets = [0, 0, 64], sizes = [1, 9, 64], strides = [1, 1, 1]} : vector<1x9x128xbf16> to vector<1x9x64xbf16>
    %22 = vector.extract_strided_slice %2 {offsets = [0, 0, 64], sizes = [1, 9, 64], strides = [1, 1, 1]} : vector<1x9x128xbf16> to vector<1x9x64xbf16>
    "tpu.trace_start"() <{level = 10 : i32, message = "bqd,bkd->bqk"}> : () -> ()
    %cst_14 = arith.constant dense<0.000000e+00> : vector<1x9x9xf32>
    %23 = tpu.matmul %20, %21, %cst_14 {dimension_numbers = #tpu.dot_dimension_numbers<[2], [2], [1], [1], [0, 0, 0, 1, 1, 1], [0], [0]>} : vector<1x9x64xbf16>, vector<1x9x64xbf16>, vector<1x9x9xf32> -> vector<1x9x9xf32>
    "tpu.trace_stop"() : () -> ()
    %cst_15 = arith.constant dense<0xFF800000> : vector<1x9xf32>
    %24 = vector.multi_reduction <maximumf>, %23, %cst_15 [2] : vector<1x9x9xf32> to vector<1x9xf32>
    %25 = vector.shape_cast %24 : vector<1x9xf32> to vector<1x9x1xf32>
    %26 = vector.broadcast %25 : vector<1x9x1xf32> to vector<1x9x9xf32>
    %27 = arith.subf %23, %26 : vector<1x9x9xf32>
    %28 = math.exp %27 : vector<1x9x9xf32>
    %cst_16 = arith.constant dense<0.000000e+00> : vector<1x9xf32>
    %29 = vector.multi_reduction <add>, %28, %cst_16 [2] : vector<1x9x9xf32> to vector<1x9xf32>
    %30 = vector.shape_cast %29 : vector<1x9xf32> to vector<1x9x1xf32>
    %31 = vector.broadcast %30 : vector<1x9x1xf32> to vector<1x9x9xf32>
    %32 = arith.divf %28, %31 : vector<1x9x9xf32>
    %33 = arith.truncf %32 : vector<1x9x9xf32> to vector<1x9x9xbf16>
    "tpu.trace_start"() <{level = 10 : i32, message = "bqk,bkd->bqd"}> : () -> ()
    %cst_17 = arith.constant dense<0.000000e+00> : vector<1x9x64xf32>
    %34 = tpu.matmul %33, %22, %cst_17 {dimension_numbers = #tpu.dot_dimension_numbers<[2], [1], [1], [2], [0, 0, 0, 1, 1, 2], [0], [0]>} : vector<1x9x9xbf16>, vector<1x9x64xbf16>, vector<1x9x64xf32> -> vector<1x9x64xf32>
    "tpu.trace_stop"() : () -> ()
    %35 = arith.truncf %34 : vector<1x9x64xf32> to vector<1x9x64xbf16>
    %c0_18 = arith.constant 0 : index
    %c0_19 = arith.constant 0 : index
    %c64 = arith.constant 64 : index
    %36 = vector.load %arg4[%c0_18, %c0_19, %c64] : memref<1x9x128xbf16, #tpu.memory_space<vmem>>, vector<1x9x64xbf16>
    tpu.vector_store %arg4[%c0_18, %c0_19, %c64], %35 {strides = array<i32>} : memref<1x9x128xbf16, #tpu.memory_space<vmem>>, vector<1x9x64xbf16>,
    return
  }
  func.func @transform_0(%arg0: i32) -> (i32, i32, i32) {
    %c0_i32 = arith.constant 0 : i32
    %c0_i32_0 = arith.constant 0 : i32
    %c0_i32_1 = arith.constant 0 : i32
    return %arg0, %c0_i32, %c0_i32_0 : i32, i32, i32
  }
  func.func @transform_1(%arg0: i32) -> (i32, i32, i32) {
    %c0_i32 = arith.constant 0 : i32
    %c1_i32 = arith.constant 1 : i32
    %c0_i32_0 = arith.constant 0 : i32
    return %arg0, %c0_i32, %c1_i32 : i32, i32, i32
  }
  func.func @transform_2(%arg0: i32) -> (i32, i32, i32) {
    %c0_i32 = arith.constant 0 : i32
    %c2_i32 = arith.constant 2 : i32
    %c0_i32_0 = arith.constant 0 : i32
    return %arg0, %c0_i32, %c2_i32 : i32, i32, i32
  }
  func.func @transform_3(%arg0: i32) -> (i32, i32, i32) {
    %c0_i32 = arith.constant 0 : i32
    %c0_i32_0 = arith.constant 0 : i32
    %c0_i32_1 = arith.constant 0 : i32
    return %arg0, %c0_i32, %c0_i32_0 : i32, i32, i32
  }
}

module attributes {stable_mosaic.version = 11 : i64} {
  func.func @kernel(%arg0: i32, %arg1: i32, %arg2: i32, %arg3: memref<24x128xbf16, #tpu.memory_space<vmem>>, %arg4: memref<128x128xbf16, #tpu.memory_space<vmem>>, %arg5: memref<1x128xf32, #tpu.memory_space<vmem>>, %arg6: memref<24x128xbf16, #tpu.memory_space<vmem>>, %arg7: memref<1x128xf32, #tpu.memory_space<vmem>>, %arg8: memref<1x128xf32, #tpu.memory_space<vmem>>, %arg9: memref<24x128xbf16, #tpu.memory_space<vmem>>, %arg10: memref<24x128xf32, #tpu.memory_space<vmem>>) attributes {dimension_semantics = [#tpu.dimension_semantics<parallel>, #tpu.dimension_semantics<parallel>, #tpu.dimension_semantics<arbitrary>], iteration_bounds = array<i64: 1, 1, 1>, scalar_prefetch = 0 : i64, scratch_operands = 1 : i64, tpu.core_type = #tpu.core_type<tc>, window_params = [{transform_indices = @transform_0, window_bounds = array<i64: 24, 128>}, {transform_indices = @transform_1, window_bounds = array<i64: 128, 128>}, {transform_indices = @transform_2, window_bounds = array<i64: 1, 128>}, {transform_indices = @transform_3, window_bounds = array<i64: 24, 128>}, {transform_indices = @transform_4, window_bounds = array<i64: 1, 128>}, {transform_indices = @transform_5, window_bounds = array<i64: 1, 128>}, {transform_indices = @transform_6, window_bounds = array<i64: 24, 128>}]} {
    %c0_i32 = arith.constant 0 : i32
    %0 = arith.cmpi eq, %arg2, %c0_i32 : i32
    %1 = arith.extui %0 : i1 to i32
    %c0_i32_0 = arith.constant 0 : i32
    %2 = arith.cmpi ne, %1, %c0_i32_0 : i32
    scf.if %2 {
      %cst_10 = arith.constant 0.000000e+00 : f32
      %12 = vector.broadcast %cst_10 : f32 to vector<24x128xf32>
      %c0_11 = arith.constant 0 : index
      %c0_12 = arith.constant 0 : index
      %13 = vector.load %arg10[%c0_11, %c0_12] : memref<24x128xf32, #tpu.memory_space<vmem>>, vector<24x128xf32>
      tpu.vector_store %arg10[%c0_11, %c0_12], %12 {strides = array<i32>} : memref<24x128xf32, #tpu.memory_space<vmem>>, vector<24x128xf32>,
    } else {
    }
    %c0 = arith.constant 0 : index
    %c0_1 = arith.constant 0 : index
    %3 = vector.load %arg10[%c0, %c0_1] : memref<24x128xf32, #tpu.memory_space<vmem>>, vector<24x128xf32>
    %c0_2 = arith.constant 0 : index
    %c0_3 = arith.constant 0 : index
    %4 = vector.load %arg3[%c0_2, %c0_3] : memref<24x128xbf16, #tpu.memory_space<vmem>>, vector<24x128xbf16>
    %c0_4 = arith.constant 0 : index
    %c0_5 = arith.constant 0 : index
    %5 = vector.load %arg4[%c0_4, %c0_5] : memref<128x128xbf16, #tpu.memory_space<vmem>>, vector<128x128xbf16>
    %cst = arith.constant dense<0.000000e+00> : vector<24x128xf32>
    %6 = tpu.matmul %4, %5, %cst {dimension_numbers = #tpu.dot_dimension_numbers<[1], [0], [0], [1], [0, 0, 1, 1], [], []>} : vector<24x128xbf16>, vector<128x128xbf16>, vector<24x128xf32> -> vector<24x128xf32>
    %7 = arith.addf %3, %6 : vector<24x128xf32>
    %c0_6 = arith.constant 0 : index
    %c0_7 = arith.constant 0 : index
    %8 = vector.load %arg10[%c0_6, %c0_7] : memref<24x128xf32, #tpu.memory_space<vmem>>, vector<24x128xf32>
    tpu.vector_store %arg10[%c0_6, %c0_7], %7 {strides = array<i32>} : memref<24x128xf32, #tpu.memory_space<vmem>>, vector<24x128xf32>,
    %c0_i32_8 = arith.constant 0 : i32
    %9 = arith.cmpi eq, %arg2, %c0_i32_8 : i32
    %10 = arith.extui %9 : i1 to i32
    %c0_i32_9 = arith.constant 0 : i32
    %11 = arith.cmpi ne, %10, %c0_i32_9 : i32
    scf.if %11 {
      %c0_10 = arith.constant 0 : index
      %c0_11 = arith.constant 0 : index
      %12 = vector.load %arg10[%c0_10, %c0_11] : memref<24x128xf32, #tpu.memory_space<vmem>>, vector<24x128xf32>
      %c0_12 = arith.constant 0 : index
      %c0_13 = arith.constant 0 : index
      %13 = vector.load %arg5[%c0_12, %c0_13] : memref<1x128xf32, #tpu.memory_space<vmem>>, vector<1x128xf32>
      %14 = vector.broadcast %13 : vector<1x128xf32> to vector<24x128xf32>
      %15 = arith.addf %12, %14 : vector<24x128xf32>
      %c0_14 = arith.constant 0 : index
      %c0_15 = arith.constant 0 : index
      %16 = vector.load %arg6[%c0_14, %c0_15] : memref<24x128xbf16, #tpu.memory_space<vmem>>, vector<24x128xbf16>
      %17 = arith.extf %16 : vector<24x128xbf16> to vector<24x128xf32>
      %18 = arith.addf %15, %17 : vector<24x128xf32>
      %cst_16 = arith.constant dense<0.000000e+00> : vector<24xf32>
      %19 = vector.multi_reduction <add>, %18, %cst_16 [1] : vector<24x128xf32> to vector<24xf32>
      %20 = vector.shape_cast %19 : vector<24xf32> to vector<24x1xf32>
      %cst_17 = arith.constant 1.280000e+02 : f32
      %21 = vector.broadcast %cst_17 : f32 to vector<24x1xf32>
      %22 = arith.divf %20, %21 : vector<24x1xf32>
      %23 = vector.broadcast %22 : vector<24x1xf32> to vector<24x128xf32>
      %24 = arith.subf %18, %23 : vector<24x128xf32>
      %25 = arith.mulf %24, %24 : vector<24x128xf32>
      %cst_18 = arith.constant dense<0.000000e+00> : vector<24xf32>
      %26 = vector.multi_reduction <add>, %25, %cst_18 [1] : vector<24x128xf32> to vector<24xf32>
      %27 = vector.shape_cast %26 : vector<24xf32> to vector<24x1xf32>
      %cst_19 = arith.constant 1.280000e+02 : f32
      %28 = vector.broadcast %cst_19 : f32 to vector<24x1xf32>
      %29 = arith.divf %27, %28 : vector<24x1xf32>
      %cst_20 = arith.constant 9.99999974E-6 : f32
      %30 = vector.broadcast %cst_20 : f32 to vector<24x1xf32>
      %31 = arith.addf %29, %30 : vector<24x1xf32>
      %32 = math.rsqrt %31 : vector<24x1xf32>
      %33 = vector.broadcast %32 : vector<24x1xf32> to vector<24x128xf32>
      %34 = arith.mulf %24, %33 : vector<24x128xf32>
      %c0_21 = arith.constant 0 : index
      %c0_22 = arith.constant 0 : index
      %35 = vector.load %arg7[%c0_21, %c0_22] : memref<1x128xf32, #tpu.memory_space<vmem>>, vector<1x128xf32>
      %36 = vector.broadcast %35 : vector<1x128xf32> to vector<24x128xf32>
      %37 = arith.mulf %34, %36 : vector<24x128xf32>
      %c0_23 = arith.constant 0 : index
      %c0_24 = arith.constant 0 : index
      %38 = vector.load %arg8[%c0_23, %c0_24] : memref<1x128xf32, #tpu.memory_space<vmem>>, vector<1x128xf32>
      %39 = vector.broadcast %38 : vector<1x128xf32> to vector<24x128xf32>
      %40 = arith.addf %37, %39 : vector<24x128xf32>
      %41 = arith.truncf %40 : vector<24x128xf32> to vector<24x128xbf16>
      %c0_25 = arith.constant 0 : index
      %c0_26 = arith.constant 0 : index
      %42 = vector.load %arg9[%c0_25, %c0_26] : memref<24x128xbf16, #tpu.memory_space<vmem>>, vector<24x128xbf16>
      tpu.vector_store %arg9[%c0_25, %c0_26], %41 {strides = array<i32>} : memref<24x128xbf16, #tpu.memory_space<vmem>>, vector<24x128xbf16>,
    } else {
    }
    return
  }
  func.func @transform_0(%arg0: i32, %arg1: i32, %arg2: i32) -> (i32, i32) {
    %c0_i32 = arith.constant 0 : i32
    return %arg0, %arg2 : i32, i32
  }
  func.func @transform_1(%arg0: i32, %arg1: i32, %arg2: i32) -> (i32, i32) {
    %c0_i32 = arith.constant 0 : i32
    return %arg2, %arg1 : i32, i32
  }
  func.func @transform_2(%arg0: i32, %arg1: i32, %arg2: i32) -> (i32, i32) {
    %c0_i32 = arith.constant 0 : i32
    %c0_i32_0 = arith.constant 0 : i32
    return %c0_i32, %arg1 : i32, i32
  }
  func.func @transform_3(%arg0: i32, %arg1: i32, %arg2: i32) -> (i32, i32) {
    %c0_i32 = arith.constant 0 : i32
    return %arg0, %arg1 : i32, i32
  }
  func.func @transform_4(%arg0: i32, %arg1: i32, %arg2: i32) -> (i32, i32) {
    %c0_i32 = arith.constant 0 : i32
    %c0_i32_0 = arith.constant 0 : i32
    return %c0_i32, %arg1 : i32, i32
  }
  func.func @transform_5(%arg0: i32, %arg1: i32, %arg2: i32) -> (i32, i32) {
    %c0_i32 = arith.constant 0 : i32
    %c0_i32_0 = arith.constant 0 : i32
    return %c0_i32, %arg1 : i32, i32
  }
  func.func @transform_6(%arg0: i32, %arg1: i32, %arg2: i32) -> (i32, i32) {
    %c0_i32 = arith.constant 0 : i32
    return %arg0, %arg1 : i32, i32
  }
}

module attributes {stable_mosaic.version = 11 : i64} {
  func.func @kernel(%arg0: i32, %arg1: i32, %arg2: i32, %arg3: memref<24x128xbf16, #tpu.memory_space<vmem>>, %arg4: memref<128x256xbf16, #tpu.memory_space<vmem>>, %arg5: memref<1x256xf32, #tpu.memory_space<vmem>>, %arg6: memref<24x256xbf16, #tpu.memory_space<vmem>>, %arg7: memref<24x256xf32, #tpu.memory_space<vmem>>) attributes {dimension_semantics = [#tpu.dimension_semantics<parallel>, #tpu.dimension_semantics<parallel>, #tpu.dimension_semantics<arbitrary>], iteration_bounds = array<i64: 1, 1, 1>, scalar_prefetch = 0 : i64, scratch_operands = 1 : i64, tpu.core_type = #tpu.core_type<tc>, window_params = [{transform_indices = @transform_0, window_bounds = array<i64: 24, 128>}, {transform_indices = @transform_1, window_bounds = array<i64: 128, 256>}, {transform_indices = @transform_2, window_bounds = array<i64: 1, 256>}, {transform_indices = @transform_3, window_bounds = array<i64: 24, 256>}]} {
    %c0_i32 = arith.constant 0 : i32
    %0 = arith.cmpi eq, %arg2, %c0_i32 : i32
    %1 = arith.extui %0 : i1 to i32
    %c0_i32_0 = arith.constant 0 : i32
    %2 = arith.cmpi ne, %1, %c0_i32_0 : i32
    scf.if %2 {
      %cst_10 = arith.constant 0.000000e+00 : f32
      %12 = vector.broadcast %cst_10 : f32 to vector<24x256xf32>
      %c0_11 = arith.constant 0 : index
      %c0_12 = arith.constant 0 : index
      %13 = vector.load %arg7[%c0_11, %c0_12] : memref<24x256xf32, #tpu.memory_space<vmem>>, vector<24x256xf32>
      tpu.vector_store %arg7[%c0_11, %c0_12], %12 {strides = array<i32>} : memref<24x256xf32, #tpu.memory_space<vmem>>, vector<24x256xf32>,
    } else {
    }
    %c0 = arith.constant 0 : index
    %c0_1 = arith.constant 0 : index
    %3 = vector.load %arg7[%c0, %c0_1] : memref<24x256xf32, #tpu.memory_space<vmem>>, vector<24x256xf32>
    %c0_2 = arith.constant 0 : index
    %c0_3 = arith.constant 0 : index
    %4 = vector.load %arg3[%c0_2, %c0_3] : memref<24x128xbf16, #tpu.memory_space<vmem>>, vector<24x128xbf16>
    %c0_4 = arith.constant 0 : index
    %c0_5 = arith.constant 0 : index
    %5 = vector.load %arg4[%c0_4, %c0_5] : memref<128x256xbf16, #tpu.memory_space<vmem>>, vector<128x256xbf16>
    %cst = arith.constant dense<0.000000e+00> : vector<24x256xf32>
    %6 = tpu.matmul %4, %5, %cst {dimension_numbers = #tpu.dot_dimension_numbers<[1], [0], [0], [1], [0, 0, 1, 1], [], []>} : vector<24x128xbf16>, vector<128x256xbf16>, vector<24x256xf32> -> vector<24x256xf32>
    %7 = arith.addf %3, %6 : vector<24x256xf32>
    %c0_6 = arith.constant 0 : index
    %c0_7 = arith.constant 0 : index
    %8 = vector.load %arg7[%c0_6, %c0_7] : memref<24x256xf32, #tpu.memory_space<vmem>>, vector<24x256xf32>
    tpu.vector_store %arg7[%c0_6, %c0_7], %7 {strides = array<i32>} : memref<24x256xf32, #tpu.memory_space<vmem>>, vector<24x256xf32>,
    %c0_i32_8 = arith.constant 0 : i32
    %9 = arith.cmpi eq, %arg2, %c0_i32_8 : i32
    %10 = arith.extui %9 : i1 to i32
    %c0_i32_9 = arith.constant 0 : i32
    %11 = arith.cmpi ne, %10, %c0_i32_9 : i32
    scf.if %11 {
      %c0_10 = arith.constant 0 : index
      %c0_11 = arith.constant 0 : index
      %12 = vector.load %arg7[%c0_10, %c0_11] : memref<24x256xf32, #tpu.memory_space<vmem>>, vector<24x256xf32>
      %c0_12 = arith.constant 0 : index
      %c0_13 = arith.constant 0 : index
      %13 = vector.load %arg5[%c0_12, %c0_13] : memref<1x256xf32, #tpu.memory_space<vmem>>, vector<1x256xf32>
      %14 = vector.broadcast %13 : vector<1x256xf32> to vector<24x256xf32>
      %15 = arith.addf %12, %14 : vector<24x256xf32>
      %cst_14 = arith.constant 0.000000e+00 : f32
      %16 = vector.broadcast %cst_14 : f32 to vector<24x256xf32>
      %17 = arith.maximumf %15, %16 : vector<24x256xf32>
      %18 = arith.truncf %17 : vector<24x256xf32> to vector<24x256xbf16>
      %c0_15 = arith.constant 0 : index
      %c0_16 = arith.constant 0 : index
      %19 = vector.load %arg6[%c0_15, %c0_16] : memref<24x256xbf16, #tpu.memory_space<vmem>>, vector<24x256xbf16>
      tpu.vector_store %arg6[%c0_15, %c0_16], %18 {strides = array<i32>} : memref<24x256xbf16, #tpu.memory_space<vmem>>, vector<24x256xbf16>,
    } else {
    }
    return
  }
  func.func @transform_0(%arg0: i32, %arg1: i32, %arg2: i32) -> (i32, i32) {
    %c0_i32 = arith.constant 0 : i32
    return %arg0, %arg2 : i32, i32
  }
  func.func @transform_1(%arg0: i32, %arg1: i32, %arg2: i32) -> (i32, i32) {
    %c0_i32 = arith.constant 0 : i32
    return %arg2, %arg1 : i32, i32
  }
  func.func @transform_2(%arg0: i32, %arg1: i32, %arg2: i32) -> (i32, i32) {
    %c0_i32 = arith.constant 0 : i32
    %c0_i32_0 = arith.constant 0 : i32
    return %c0_i32, %arg1 : i32, i32
  }
  func.func @transform_3(%arg0: i32, %arg1: i32, %arg2: i32) -> (i32, i32) {
    %c0_i32 = arith.constant 0 : i32
    return %arg0, %arg1 : i32, i32
  }
}

module attributes {stable_mosaic.version = 11 : i64} {
  func.func @kernel(%arg0: i32, %arg1: i32, %arg2: i32, %arg3: memref<24x256xbf16, #tpu.memory_space<vmem>>, %arg4: memref<256x128xbf16, #tpu.memory_space<vmem>>, %arg5: memref<1x128xf32, #tpu.memory_space<vmem>>, %arg6: memref<24x128xbf16, #tpu.memory_space<vmem>>, %arg7: memref<1x128xf32, #tpu.memory_space<vmem>>, %arg8: memref<1x128xf32, #tpu.memory_space<vmem>>, %arg9: memref<24x128xbf16, #tpu.memory_space<vmem>>, %arg10: memref<24x128xf32, #tpu.memory_space<vmem>>) attributes {dimension_semantics = [#tpu.dimension_semantics<parallel>, #tpu.dimension_semantics<parallel>, #tpu.dimension_semantics<arbitrary>], iteration_bounds = array<i64: 1, 1, 1>, scalar_prefetch = 0 : i64, scratch_operands = 1 : i64, tpu.core_type = #tpu.core_type<tc>, window_params = [{transform_indices = @transform_0, window_bounds = array<i64: 24, 256>}, {transform_indices = @transform_1, window_bounds = array<i64: 256, 128>}, {transform_indices = @transform_2, window_bounds = array<i64: 1, 128>}, {transform_indices = @transform_3, window_bounds = array<i64: 24, 128>}, {transform_indices = @transform_4, window_bounds = array<i64: 1, 128>}, {transform_indices = @transform_5, window_bounds = array<i64: 1, 128>}, {transform_indices = @transform_6, window_bounds = array<i64: 24, 128>}]} {
    %c0_i32 = arith.constant 0 : i32
    %0 = arith.cmpi eq, %arg2, %c0_i32 : i32
    %1 = arith.extui %0 : i1 to i32
    %c0_i32_0 = arith.constant 0 : i32
    %2 = arith.cmpi ne, %1, %c0_i32_0 : i32
    scf.if %2 {
      %cst_10 = arith.constant 0.000000e+00 : f32
      %12 = vector.broadcast %cst_10 : f32 to vector<24x128xf32>
      %c0_11 = arith.constant 0 : index
      %c0_12 = arith.constant 0 : index
      %13 = vector.load %arg10[%c0_11, %c0_12] : memref<24x128xf32, #tpu.memory_space<vmem>>, vector<24x128xf32>
      tpu.vector_store %arg10[%c0_11, %c0_12], %12 {strides = array<i32>} : memref<24x128xf32, #tpu.memory_space<vmem>>, vector<24x128xf32>,
    } else {
    }
    %c0 = arith.constant 0 : index
    %c0_1 = arith.constant 0 : index
    %3 = vector.load %arg10[%c0, %c0_1] : memref<24x128xf32, #tpu.memory_space<vmem>>, vector<24x128xf32>
    %c0_2 = arith.constant 0 : index
    %c0_3 = arith.constant 0 : index
    %4 = vector.load %arg3[%c0_2, %c0_3] : memref<24x256xbf16, #tpu.memory_space<vmem>>, vector<24x256xbf16>
    %c0_4 = arith.constant 0 : index
    %c0_5 = arith.constant 0 : index
    %5 = vector.load %arg4[%c0_4, %c0_5] : memref<256x128xbf16, #tpu.memory_space<vmem>>, vector<256x128xbf16>
    %cst = arith.constant dense<0.000000e+00> : vector<24x128xf32>
    %6 = tpu.matmul %4, %5, %cst {dimension_numbers = #tpu.dot_dimension_numbers<[1], [0], [0], [1], [0, 0, 1, 1], [], []>} : vector<24x256xbf16>, vector<256x128xbf16>, vector<24x128xf32> -> vector<24x128xf32>
    %7 = arith.addf %3, %6 : vector<24x128xf32>
    %c0_6 = arith.constant 0 : index
    %c0_7 = arith.constant 0 : index
    %8 = vector.load %arg10[%c0_6, %c0_7] : memref<24x128xf32, #tpu.memory_space<vmem>>, vector<24x128xf32>
    tpu.vector_store %arg10[%c0_6, %c0_7], %7 {strides = array<i32>} : memref<24x128xf32, #tpu.memory_space<vmem>>, vector<24x128xf32>,
    %c0_i32_8 = arith.constant 0 : i32
    %9 = arith.cmpi eq, %arg2, %c0_i32_8 : i32
    %10 = arith.extui %9 : i1 to i32
    %c0_i32_9 = arith.constant 0 : i32
    %11 = arith.cmpi ne, %10, %c0_i32_9 : i32
    scf.if %11 {
      %c0_10 = arith.constant 0 : index
      %c0_11 = arith.constant 0 : index
      %12 = vector.load %arg10[%c0_10, %c0_11] : memref<24x128xf32, #tpu.memory_space<vmem>>, vector<24x128xf32>
      %c0_12 = arith.constant 0 : index
      %c0_13 = arith.constant 0 : index
      %13 = vector.load %arg5[%c0_12, %c0_13] : memref<1x128xf32, #tpu.memory_space<vmem>>, vector<1x128xf32>
      %14 = vector.broadcast %13 : vector<1x128xf32> to vector<24x128xf32>
      %15 = arith.addf %12, %14 : vector<24x128xf32>
      %c0_14 = arith.constant 0 : index
      %c0_15 = arith.constant 0 : index
      %16 = vector.load %arg6[%c0_14, %c0_15] : memref<24x128xbf16, #tpu.memory_space<vmem>>, vector<24x128xbf16>
      %17 = arith.extf %16 : vector<24x128xbf16> to vector<24x128xf32>
      %18 = arith.addf %15, %17 : vector<24x128xf32>
      %cst_16 = arith.constant dense<0.000000e+00> : vector<24xf32>
      %19 = vector.multi_reduction <add>, %18, %cst_16 [1] : vector<24x128xf32> to vector<24xf32>
      %20 = vector.shape_cast %19 : vector<24xf32> to vector<24x1xf32>
      %cst_17 = arith.constant 1.280000e+02 : f32
      %21 = vector.broadcast %cst_17 : f32 to vector<24x1xf32>
      %22 = arith.divf %20, %21 : vector<24x1xf32>
      %23 = vector.broadcast %22 : vector<24x1xf32> to vector<24x128xf32>
      %24 = arith.subf %18, %23 : vector<24x128xf32>
      %25 = arith.mulf %24, %24 : vector<24x128xf32>
      %cst_18 = arith.constant dense<0.000000e+00> : vector<24xf32>
      %26 = vector.multi_reduction <add>, %25, %cst_18 [1] : vector<24x128xf32> to vector<24xf32>
      %27 = vector.shape_cast %26 : vector<24xf32> to vector<24x1xf32>
      %cst_19 = arith.constant 1.280000e+02 : f32
      %28 = vector.broadcast %cst_19 : f32 to vector<24x1xf32>
      %29 = arith.divf %27, %28 : vector<24x1xf32>
      %cst_20 = arith.constant 9.99999974E-6 : f32
      %30 = vector.broadcast %cst_20 : f32 to vector<24x1xf32>
      %31 = arith.addf %29, %30 : vector<24x1xf32>
      %32 = math.rsqrt %31 : vector<24x1xf32>
      %33 = vector.broadcast %32 : vector<24x1xf32> to vector<24x128xf32>
      %34 = arith.mulf %24, %33 : vector<24x128xf32>
      %c0_21 = arith.constant 0 : index
      %c0_22 = arith.constant 0 : index
      %35 = vector.load %arg7[%c0_21, %c0_22] : memref<1x128xf32, #tpu.memory_space<vmem>>, vector<1x128xf32>
      %36 = vector.broadcast %35 : vector<1x128xf32> to vector<24x128xf32>
      %37 = arith.mulf %34, %36 : vector<24x128xf32>
      %c0_23 = arith.constant 0 : index
      %c0_24 = arith.constant 0 : index
      %38 = vector.load %arg8[%c0_23, %c0_24] : memref<1x128xf32, #tpu.memory_space<vmem>>, vector<1x128xf32>
      %39 = vector.broadcast %38 : vector<1x128xf32> to vector<24x128xf32>
      %40 = arith.addf %37, %39 : vector<24x128xf32>
      %41 = arith.truncf %40 : vector<24x128xf32> to vector<24x128xbf16>
      %c0_25 = arith.constant 0 : index
      %c0_26 = arith.constant 0 : index
      %42 = vector.load %arg9[%c0_25, %c0_26] : memref<24x128xbf16, #tpu.memory_space<vmem>>, vector<24x128xbf16>
      tpu.vector_store %arg9[%c0_25, %c0_26], %41 {strides = array<i32>} : memref<24x128xbf16, #tpu.memory_space<vmem>>, vector<24x128xbf16>,
    } else {
    }
    return
  }
  func.func @transform_0(%arg0: i32, %arg1: i32, %arg2: i32) -> (i32, i32) {
    %c0_i32 = arith.constant 0 : i32
    return %arg0, %arg2 : i32, i32
  }
  func.func @transform_1(%arg0: i32, %arg1: i32, %arg2: i32) -> (i32, i32) {
    %c0_i32 = arith.constant 0 : i32
    return %arg2, %arg1 : i32, i32
  }
  func.func @transform_2(%arg0: i32, %arg1: i32, %arg2: i32) -> (i32, i32) {
    %c0_i32 = arith.constant 0 : i32
    %c0_i32_0 = arith.constant 0 : i32
    return %c0_i32, %arg1 : i32, i32
  }
  func.func @transform_3(%arg0: i32, %arg1: i32, %arg2: i32) -> (i32, i32) {
    %c0_i32 = arith.constant 0 : i32
    return %arg0, %arg1 : i32, i32
  }
  func.func @transform_4(%arg0: i32, %arg1: i32, %arg2: i32) -> (i32, i32) {
    %c0_i32 = arith.constant 0 : i32
    %c0_i32_0 = arith.constant 0 : i32
    return %c0_i32, %arg1 : i32, i32
  }
  func.func @transform_5(%arg0: i32, %arg1: i32, %arg2: i32) -> (i32, i32) {
    %c0_i32 = arith.constant 0 : i32
    %c0_i32_0 = arith.constant 0 : i32
    return %c0_i32, %arg1 : i32, i32
  }
  func.func @transform_6(%arg0: i32, %arg1: i32, %arg2: i32) -> (i32, i32) {
    %c0_i32 = arith.constant 0 : i32
    return %arg0, %arg1 : i32, i32
  }
}

</mosaic_0001>

<llo_original>
// kernel: mri_3d_vit_forward.11
$region0: #{mri_3d_vit_forward.11}
  #allocation0 [shape = 'u32[]', space=smem, size = 0x4, offset = 0x4, fixed_abs, tag = 'smem constant byte address 0x4 - core index']
  #allocation1 [shape = 'u32[144,128]{1,0:T(1,128)}', space=vmem, size = 0x12000, scoped, tag = 'internal scratch']
  #allocation2 [shape = 'f32[16,128]{1,0:T(8,128)}', space=vmem, size = 0x2000, scoped, tag = 'scratch operand']
  %s0 = inlined_call_operand.vmem [shape: bf16[16,4096], index: 0, kind: input, shape index: {}]
  %s1 = inlined_call_operand.vmem [shape: bf16[4096,128], index: 1, kind: input, shape index: {}]
  %s2 = inlined_call_operand.vmem [shape: f32[1,128], index: 2, kind: input, shape index: {}]
  %s3 = inlined_call_operand.vmem [shape: f32[16,128], index: 3, kind: output, shape index: {}]
  %s4 = sld [smem:[#allocation0]]
  $region76: #{mri_3d_vit_forward.11} parent=0
    _
  %s6 = ssub.s32 1, %s4
  %s7 = scalar_select 0, %s6, %s4
  $region1: #{mri_3d_vit_forward.11} parent=0
    #allocation3 [shape = 'u8[32768]{0}', space=vmem, size = 0x8000, scoped, tag = 'input window, operand 0']
    loop: start=0, step=1, limit=10
    $region2: #{mri_3d_vit_forward.11} parent=1 // loop_pre_header
      _
    $region3: #{mri_3d_vit_forward.11} parent=1 // loop_header
      %s9 = sphi 0, %s13
      %p10 = scmp.ge.s32.totalorder %s9, 10
      %s16 = sphi 0, %s35
      %s17 = sphi 0, %s31
      %s18 = sphi 0, %s27
      %s19 = sphi 0, %s16
      %s20 = sphi 0, %s17
      %s21 = sphi 0, %s18
      %s22 = sphi 0, %s19
      %s23 = sphi 0, %s20
      %s24 = sphi 0, %s21
      %s40 = sphi 0, %s42
      %s43 = sphi 0, %s40
      %s44 = sphi 0, %s43
      %s60 = sphi 0, %s44
      %s68 = sphi 0, %s70
      %s71 = sphi 0, %s68
      %s72 = sphi 0, %s71
      %s88 = sphi 0, %s72
      %s94 = sphi 0, %s96
      %s97 = sphi 0, %s94
      %s98 = sphi 0, %s97
      %s114 = sphi 0, %s98
      %s122 = sphi 0, %s124
      %s125 = sphi 0, %s122
      %s126 = sphi 0, %s125
      %s142 = sphi 0, %s126
    $region4: #{mri_3d_vit_forward.11} parent=1 // loop_header_branch
      %12 = sbr.rel (%p10) target = $region8
    $region5: #{mri_3d_vit_forward.11} parent=1 // loop_body
      %s14 = ssub.s32 %s9, 1
      %s15 = ssub.s32 %s9, 2
      %s25 = sadd.s32 1, %s18
      %p26 = scmp.ge.s32.totalorder %s25, 8
      %s27 = scalar_select %p26, 0, %s25
      %s28 = sadd.s32 1, %s17
      %s29 = scalar_select %p26, %s28, %s17
      %p30 = scmp.ge.s32.totalorder %s29, 1
      %s31 = scalar_select %p30, 0, %s29
      %s32 = sadd.s32 1, %s16
      %s33 = scalar_select %p30, %s32, %s16
      %p34 = scmp.ge.s32.totalorder %s33, 1
      %s35 = scalar_select %p34, 0, %s33
      %s36 = ssub.s32 %s16, %s35
      %s37 = ssub.s32 %s18, %s27
      %s38 = sor.u32 %s36, %s37
      %p39 = scmp.eq.s32.totalorder %s38, 0
      %s41 = sadd.s32 %s40, 1
      %s42 = scalar_select %p39, %s40, %s41
      %p45 = pneg %p39
      %p46 = scmp.eq.s32.totalorder %s9, 7
      %p47 = por %p45, %p46
      %p48 = scmp.ne.s32.totalorder %s40, %s43
      %p49 = scmp.eq.s32.totalorder %s9, 0
      %p50 = por %p48, %p49
      %p51 = scmp.ne.s32.totalorder %s40, %s43
      %p52 = scmp.eq.s32.totalorder %s14, 7
      %p53 = por %p51, %p52
      %p54 = scmp.ne.s32.totalorder %s43, %s44
      %p55 = scmp.eq.s32.totalorder %s14, 0
      %p56 = por %p54, %p55
      %p57 = scmp.ne.s32.totalorder %s43, %s44
      %p58 = scmp.eq.s32.totalorder %s15, 7
      %p59 = por %p57, %p58
      %p61 = scmp.ne.s32.totalorder %s44, %s60
      %p62 = scmp.eq.s32.totalorder %s15, 0
      %p63 = por %p61, %p62
      %s64 = ssub.s32 %s18, %s27
      %s65 = ssub.s32 %s17, %s31
      %s66 = sor.u32 %s64, %s65
      %p67 = scmp.eq.s32.totalorder %s66, 0
      %s69 = sadd.s32 %s68, 1
      %s70 = scalar_select %p67, %s68, %s69
      %p73 = pneg %p67
      %p74 = scmp.eq.s32.totalorder %s9, 7
      %p75 = por %p73, %p74
      %p76 = scmp.ne.s32.totalorder %s68, %s71
      %p77 = scmp.eq.s32.totalorder %s9, 0
      %p78 = por %p76, %p77
      %p79 = scmp.ne.s32.totalorder %s68, %s71
      %p80 = scmp.eq.s32.totalorder %s14, 7
      %p81 = por %p79, %p80
      %p82 = scmp.ne.s32.totalorder %s71, %s72
      %p83 = scmp.eq.s32.totalorder %s14, 0
      %p84 = por %p82, %p83
      %p85 = scmp.ne.s32.totalorder %s71, %s72
      %p86 = scmp.eq.s32.totalorder %s15, 7
      %p87 = por %p85, %p86
      %p89 = scmp.ne.s32.totalorder %s72, %s88
      %p90 = scmp.eq.s32.totalorder %s15, 0
      %p91 = por %p89, %p90
      %s92 = ssub.s32 %s17, %s31
      %p93 = scmp.eq.s32.totalorder %s92, 0
      %s95 = sadd.s32 %s94, 1
      %s96 = scalar_select %p93, %s94, %s95
      %p99 = pneg %p93
      %p100 = scmp.eq.s32.totalorder %s9, 7
      %p101 = por %p99, %p100
      %p102 = scmp.ne.s32.totalorder %s94, %s97
      %p103 = scmp.eq.s32.totalorder %s9, 0
      %p104 = por %p102, %p103
      %p105 = scmp.ne.s32.totalorder %s94, %s97
      %p106 = scmp.eq.s32.totalorder %s14, 7
      %p107 = por %p105, %p106
      %p108 = scmp.ne.s32.totalorder %s97, %s98
      %p109 = scmp.eq.s32.totalorder %s14, 0
      %p110 = por %p108, %p109
      %p111 = scmp.ne.s32.totalorder %s97, %s98
      %p112 = scmp.eq.s32.totalorder %s15, 7
      %p113 = por %p111, %p112
      %p115 = scmp.ne.s32.totalorder %s98, %s114
      %p116 = scmp.eq.s32.totalorder %s15, 0
      %p117 = por %p115, %p116
      %s118 = ssub.s32 %s16, %s35
      %s119 = ssub.s32 %s17, %s31
      %s120 = sor.u32 %s118, %s119
      %p121 = scmp.eq.s32.totalorder %s120, 0
      %s123 = sadd.s32 %s122, 1
      %s124 = scalar_select %p121, %s122, %s123
      %p127 = pneg %p121
      %p128 = scmp.eq.s32.totalorder %s9, 7
      %p129 = por %p127, %p128
      %p130 = scmp.ne.s32.totalorder %s122, %s125
      %p131 = scmp.eq.s32.totalorder %s9, 0
      %p132 = por %p130, %p131
      %p133 = scmp.ne.s32.totalorder %s122, %s125
      %p134 = scmp.eq.s32.totalorder %s14, 7
      %p135 = por %p133, %p134
      %p136 = scmp.ne.s32.totalorder %s125, %s126
      %p137 = scmp.eq.s32.totalorder %s14, 0
      %p138 = por %p136, %p137
      %p139 = scmp.ne.s32.totalorder %s125, %s126
      %p140 = scmp.eq.s32.totalorder %s15, 7
      %p141 = por %p139, %p140
      %p143 = scmp.ne.s32.totalorder %s126, %s142
      %p144 = scmp.eq.s32.totalorder %s15, 0
      %p145 = por %p143, %p144
      %p146 = scmp.le.s32.totalorder 1, %s9
      %p147 = scmp.lt.s32.totalorder %s9, 9
      %p148 = pnand %p146, %p147
      %p149 = pneg %p148
      // Predicated region
      $region9: #{mri_3d_vit_forward.11} parent=5 // pred_check
        _
      $region10: #{mri_3d_vit_forward.11} parent=5 // pred_check_branch
        %151 = sbr.rel (%p148) target = $region12
      $region11: #{mri_3d_vit_forward.11} parent=5 // pred_region
        %s152 = ssub.s32 %s9, 1
        // Predicated region
        $region13: #{mri_3d_vit_forward.11} parent=11 // pred_check
          %p153 = pneg %p110
        $region14: #{mri_3d_vit_forward.11} parent=11 // pred_check_branch
          %155 = sbr.rel (%p153) target = $region16
        $region15: #{mri_3d_vit_forward.11} parent=11 // pred_region
          %p156 = scmp.lt.s32.totalorder %s20, 0
          %s157 = scalar_select %p156, %s20, 0
          %s158 = scalar_lea.vmem %s2, %s157
        $region16: #{mri_3d_vit_forward.11} parent=11 // pred_fallthru
          _
      $region12: #{mri_3d_vit_forward.11} parent=5 // pred_fallthru
        _
      %p159 = scmp.lt.s32.totalorder %s9, 8
      // Predicated region
      $region17: #{mri_3d_vit_forward.11} parent=5 // pred_check
        %p160 = pneg %p159
      $region18: #{mri_3d_vit_forward.11} parent=5 // pred_check_branch
        %162 = sbr.rel (%p160) target = $region20
      $region19: #{mri_3d_vit_forward.11} parent=5 // pred_region
        // Predicated region
        $region21: #{mri_3d_vit_forward.11} parent=19 // pred_check
          %p163 = pneg %p50
        $region22: #{mri_3d_vit_forward.11} parent=19 // pred_check_branch
          %165 = sbr.rel (%p163) target = $region24
        $region23: #{mri_3d_vit_forward.11} parent=19 // pred_region
          %s166 = sand.u32 %s40, 1
          %s167 = sand.u32 %s40, 1
          %s168 = smul.addr %s167, 32
          %s169 = scalar_lea.vmem [#allocation3], %s168
          %s170 = smul.u32 2, %s16
          %s171 = smul.u32 4, %s18
          %s172 = smul.addr %s170, 32
          %s173 = sadd.s32 %s171, %s172
          %s174 = smul.addr %s173, 4
          %s175 = scalar_lea.vmem %s0, %s174
          // Predicated region
          $region25: #{mri_3d_vit_forward.11} parent=23 // pred_check
            _
          $region26: #{mri_3d_vit_forward.11} parent=23 // pred_check_branch
            %177 = sbr.rel (0) target = $region28
          $region27: #{mri_3d_vit_forward.11} parent=23 // pred_region
            // Predicated region
            $region29: #{mri_3d_vit_forward.11} parent=27 // pred_check
              _
            $region30: #{mri_3d_vit_forward.11} parent=27 // pred_check_branch
              %179 = sbr.rel (0) target = $region32
            $region31: #{mri_3d_vit_forward.11} parent=27 // pred_region
              loop: start=0, step=1, limit=1
              $region33: #{mri_3d_vit_forward.11} parent=31 // loop_pre_header
                _
              $region34: #{mri_3d_vit_forward.11} parent=31 // loop_header
                %s181 = sphi 0, %s185
                %p182 = scmp.ge.s32.totalorder %s181, 1
                %s186 = sphi %s175, %s175
                %s187 = sphi %s169, %s169
              $region35: #{mri_3d_vit_forward.11} parent=31 // loop_header_branch
                %184 = sbr.rel (%p182) target = $region39
              $region36: #{mri_3d_vit_forward.11} parent=31 // loop_body
                %v188 = vld [vmem:[%s186] sm:$0xff]
                %189 = vst [vmem:[%s187] sm:$0xff] %v188
                %v190 = vld [vmem:[%s186 + $0x8] sm:$0xff]
                %191 = vst [vmem:[%s187 + $0x8] sm:$0xff] %v190
                %v192 = vld [vmem:[%s186 + $0x80] sm:$0xff]
                %193 = vst [vmem:[%s187 + $0x10] sm:$0xff] %v192
                %v194 = vld [vmem:[%s186 + $0x88] sm:$0xff]
                %195 = vst [vmem:[%s187 + $0x18] sm:$0xff] %v194
              $region37: #{mri_3d_vit_forward.11} parent=31 // loop_footer
                %s185 = sadd.s32 1, %s181
              $region38: #{mri_3d_vit_forward.11} parent=31 // loop_footer_branch
                %180 = sbr.rel target = $region34
              $region39: #{mri_3d_vit_forward.11} parent=31 // loop_exit
                _
            $region32: #{mri_3d_vit_forward.11} parent=27 // pred_fallthru
              _
            // Predicated region
            $region40: #{mri_3d_vit_forward.11} parent=27 // pred_check
              _
            $region41: #{mri_3d_vit_forward.11} parent=27 // pred_check_branch
              %197 = sbr.rel target = $region43
            $region42: #{mri_3d_vit_forward.11} parent=27 // pred_region
              _
            $region43: #{mri_3d_vit_forward.11} parent=27 // pred_fallthru
              _
          $region28: #{mri_3d_vit_forward.11} parent=23 // pred_fallthru
            _
          %198 = vnop
        $region24: #{mri_3d_vit_forward.11} parent=19 // pred_fallthru
          _
        // Predicated region
        $region44: #{mri_3d_vit_forward.11} parent=19 // pred_check
          %p199 = pneg %p78
        $region45: #{mri_3d_vit_forward.11} parent=19 // pred_check_branch
          %201 = sbr.rel (%p199) target = $region47
        $region46: #{mri_3d_vit_forward.11} parent=19 // pred_region
          %s202 = smul.u32 64, %s18
          %p203 = scmp.lt.s32.totalorder %s202, 511
          %s204 = scalar_select %p203, %s202, 511
          %p205 = scmp.lt.s32.totalorder %s17, 0
          %s206 = scalar_select %p205, %s17, 0
          %s207 = sadd.s32 %s206, %s204
          %s208 = smul.addr %s207, 4
          %s209 = scalar_lea.vmem %s1, %s208
          %s210 = smul.u32 64, %s18
        $region47: #{mri_3d_vit_forward.11} parent=19 // pred_fallthru
          _
      $region20: #{mri_3d_vit_forward.11} parent=5 // pred_fallthru
        _
      %p211 = scmp.le.s32.totalorder 1, %s9
      %p212 = scmp.lt.s32.totalorder %s9, 9
      %p213 = pnand %p211, %p212
      %p214 = pneg %p213
      // Predicated region
      $region48: #{mri_3d_vit_forward.11} parent=5 // pred_check
        _
      $region49: #{mri_3d_vit_forward.11} parent=5 // pred_check_branch
        %216 = sbr.rel (%p213) target = $region51
      $region50: #{mri_3d_vit_forward.11} parent=5 // pred_region
        %s217 = ssub.s32 %s9, 1
        %s218 = sand.u32 %s43, 1
        %s219 = sand.u32 %s43, 1
        %s220 = smul.addr %s219, 32
        %s221 = scalar_lea.vmem [#allocation3], %s220
        // Predicated region
        $region52: #{mri_3d_vit_forward.11} parent=50 // pred_check
          %p222 = pneg %p56
        $region53: #{mri_3d_vit_forward.11} parent=50 // pred_check_branch
          %224 = sbr.rel (%p222) target = $region55
        $region54: #{mri_3d_vit_forward.11} parent=50 // pred_region
          _
        $region55: #{mri_3d_vit_forward.11} parent=50 // pred_fallthru
          _
        %s225 = sand.u32 %s43, 1
        %s226 = sand.u32 %s43, 1
        %s227 = smul.addr %s226, 32
        %s228 = scalar_lea.vmem [#allocation3], %s227
        %p229 = pneg %p56
        %p230 = pneg %p53
        %s231 = smul.u32 64, %s21
        %p232 = scmp.lt.s32.totalorder %s231, 511
        %s233 = scalar_select %p232, %s231, 511
        %p234 = scmp.lt.s32.totalorder %s20, 0
        %s235 = scalar_select %p234, %s20, 0
        %s236 = sadd.s32 %s235, %s233
        %s237 = smul.addr %s236, 4
        %s238 = scalar_lea.vmem %s1, %s237
        %p239 = pneg %p84
        %p240 = pneg %p81
        %p241 = scmp.lt.s32.totalorder %s20, 0
        %s242 = scalar_select %p241, %s20, 0
        %s243 = scalar_lea.vmem %s2, %s242
        %p244 = pneg %p110
        %p245 = pneg %p107
        %p246 = pneg %p138
        %p247 = pneg %p135
        %s248 = smul.u32 2, %s19
        %p249 = scmp.lt.s32.totalorder %s248, 1
        %s250 = scalar_select %p249, %s248, 1
        %p251 = scmp.lt.s32.totalorder %s20, 0
        %s252 = scalar_select %p251, %s20, 0
        %s253 = sadd.s32 %s252, %s250
        %s254 = smul.addr %s253, 8
        %s255 = scalar_lea.vmem %s3, %s254
        %s256 = smul.u32 2, %s19
        %s257 = smul.u32 4, %s21
        %s258 = smul.u32 64, %s21
        %p259 = scmp.lt.s32.totalorder %s258, 511
        %s260 = scalar_select %p259, %s258, 511
        %p261 = scmp.lt.s32.totalorder %s20, 0
        %s262 = scalar_select %p261, %s20, 0
        %s263 = sadd.s32 %s262, %s260
        %s264 = smul.addr %s263, 4
        %s265 = scalar_lea.vmem %s1, %s264
        %s266 = smul.u32 64, %s21
        %p267 = scmp.lt.s32.totalorder %s20, 0
        %s268 = scalar_select %p267, %s20, 0
        %s269 = scalar_lea.vmem %s2, %s268
        %s270 = smul.u32 2, %s19
        %p271 = scmp.lt.s32.totalorder %s270, 1
        %s272 = scalar_select %p271, %s270, 1
        %p273 = scmp.lt.s32.totalorder %s20, 0
        %s274 = scalar_select %p273, %s20, 0
        %s275 = sadd.s32 %s274, %s272
        %s276 = smul.addr %s275, 8
        %s277 = scalar_lea.vmem %s3, %s276
        %s278 = smul.u32 2, %s19
        %p280 = scmp.eq.s32.totalorder %s21, 0
        // Predicated region
        $region56: #{mri_3d_vit_forward.11} parent=50 // pred_check
          %p281 = pneg %p280
        $region57: #{mri_3d_vit_forward.11} parent=50 // pred_check_branch
          %283 = sbr.rel (%p281) target = $region59
        $region58: #{mri_3d_vit_forward.11} parent=50 // pred_region
          %284 = vst [vmem:[#allocation2] sm:$0xff] 0.0
          %285 = vst [vmem:[#allocation2 + $0x8] sm:$0xff] 0.0
        $region59: #{mri_3d_vit_forward.11} parent=50 // pred_fallthru
          _
        %v286 = vld [vmem:[#allocation2] sm:$0xff]
        %v287 = vld [vmem:[#allocation2 + $0x8] sm:$0xff]
        %v288 = vld [vmem:[%s221] sm:$0xff]
        %v289 = vld [vmem:[%s221 + $0x8] sm:$0xff]
        %v290 = vld [vmem:[%s221 + $0x10] sm:$0xff]
        %v291 = vld [vmem:[%s221 + $0x18] sm:$0xff]
        %v292 = vld [vmem:[%s265] sm:$0xf]
        %v293 = vld [vmem:[%s265 + $0x4] sm:$0xf]
        %v294 = vld [vmem:[%s265 + $0x8] sm:$0xf]
        %v295 = vld [vmem:[%s265 + $0xc] sm:$0xf]
        %v296 = vld [vmem:[%s265 + $0x10] sm:$0xf]
        %v297 = vld [vmem:[%s265 + $0x14] sm:$0xf]
        %v298 = vld [vmem:[%s265 + $0x18] sm:$0xf]
        %v299 = vld [vmem:[%s265 + $0x1c] sm:$0xf]
        %v300 = vld [vmem:[%s265 + $0x20] sm:$0xf]
        %v301 = vld [vmem:[%s265 + $0x24] sm:$0xf]
        %v302 = vld [vmem:[%s265 + $0x28] sm:$0xf]
        %v303 = vld [vmem:[%s265 + $0x2c] sm:$0xf]
        %v304 = vld [vmem:[%s265 + $0x30] sm:$0xf]
        %v305 = vld [vmem:[%s265 + $0x34] sm:$0xf]
        %v306 = vld [vmem:[%s265 + $0x38] sm:$0xf]
        %v307 = vld [vmem:[%s265 + $0x3c] sm:$0xf]
        %v308 = vld [vmem:[%s265 + $0x40] sm:$0xf]
        %v309 = vld [vmem:[%s265 + $0x44] sm:$0xf]
        %v310 = vld [vmem:[%s265 + $0x48] sm:$0xf]
        %v311 = vld [vmem:[%s265 + $0x4c] sm:$0xf]
        %v312 = vld [vmem:[%s265 + $0x50] sm:$0xf]
        %v313 = vld [vmem:[%s265 + $0x54] sm:$0xf]
        %v314 = vld [vmem:[%s265 + $0x58] sm:$0xf]
        %v315 = vld [vmem:[%s265 + $0x5c] sm:$0xf]
        %v316 = vld [vmem:[%s265 + $0x60] sm:$0xf]
        %v317 = vld [vmem:[%s265 + $0x64] sm:$0xf]
        %v318 = vld [vmem:[%s265 + $0x68] sm:$0xf]
        %v319 = vld [vmem:[%s265 + $0x6c] sm:$0xf]
        %v320 = vld [vmem:[%s265 + $0x70] sm:$0xf]
        %v321 = vld [vmem:[%s265 + $0x74] sm:$0xf]
        %v322 = vld [vmem:[%s265 + $0x78] sm:$0xf]
        %v323 = vld [vmem:[%s265 + $0x7c] sm:$0xf]
        %v324 = vld [vmem:[%s265 + $0x80] sm:$0xf]
        %v325 = vld [vmem:[%s265 + $0x84] sm:$0xf]
        %v326 = vld [vmem:[%s265 + $0x88] sm:$0xf]
        %v327 = vld [vmem:[%s265 + $0x8c] sm:$0xf]
        %v328 = vld [vmem:[%s265 + $0x90] sm:$0xf]
        %v329 = vld [vmem:[%s265 + $0x94] sm:$0xf]
        %v330 = vld [vmem:[%s265 + $0x98] sm:$0xf]
        %v331 = vld [vmem:[%s265 + $0x9c] sm:$0xf]
        %v332 = vld [vmem:[%s265 + $0xa0] sm:$0xf]
        %v333 = vld [vmem:[%s265 + $0xa4] sm:$0xf]
        %v334 = vld [vmem:[%s265 + $0xa8] sm:$0xf]
        %v335 = vld [vmem:[%s265 + $0xac] sm:$0xf]
        %v336 = vld [vmem:[%s265 + $0xb0] sm:$0xf]
        %v337 = vld [vmem:[%s265 + $0xb4] sm:$0xf]
        %v338 = vld [vmem:[%s265 + $0xb8] sm:$0xf]
        %v339 = vld [vmem:[%s265 + $0xbc] sm:$0xf]
        %v340 = vld [vmem:[%s265 + $0xc0] sm:$0xf]
        %v341 = vld [vmem:[%s265 + $0xc4] sm:$0xf]
        %v342 = vld [vmem:[%s265 + $0xc8] sm:$0xf]
        %v343 = vld [vmem:[%s265 + $0xcc] sm:$0xf]
        %v344 = vld [vmem:[%s265 + $0xd0] sm:$0xf]
        %v345 = vld [vmem:[%s265 + $0xd4] sm:$0xf]
        %v346 = vld [vmem:[%s265 + $0xd8] sm:$0xf]
        %v347 = vld [vmem:[%s265 + $0xdc] sm:$0xf]
        %v348 = vld [vmem:[%s265 + $0xe0] sm:$0xf]
        %v349 = vld [vmem:[%s265 + $0xe4] sm:$0xf]
        %v350 = vld [vmem:[%s265 + $0xe8] sm:$0xf]
        %v351 = vld [vmem:[%s265 + $0xec] sm:$0xf]
        %v352 = vld [vmem:[%s265 + $0xf0] sm:$0xf]
        %v353 = vld [vmem:[%s265 + $0xf4] sm:$0xf]
        %v354 = vld [vmem:[%s265 + $0xf8] sm:$0xf]
        %v355 = vld [vmem:[%s265 + $0xfc] sm:$0xf]
        %v360 = vunpack.c.l.b16 %v288
        %v361 = vunpack.c.h.b16 %v288
        %v362 = vunpack.c.l.b16 %v289
        %v363 = vunpack.c.h.b16 %v289
        %v364 = vunpack.c.l.b16 %v290
        %v365 = vunpack.c.h.b16 %v290
        %v366 = vunpack.c.l.b16 %v291
        %v367 = vunpack.c.h.b16 %v291
        %v368 = vpack.c.b16 %v364, %v360
        %v369 = vpack.c.b16 %v365, %v361
        %v370 = vpack.c.b16 %v366, %v362
        %v371 = vpack.c.b16 %v367, %v363
        %v440 = vunpack.c.l.b16 %v292
        %v441 = vunpack.c.l.b16 %v293
        %v442 = vunpack.c.l.b16 %v294
        %v443 = vunpack.c.l.b16 %v295
        %v444 = vunpack.c.l.b16 %v296
        %v445 = vunpack.c.l.b16 %v297
        %v446 = vunpack.c.l.b16 %v298
        %v447 = vunpack.c.l.b16 %v299
        %v448 = vunpack.c.l.b16 %v300
        %v449 = vunpack.c.l.b16 %v301
        %v450 = vunpack.c.l.b16 %v302
        %v451 = vunpack.c.l.b16 %v303
        %v452 = vunpack.c.l.b16 %v304
        %v453 = vunpack.c.l.b16 %v305
        %v454 = vunpack.c.l.b16 %v306
        %v455 = vunpack.c.l.b16 %v307
        %v456 = vunpack.c.l.b16 %v308
        %v457 = vunpack.c.l.b16 %v309
        %v458 = vunpack.c.l.b16 %v310
        %v459 = vunpack.c.l.b16 %v311
        %v460 = vunpack.c.l.b16 %v312
        %v461 = vunpack.c.l.b16 %v313
        %v462 = vunpack.c.l.b16 %v314
        %v463 = vunpack.c.l.b16 %v315
        %v464 = vunpack.c.l.b16 %v316
        %v465 = vunpack.c.l.b16 %v317
        %v466 = vunpack.c.l.b16 %v318
        %v467 = vunpack.c.l.b16 %v319
        %v468 = vunpack.c.l.b16 %v320
        %v469 = vunpack.c.l.b16 %v321
        %v470 = vunpack.c.l.b16 %v322
        %v471 = vunpack.c.l.b16 %v323
        %v472 = vunpack.c.l.b16 %v324
        %v473 = vunpack.c.l.b16 %v325
        %v474 = vunpack.c.l.b16 %v326
        %v475 = vunpack.c.l.b16 %v327
        %v476 = vunpack.c.l.b16 %v328
        %v477 = vunpack.c.l.b16 %v329
        %v478 = vunpack.c.l.b16 %v330
        %v479 = vunpack.c.l.b16 %v331
        %v480 = vunpack.c.l.b16 %v332
        %v481 = vunpack.c.l.b16 %v333
        %v482 = vunpack.c.l.b16 %v334
        %v483 = vunpack.c.l.b16 %v335
        %v484 = vunpack.c.l.b16 %v336
        %v485 = vunpack.c.l.b16 %v337
        %v486 = vunpack.c.l.b16 %v338
        %v487 = vunpack.c.l.b16 %v339
        %v488 = vunpack.c.l.b16 %v340
        %v489 = vunpack.c.l.b16 %v341
        %v490 = vunpack.c.l.b16 %v342
        %v491 = vunpack.c.l.b16 %v343
        %v492 = vunpack.c.l.b16 %v344
        %v493 = vunpack.c.l.b16 %v345
        %v494 = vunpack.c.l.b16 %v346
        %v495 = vunpack.c.l.b16 %v347
        %v496 = vunpack.c.l.b16 %v348
        %v497 = vunpack.c.l.b16 %v349
        %v498 = vunpack.c.l.b16 %v350
        %v499 = vunpack.c.l.b16 %v351
        %v500 = vunpack.c.l.b16 %v352
        %v501 = vunpack.c.l.b16 %v353
        %v502 = vunpack.c.l.b16 %v354
        %v503 = vunpack.c.l.b16 %v355
        %v504 = vpack.c.b16 %v441, %v440
        %v505 = vpack.c.b16 %v443, %v442
        %v506 = vpack.c.b16 %v445, %v444
        %v507 = vpack.c.b16 %v447, %v446
        %v508 = vpack.c.b16 %v449, %v448
        %v509 = vpack.c.b16 %v451, %v450
        %v510 = vpack.c.b16 %v453, %v452
        %v511 = vpack.c.b16 %v455, %v454
        %v512 = vpack.c.b16 %v457, %v456
        %v513 = vpack.c.b16 %v459, %v458
        %v514 = vpack.c.b16 %v461, %v460
        %v515 = vpack.c.b16 %v463, %v462
        %v516 = vpack.c.b16 %v465, %v464
        %v517 = vpack.c.b16 %v467, %v466
        %v518 = vpack.c.b16 %v469, %v468
        %v519 = vpack.c.b16 %v471, %v470
        %v520 = vpack.c.b16 %v473, %v472
        %v521 = vpack.c.b16 %v475, %v474
        %v522 = vpack.c.b16 %v477, %v476
        %v523 = vpack.c.b16 %v479, %v478
        %v524 = vpack.c.b16 %v481, %v480
        %v525 = vpack.c.b16 %v483, %v482
        %v526 = vpack.c.b16 %v485, %v484
        %v527 = vpack.c.b16 %v487, %v486
        %v528 = vpack.c.b16 %v489, %v488
        %v529 = vpack.c.b16 %v491, %v490
        %v530 = vpack.c.b16 %v493, %v492
        %v531 = vpack.c.b16 %v495, %v494
        %v532 = vpack.c.b16 %v497, %v496
        %v533 = vpack.c.b16 %v499, %v498
        %v534 = vpack.c.b16 %v501, %v500
        %v535 = vpack.c.b16 %v503, %v502
        %568 = vmatprep.subr.bf16.mxu0 0
        %569 = vmatpush1.bf16.msra.mxu0 %v511
        %570 = vmatprep.subr.bf16.mxu0 0
        %571 = vmatpush1.bf16.msra.mxu0 %v510
        %572 = vmatprep.subr.bf16.mxu0 0
        %573 = vmatpush1.bf16.msra.mxu0 %v509
        %574 = vmatprep.subr.bf16.mxu0 0
        %575 = vmatpush1.bf16.msra.mxu0 %v508
        %576 = vmatprep.subr.bf16.mxu0 0
        %577 = vmatpush1.bf16.msra.mxu0 %v507
        %578 = vmatprep.subr.bf16.mxu0 0
        %579 = vmatpush1.bf16.msra.mxu0 %v506
        %580 = vmatprep.subr.bf16.mxu0 0
        %581 = vmatpush1.bf16.msra.mxu0 %v505
        %582 = vmatprep.subr.bf16.mxu0 0
        %583 = vmatpush1.bf16.msra.mxu0 %v504
        %584 = vmatprep.subr.bf16.mxu0 0
        %585 = vmatpush2.bf16.msra.mxu0 %v519
        %586 = vmatprep.subr.bf16.mxu0 0
        %587 = vmatpush2.bf16.msra.mxu0 %v518
        %588 = vmatprep.subr.bf16.mxu0 0
        %589 = vmatpush2.bf16.msra.mxu0 %v517
        %590 = vmatprep.subr.bf16.mxu0 0
        %591 = vmatpush2.bf16.msra.mxu0 %v516
        %592 = vmatprep.subr.bf16.mxu0 0
        %593 = vmatpush2.bf16.msra.mxu0 %v515
        %594 = vmatprep.subr.bf16.mxu0 0
        %595 = vmatpush2.bf16.msra.mxu0 %v514
        %596 = vmatprep.subr.bf16.mxu0 0
        %597 = vmatpush2.bf16.msra.mxu0 %v513
        %598 = vmatprep.subr.bf16.mxu0 0
        %599 = vmatpush2.bf16.msra.mxu0 %v512
        %600 = vmatprep.mubr.bf16.mxu0 %v369
        %601 = vmatmul.mubr.bf16.gmra.mxu0 %v368
        %v602 = vpop.f32.mrf.mxu0
        %v603 = vadd.f32 0.0, %v602
        %v604 = vpop.f32.mrf.mxu0
        %v605 = vpop.f32.mrf.mxu0
        %v606 = vadd.f32 0.0, %v605
        %v607 = vpop.f32.mrf.mxu0
        %608 = vdwg.mxu0
        %609 = vmatprep.subr.bf16.mxu0 0
        %610 = vmatpush1.bf16.msra.mxu0 %v527
        %611 = vmatprep.subr.bf16.mxu0 0
        %612 = vmatpush1.bf16.msra.mxu0 %v526
        %613 = vmatprep.subr.bf16.mxu0 0
        %614 = vmatpush1.bf16.msra.mxu0 %v525
        %615 = vmatprep.subr.bf16.mxu0 0
        %616 = vmatpush1.bf16.msra.mxu0 %v524
        %617 = vmatprep.subr.bf16.mxu0 0
        %618 = vmatpush1.bf16.msra.mxu0 %v523
        %619 = vmatprep.subr.bf16.mxu0 0
        %620 = vmatpush1.bf16.msra.mxu0 %v522
        %621 = vmatprep.subr.bf16.mxu0 0
        %622 = vmatpush1.bf16.msra.mxu0 %v521
        %623 = vmatprep.subr.bf16.mxu0 0
        %624 = vmatpush1.bf16.msra.mxu0 %v520
        %625 = vmatprep.subr.bf16.mxu0 0
        %626 = vmatpush2.bf16.msra.mxu0 %v535
        %627 = vmatprep.subr.bf16.mxu0 0
        %628 = vmatpush2.bf16.msra.mxu0 %v534
        %629 = vmatprep.subr.bf16.mxu0 0
        %630 = vmatpush2.bf16.msra.mxu0 %v533
        %631 = vmatprep.subr.bf16.mxu0 0
        %632 = vmatpush2.bf16.msra.mxu0 %v532
        %633 = vmatprep.subr.bf16.mxu0 0
        %634 = vmatpush2.bf16.msra.mxu0 %v531
        %635 = vmatprep.subr.bf16.mxu0 0
        %636 = vmatpush2.bf16.msra.mxu0 %v530
        %637 = vmatprep.subr.bf16.mxu0 0
        %638 = vmatpush2.bf16.msra.mxu0 %v529
        %639 = vmatprep.subr.bf16.mxu0 0
        %640 = vmatpush2.bf16.msra.mxu0 %v528
        %641 = vmatprep.mubr.bf16.mxu0 %v371
        %642 = vmatmul.mubr.bf16.gmra.mxu0 %v370
        %v643 = vpop.f32.mrf.mxu0
        %v644 = vadd.f32 %v603, %v643
        %v645 = vpop.f32.mrf.mxu0
        %v646 = vpop.f32.mrf.mxu0
        %v647 = vadd.f32 %v606, %v646
        %v648 = vpop.f32.mrf.mxu0
        %649 = vdwg.mxu0
        %v650 = vadd.f32 %v286, %v644
        %v651 = vadd.f32 %v287, %v647
        %652 = vst [vmem:[#allocation2] sm:$0xff] %v650
        %653 = vst [vmem:[#allocation2 + $0x8] sm:$0xff] %v651
        %p654 = scmp.eq.s32.totalorder %s21, 7
        // Predicated region
        $region60: #{mri_3d_vit_forward.11} parent=50 // pred_check
          %p655 = pneg %p654
        $region61: #{mri_3d_vit_forward.11} parent=50 // pred_check_branch
          %657 = sbr.rel (%p655) target = $region63
        $region62: #{mri_3d_vit_forward.11} parent=50 // pred_region
          %v658 = vld [vmem:[#allocation2] sm:$0xff]
          %v659 = vld [vmem:[#allocation2 + $0x8] sm:$0xff]
          %v660 = vld [vmem:[%s269] sm:$0x1]
          %v662 = vlaneseq
          %v663 = vshrl.u32 %v662, 7
          %v664 = vsub.s32 0, %v663
          %v665 = vrot.slane %v660, %v664
          %v667 = vadd.f32 %v658, %v665
          %v668 = vadd.f32 %v659, %v665
          %669 = vst [vmem:[%s277] sm:$0xff] %v667
          %670 = vst [vmem:[%s277 + $0x8] sm:$0xff] %v668
        $region63: #{mri_3d_vit_forward.11} parent=50 // pred_fallthru
          _
        %s671 = smul.u32 2, %s19
        %p672 = scmp.lt.s32.totalorder %s671, 1
        %s673 = scalar_select %p672, %s671, 1
        %p674 = scmp.lt.s32.totalorder %s20, 0
        %s675 = scalar_select %p674, %s20, 0
        %s676 = sadd.s32 %s675, %s673
        %s677 = smul.addr %s676, 8
        %s678 = scalar_lea.vmem %s3, %s677
        // Predicated region
        $region64: #{mri_3d_vit_forward.11} parent=50 // pred_check
          %p679 = pneg %p135
        $region65: #{mri_3d_vit_forward.11} parent=50 // pred_check_branch
          %681 = sbr.rel (%p679) target = $region67
        $region66: #{mri_3d_vit_forward.11} parent=50 // pred_region
          %s682 = smul.u32 2, %s19
        $region67: #{mri_3d_vit_forward.11} parent=50 // pred_fallthru
          _
        // Predicated region
        $region68: #{mri_3d_vit_forward.11} parent=50 // pred_check
          %p683 = pneg %p135
        $region69: #{mri_3d_vit_forward.11} parent=50 // pred_check_branch
          %685 = sbr.rel (%p683) target = $region71
        $region70: #{mri_3d_vit_forward.11} parent=50 // pred_region
          %s686 = smul.u32 2, %s19
          %p687 = scmp.lt.s32.totalorder %s686, 1
          %s688 = scalar_select %p687, %s686, 1
          %p689 = scmp.lt.s32.totalorder %s20, 0
          %s690 = scalar_select %p689, %s20, 0
          %s691 = sadd.s32 %s690, %s688
          %s692 = smul.addr %s691, 8
          %s693 = scalar_lea.vmem %s3, %s692
        $region71: #{mri_3d_vit_forward.11} parent=50 // pred_fallthru
          _
      $region51: #{mri_3d_vit_forward.11} parent=5 // pred_fallthru
        _
      %p694 = scmp.le.s32.totalorder 2, %s9
      // Predicated region
      $region72: #{mri_3d_vit_forward.11} parent=5 // pred_check
        %p695 = pneg %p694
      $region73: #{mri_3d_vit_forward.11} parent=5 // pred_check_branch
        %697 = sbr.rel (%p695) target = $region75
      $region74: #{mri_3d_vit_forward.11} parent=5 // pred_region
        %s698 = ssub.s32 %s9, 2
      $region75: #{mri_3d_vit_forward.11} parent=5 // pred_fallthru
        _
    $region6: #{mri_3d_vit_forward.11} parent=1 // loop_footer
      %s13 = sadd.s32 1, %s9
    $region7: #{mri_3d_vit_forward.11} parent=1 // loop_footer_branch
      %8 = sbr.rel target = $region3
    $region8: #{mri_3d_vit_forward.11} parent=1 // loop_exit
      _

// kernel: mri_3d_vit_forward.12
$region0: #{mri_3d_vit_forward.12}
  #allocation0 [shape = 'u32[]', space=smem, size = 0x4, offset = 0x4, fixed_abs, tag = 'smem constant byte address 0x4 - core index']
  #allocation1 [shape = 'u32[144,128]{1,0:T(1,128)}', space=vmem, size = 0x12000, scoped, tag = 'internal scratch']
  #allocation2 [shape = 'f32[24,128]{1,0:T(8,128)}', space=vmem, size = 0x3000, scoped, tag = 'scratch operand']
  %s0 = inlined_call_operand.vmem [shape: bf16[24,128], index: 0, kind: input, shape index: {}]
  %s1 = inlined_call_operand.vmem [shape: bf16[128,384], index: 1, kind: input, shape index: {}]
  %s2 = inlined_call_operand.vmem [shape: f32[1,384], index: 2, kind: input, shape index: {}]
  %s3 = inlined_call_operand.vmem [shape: bf16[24,384], index: 3, kind: output, shape index: {}]
  %s4 = sld [smem:[#allocation0]]
  $region131: #{mri_3d_vit_forward.12} parent=0
    _
  %s6 = ssub.s32 1, %s4
  %s7 = scalar_select 0, %s6, %s4
  $region1: #{mri_3d_vit_forward.12} parent=0
    #allocation3 [shape = 'u8[65536]{0}', space=vmem, size = 0x10000, scoped, tag = 'input window, operand 1']
    #allocation4 [shape = 'u8[12288]{0}', space=vmem, size = 0x3000, scoped, tag = 'output window, operand 0']
    loop: start=0, step=1, limit=5
    $region2: #{mri_3d_vit_forward.12} parent=1 // loop_pre_header
      _
    $region3: #{mri_3d_vit_forward.12} parent=1 // loop_header
      %s9 = sphi 0, %s13
      %p10 = scmp.ge.s32.totalorder %s9, 5
      %s16 = sphi 0, %s35
      %s17 = sphi 0, %s31
      %s18 = sphi 0, %s27
      %s19 = sphi 0, %s16
      %s20 = sphi 0, %s17
      %s21 = sphi 0, %s18
      %s22 = sphi 0, %s19
      %s23 = sphi 0, %s20
      %s24 = sphi 0, %s21
      %s40 = sphi 0, %s42
      %s43 = sphi 0, %s40
      %s44 = sphi 0, %s43
      %s60 = sphi 0, %s44
      %s68 = sphi 0, %s70
      %s71 = sphi 0, %s68
      %s72 = sphi 0, %s71
      %s88 = sphi 0, %s72
      %s94 = sphi 0, %s96
      %s97 = sphi 0, %s94
      %s98 = sphi 0, %s97
      %s114 = sphi 0, %s98
      %s122 = sphi 0, %s124
      %s125 = sphi 0, %s122
      %s126 = sphi 0, %s125
      %s142 = sphi 0, %s126
    $region4: #{mri_3d_vit_forward.12} parent=1 // loop_header_branch
      %12 = sbr.rel (%p10) target = $region8
    $region5: #{mri_3d_vit_forward.12} parent=1 // loop_body
      %s14 = ssub.s32 %s9, 1
      %s15 = ssub.s32 %s9, 2
      %s25 = sadd.s32 1, %s18
      %p26 = scmp.ge.s32.totalorder %s25, 1
      %s27 = scalar_select %p26, 0, %s25
      %s28 = sadd.s32 1, %s17
      %s29 = scalar_select %p26, %s28, %s17
      %p30 = scmp.ge.s32.totalorder %s29, 3
      %s31 = scalar_select %p30, 0, %s29
      %s32 = sadd.s32 1, %s16
      %s33 = scalar_select %p30, %s32, %s16
      %p34 = scmp.ge.s32.totalorder %s33, 1
      %s35 = scalar_select %p34, 0, %s33
      %s36 = ssub.s32 %s16, %s35
      %s37 = ssub.s32 %s18, %s27
      %s38 = sor.u32 %s36, %s37
      %p39 = scmp.eq.s32.totalorder %s38, 0
      %s41 = sadd.s32 %s40, 1
      %s42 = scalar_select %p39, %s40, %s41
      %p45 = pneg %p39
      %p46 = scmp.eq.s32.totalorder %s9, 2
      %p47 = por %p45, %p46
      %p48 = scmp.ne.s32.totalorder %s40, %s43
      %p49 = scmp.eq.s32.totalorder %s9, 0
      %p50 = por %p48, %p49
      %p51 = scmp.ne.s32.totalorder %s40, %s43
      %p52 = scmp.eq.s32.totalorder %s14, 2
      %p53 = por %p51, %p52
      %p54 = scmp.ne.s32.totalorder %s43, %s44
      %p55 = scmp.eq.s32.totalorder %s14, 0
      %p56 = por %p54, %p55
      %p57 = scmp.ne.s32.totalorder %s43, %s44
      %p58 = scmp.eq.s32.totalorder %s15, 2
      %p59 = por %p57, %p58
      %p61 = scmp.ne.s32.totalorder %s44, %s60
      %p62 = scmp.eq.s32.totalorder %s15, 0
      %p63 = por %p61, %p62
      %s64 = ssub.s32 %s18, %s27
      %s65 = ssub.s32 %s17, %s31
      %s66 = sor.u32 %s64, %s65
      %p67 = scmp.eq.s32.totalorder %s66, 0
      %s69 = sadd.s32 %s68, 1
      %s70 = scalar_select %p67, %s68, %s69
      %p73 = pneg %p67
      %p74 = scmp.eq.s32.totalorder %s9, 2
      %p75 = por %p73, %p74
      %p76 = scmp.ne.s32.totalorder %s68, %s71
      %p77 = scmp.eq.s32.totalorder %s9, 0
      %p78 = por %p76, %p77
      %p79 = scmp.ne.s32.totalorder %s68, %s71
      %p80 = scmp.eq.s32.totalorder %s14, 2
      %p81 = por %p79, %p80
      %p82 = scmp.ne.s32.totalorder %s71, %s72
      %p83 = scmp.eq.s32.totalorder %s14, 0
      %p84 = por %p82, %p83
      %p85 = scmp.ne.s32.totalorder %s71, %s72
      %p86 = scmp.eq.s32.totalorder %s15, 2
      %p87 = por %p85, %p86
      %p89 = scmp.ne.s32.totalorder %s72, %s88
      %p90 = scmp.eq.s32.totalorder %s15, 0
      %p91 = por %p89, %p90
      %s92 = ssub.s32 %s17, %s31
      %p93 = scmp.eq.s32.totalorder %s92, 0
      %s95 = sadd.s32 %s94, 1
      %s96 = scalar_select %p93, %s94, %s95
      %p99 = pneg %p93
      %p100 = scmp.eq.s32.totalorder %s9, 2
      %p101 = por %p99, %p100
      %p102 = scmp.ne.s32.totalorder %s94, %s97
      %p103 = scmp.eq.s32.totalorder %s9, 0
      %p104 = por %p102, %p103
      %p105 = scmp.ne.s32.totalorder %s94, %s97
      %p106 = scmp.eq.s32.totalorder %s14, 2
      %p107 = por %p105, %p106
      %p108 = scmp.ne.s32.totalorder %s97, %s98
      %p109 = scmp.eq.s32.totalorder %s14, 0
      %p110 = por %p108, %p109
      %p111 = scmp.ne.s32.totalorder %s97, %s98
      %p112 = scmp.eq.s32.totalorder %s15, 2
      %p113 = por %p111, %p112
      %p115 = scmp.ne.s32.totalorder %s98, %s114
      %p116 = scmp.eq.s32.totalorder %s15, 0
      %p117 = por %p115, %p116
      %s118 = ssub.s32 %s16, %s35
      %s119 = ssub.s32 %s17, %s31
      %s120 = sor.u32 %s118, %s119
      %p121 = scmp.eq.s32.totalorder %s120, 0
      %s123 = sadd.s32 %s122, 1
      %s124 = scalar_select %p121, %s122, %s123
      %p127 = pneg %p121
      %p128 = scmp.eq.s32.totalorder %s9, 2
      %p129 = por %p127, %p128
      %p130 = scmp.ne.s32.totalorder %s122, %s125
      %p131 = scmp.eq.s32.totalorder %s9, 0
      %p132 = por %p130, %p131
      %p133 = scmp.ne.s32.totalorder %s122, %s125
      %p134 = scmp.eq.s32.totalorder %s14, 2
      %p135 = por %p133, %p134
      %p136 = scmp.ne.s32.totalorder %s125, %s126
      %p137 = scmp.eq.s32.totalorder %s14, 0
      %p138 = por %p136, %p137
      %p139 = scmp.ne.s32.totalorder %s125, %s126
      %p140 = scmp.eq.s32.totalorder %s15, 2
      %p141 = por %p139, %p140
      %p143 = scmp.ne.s32.totalorder %s126, %s142
      %p144 = scmp.eq.s32.totalorder %s15, 0
      %p145 = por %p143, %p144
      %p146 = scmp.le.s32.totalorder 1, %s9
      %p147 = scmp.lt.s32.totalorder %s9, 4
      %p148 = pnand %p146, %p147
      %p149 = pneg %p148
      // Predicated region
      $region9: #{mri_3d_vit_forward.12} parent=5 // pred_check
        _
      $region10: #{mri_3d_vit_forward.12} parent=5 // pred_check_branch
        %151 = sbr.rel (%p148) target = $region12
      $region11: #{mri_3d_vit_forward.12} parent=5 // pred_region
        %s152 = ssub.s32 %s9, 1
        // Predicated region
        $region13: #{mri_3d_vit_forward.12} parent=11 // pred_check
          %p153 = pneg %p56
        $region14: #{mri_3d_vit_forward.12} parent=11 // pred_check_branch
          %155 = sbr.rel (%p153) target = $region16
        $region15: #{mri_3d_vit_forward.12} parent=11 // pred_region
          %s156 = smul.u32 3, %s19
          %p157 = scmp.lt.s32.totalorder %s156, 2
          %s158 = scalar_select %p157, %s156, 2
          %p159 = scmp.lt.s32.totalorder %s21, 0
          %s160 = scalar_select %p159, %s21, 0
          %s161 = sadd.s32 %s160, %s158
          %s162 = smul.addr %s161, 4
          %s163 = scalar_lea.vmem %s0, %s162
          %s164 = smul.u32 3, %s19
        $region16: #{mri_3d_vit_forward.12} parent=11 // pred_fallthru
          _
      $region12: #{mri_3d_vit_forward.12} parent=5 // pred_fallthru
        _
      %p165 = scmp.lt.s32.totalorder %s9, 3
      // Predicated region
      $region17: #{mri_3d_vit_forward.12} parent=5 // pred_check
        %p166 = pneg %p165
      $region18: #{mri_3d_vit_forward.12} parent=5 // pred_check_branch
        %168 = sbr.rel (%p166) target = $region20
      $region19: #{mri_3d_vit_forward.12} parent=5 // pred_region
        // Predicated region
        $region21: #{mri_3d_vit_forward.12} parent=19 // pred_check
          %p169 = pneg %p78
        $region22: #{mri_3d_vit_forward.12} parent=19 // pred_check_branch
          %171 = sbr.rel (%p169) target = $region24
        $region23: #{mri_3d_vit_forward.12} parent=19 // pred_region
          %s172 = sand.u32 %s68, 1
          %s173 = sand.u32 %s68, 1
          %s174 = smul.addr %s173, 64
          %s175 = scalar_lea.vmem [#allocation3], %s174
          %s176 = smul.u32 16, %s18
          %s177 = smul.addr %s176, 3
          %s178 = sadd.s32 %s17, %s177
          %s179 = smul.addr %s178, 4
          %s180 = scalar_lea.vmem %s1, %s179
          // Predicated region
          $region25: #{mri_3d_vit_forward.12} parent=23 // pred_check
            _
          $region26: #{mri_3d_vit_forward.12} parent=23 // pred_check_branch
            %182 = sbr.rel (0) target = $region28
          $region27: #{mri_3d_vit_forward.12} parent=23 // pred_region
            // Predicated region
            $region29: #{mri_3d_vit_forward.12} parent=27 // pred_check
              _
            $region30: #{mri_3d_vit_forward.12} parent=27 // pred_check_branch
              %184 = sbr.rel target = $region32
            $region31: #{mri_3d_vit_forward.12} parent=27 // pred_region
              // Predicated region
              $region44: #{mri_3d_vit_forward.12} parent=31 // pred_check
                _
              $region45: #{mri_3d_vit_forward.12} parent=31 // pred_check_branch
                %230 = sbr.rel (0) target = $region47
              $region46: #{mri_3d_vit_forward.12} parent=31 // pred_region
                loop: start=0, step=1, limit=1
                $region48: #{mri_3d_vit_forward.12} parent=46 // loop_pre_header
                  _
                $region49: #{mri_3d_vit_forward.12} parent=46 // loop_header
                  %s232 = sphi 0, %s236
                  %p233 = scmp.ge.s32.totalorder %s232, 1
                  %s237 = sphi %s180, %s180
                  %s238 = sphi %s175, %s175
                $region50: #{mri_3d_vit_forward.12} parent=46 // loop_header_branch
                  %235 = sbr.rel (%p233) target = $region54
                $region51: #{mri_3d_vit_forward.12} parent=46 // loop_body
                  _
                $region52: #{mri_3d_vit_forward.12} parent=46 // loop_footer
                  %s236 = sadd.s32 1, %s232
                $region53: #{mri_3d_vit_forward.12} parent=46 // loop_footer_branch
                  %231 = sbr.rel target = $region49
                $region54: #{mri_3d_vit_forward.12} parent=46 // loop_exit
                  _
                %s240 = ssub.s32 16, 1
                loop: start=0, step=1, limit=1
                $region55: #{mri_3d_vit_forward.12} parent=46 // loop_pre_header
                  _
                $region56: #{mri_3d_vit_forward.12} parent=46 // loop_header
                  %s242 = sphi 0, %s246
                  %p243 = scmp.ge.s32.totalorder %s242, 1
                  %s247 = sphi %s180, %s180
                  %s248 = sphi %s175, %s175
                $region57: #{mri_3d_vit_forward.12} parent=46 // loop_header_branch
                  %245 = sbr.rel (%p243) target = $region61
                $region58: #{mri_3d_vit_forward.12} parent=46 // loop_body
                  %v249 = vld [vmem:[%s247] sm:%s240]
                  %250 = vst [vmem:[%s248] sm:%s240] %v249
                  %v251 = vld [vmem:[%s247 + $0xc] sm:%s240]
                  %252 = vst [vmem:[%s248 + $0x4] sm:%s240] %v251
                  %v253 = vld [vmem:[%s247 + $0x18] sm:%s240]
                  %254 = vst [vmem:[%s248 + $0x8] sm:%s240] %v253
                  %v255 = vld [vmem:[%s247 + $0x24] sm:%s240]
                  %256 = vst [vmem:[%s248 + $0xc] sm:%s240] %v255
                  %v257 = vld [vmem:[%s247 + $0x30] sm:%s240]
                  %258 = vst [vmem:[%s248 + $0x10] sm:%s240] %v257
                  %v259 = vld [vmem:[%s247 + $0x3c] sm:%s240]
                  %260 = vst [vmem:[%s248 + $0x14] sm:%s240] %v259
                  %v261 = vld [vmem:[%s247 + $0x48] sm:%s240]
                  %262 = vst [vmem:[%s248 + $0x18] sm:%s240] %v261
                  %v263 = vld [vmem:[%s247 + $0x54] sm:%s240]
                  %264 = vst [vmem:[%s248 + $0x1c] sm:%s240] %v263
                  %v265 = vld [vmem:[%s247 + $0x60] sm:%s240]
                  %266 = vst [vmem:[%s248 + $0x20] sm:%s240] %v265
                  %v267 = vld [vmem:[%s247 + $0x6c] sm:%s240]
                  %268 = vst [vmem:[%s248 + $0x24] sm:%s240] %v267
                  %v269 = vld [vmem:[%s247 + $0x78] sm:%s240]
                  %270 = vst [vmem:[%s248 + $0x28] sm:%s240] %v269
                  %v271 = vld [vmem:[%s247 + $0x84] sm:%s240]
                  %272 = vst [vmem:[%s248 + $0x2c] sm:%s240] %v271
                  %v273 = vld [vmem:[%s247 + $0x90] sm:%s240]
                  %274 = vst [vmem:[%s248 + $0x30] sm:%s240] %v273
                  %v275 = vld [vmem:[%s247 + $0x9c] sm:%s240]
                  %276 = vst [vmem:[%s248 + $0x34] sm:%s240] %v275
                  %v277 = vld [vmem:[%s247 + $0xa8] sm:%s240]
                  %278 = vst [vmem:[%s248 + $0x38] sm:%s240] %v277
                  %v279 = vld [vmem:[%s247 + $0xb4] sm:%s240]
                  %280 = vst [vmem:[%s248 + $0x3c] sm:%s240] %v279
                $region59: #{mri_3d_vit_forward.12} parent=46 // loop_footer
                  %s246 = sadd.s32 1, %s242
                $region60: #{mri_3d_vit_forward.12} parent=46 // loop_footer_branch
                  %241 = sbr.rel target = $region56
                $region61: #{mri_3d_vit_forward.12} parent=46 // loop_exit
                  _
              $region47: #{mri_3d_vit_forward.12} parent=31 // pred_fallthru
                _
            $region32: #{mri_3d_vit_forward.12} parent=27 // pred_fallthru
              _
            // Predicated region
            $region33: #{mri_3d_vit_forward.12} parent=27 // pred_check
              _
            $region34: #{mri_3d_vit_forward.12} parent=27 // pred_check_branch
              %186 = sbr.rel (0) target = $region36
            $region35: #{mri_3d_vit_forward.12} parent=27 // pred_region
              %s188 = ssub.s32 16, 1
              loop: start=0, step=1, limit=1
              $region37: #{mri_3d_vit_forward.12} parent=35 // loop_pre_header
                _
              $region38: #{mri_3d_vit_forward.12} parent=35 // loop_header
                %s190 = sphi 0, %s194
                %p191 = scmp.ge.s32.totalorder %s190, 1
                %s195 = sphi %s180, %s180
                %s196 = sphi %s175, %s175
              $region39: #{mri_3d_vit_forward.12} parent=35 // loop_header_branch
                %193 = sbr.rel (%p191) target = $region43
              $region40: #{mri_3d_vit_forward.12} parent=35 // loop_body
                %v197 = vld [vmem:[%s195] sm:%s188]
                %198 = vst [vmem:[%s196] sm:%s188] %v197
                %v199 = vld [vmem:[%s195 + $0xc] sm:%s188]
                %200 = vst [vmem:[%s196 + $0x4] sm:%s188] %v199
                %v201 = vld [vmem:[%s195 + $0x18] sm:%s188]
                %202 = vst [vmem:[%s196 + $0x8] sm:%s188] %v201
                %v203 = vld [vmem:[%s195 + $0x24] sm:%s188]
                %204 = vst [vmem:[%s196 + $0xc] sm:%s188] %v203
                %v205 = vld [vmem:[%s195 + $0x30] sm:%s188]
                %206 = vst [vmem:[%s196 + $0x10] sm:%s188] %v205
                %v207 = vld [vmem:[%s195 + $0x3c] sm:%s188]
                %208 = vst [vmem:[%s196 + $0x14] sm:%s188] %v207
                %v209 = vld [vmem:[%s195 + $0x48] sm:%s188]
                %210 = vst [vmem:[%s196 + $0x18] sm:%s188] %v209
                %v211 = vld [vmem:[%s195 + $0x54] sm:%s188]
                %212 = vst [vmem:[%s196 + $0x1c] sm:%s188] %v211
                %v213 = vld [vmem:[%s195 + $0x60] sm:%s188]
                %214 = vst [vmem:[%s196 + $0x20] sm:%s188] %v213
                %v215 = vld [vmem:[%s195 + $0x6c] sm:%s188]
                %216 = vst [vmem:[%s196 + $0x24] sm:%s188] %v215
                %v217 = vld [vmem:[%s195 + $0x78] sm:%s188]
                %218 = vst [vmem:[%s196 + $0x28] sm:%s188] %v217
                %v219 = vld [vmem:[%s195 + $0x84] sm:%s188]
                %220 = vst [vmem:[%s196 + $0x2c] sm:%s188] %v219
                %v221 = vld [vmem:[%s195 + $0x90] sm:%s188]
                %222 = vst [vmem:[%s196 + $0x30] sm:%s188] %v221
                %v223 = vld [vmem:[%s195 + $0x9c] sm:%s188]
                %224 = vst [vmem:[%s196 + $0x34] sm:%s188] %v223
                %v225 = vld [vmem:[%s195 + $0xa8] sm:%s188]
                %226 = vst [vmem:[%s196 + $0x38] sm:%s188] %v225
                %v227 = vld [vmem:[%s195 + $0xb4] sm:%s188]
                %228 = vst [vmem:[%s196 + $0x3c] sm:%s188] %v227
              $region41: #{mri_3d_vit_forward.12} parent=35 // loop_footer
                %s194 = sadd.s32 1, %s190
              $region42: #{mri_3d_vit_forward.12} parent=35 // loop_footer_branch
                %189 = sbr.rel target = $region38
              $region43: #{mri_3d_vit_forward.12} parent=35 // loop_exit
                _
            $region36: #{mri_3d_vit_forward.12} parent=27 // pred_fallthru
              _
          $region28: #{mri_3d_vit_forward.12} parent=23 // pred_fallthru
            _
          %281 = vnop
        $region24: #{mri_3d_vit_forward.12} parent=19 // pred_fallthru
          _
        // Predicated region
        $region62: #{mri_3d_vit_forward.12} parent=19 // pred_check
          %p282 = pneg %p104
        $region63: #{mri_3d_vit_forward.12} parent=19 // pred_check_branch
          %284 = sbr.rel (%p282) target = $region65
        $region64: #{mri_3d_vit_forward.12} parent=19 // pred_region
          %p285 = scmp.lt.s32.totalorder %s17, 2
          %s286 = scalar_select %p285, %s17, 2
          %s287 = scalar_lea.vmem %s2, %s286
        $region65: #{mri_3d_vit_forward.12} parent=19 // pred_fallthru
          _
      $region20: #{mri_3d_vit_forward.12} parent=5 // pred_fallthru
        _
      %p288 = scmp.le.s32.totalorder 1, %s9
      %p289 = scmp.lt.s32.totalorder %s9, 4
      %p290 = pnand %p288, %p289
      %p291 = pneg %p290
      // Predicated region
      $region66: #{mri_3d_vit_forward.12} parent=5 // pred_check
        _
      $region67: #{mri_3d_vit_forward.12} parent=5 // pred_check_branch
        %293 = sbr.rel (%p290) target = $region69
      $region68: #{mri_3d_vit_forward.12} parent=5 // pred_region
        %s294 = ssub.s32 %s9, 1
        %s295 = sand.u32 %s71, 1
        %s296 = sand.u32 %s71, 1
        %s297 = smul.addr %s296, 64
        %s298 = scalar_lea.vmem [#allocation3], %s297
        // Predicated region
        $region70: #{mri_3d_vit_forward.12} parent=68 // pred_check
          %p299 = pneg %p84
        $region71: #{mri_3d_vit_forward.12} parent=68 // pred_check_branch
          %301 = sbr.rel (%p299) target = $region73
        $region72: #{mri_3d_vit_forward.12} parent=68 // pred_region
          _
        $region73: #{mri_3d_vit_forward.12} parent=68 // pred_fallthru
          _
        %s302 = smul.u32 3, %s19
        %p303 = scmp.lt.s32.totalorder %s302, 2
        %s304 = scalar_select %p303, %s302, 2
        %p305 = scmp.lt.s32.totalorder %s21, 0
        %s306 = scalar_select %p305, %s21, 0
        %s307 = sadd.s32 %s306, %s304
        %s308 = smul.addr %s307, 4
        %s309 = scalar_lea.vmem %s0, %s308
        %p310 = pneg %p56
        %p311 = pneg %p53
        %s312 = sand.u32 %s71, 1
        %s313 = sand.u32 %s71, 1
        %s314 = smul.addr %s313, 64
        %s315 = scalar_lea.vmem [#allocation3], %s314
        %p316 = pneg %p84
        %p317 = pneg %p81
        %p318 = scmp.lt.s32.totalorder %s20, 2
        %s319 = scalar_select %p318, %s20, 2
        %s320 = scalar_lea.vmem %s2, %s319
        %p321 = pneg %p110
        %p322 = pneg %p107
        %p323 = pneg %p138
        %p324 = pneg %p135
        %s325 = sand.u32 %s125, 1
        %s326 = sand.u32 %s125, 1
        %s327 = smul.addr %s326, 12
        %s328 = scalar_lea.vmem [#allocation4], %s327
        %s329 = smul.u32 3, %s19
        %p330 = scmp.lt.s32.totalorder %s329, 2
        %s331 = scalar_select %p330, %s329, 2
        %p332 = scmp.lt.s32.totalorder %s21, 0
        %s333 = scalar_select %p332, %s21, 0
        %s334 = sadd.s32 %s333, %s331
        %s335 = smul.addr %s334, 4
        %s336 = scalar_lea.vmem %s0, %s335
        %s337 = smul.u32 3, %s19
        %s338 = smul.u32 16, %s21
        %p339 = scmp.lt.s32.totalorder %s20, 2
        %s340 = scalar_select %p339, %s20, 2
        %s341 = scalar_lea.vmem %s2, %s340
        %s342 = smul.u32 3, %s19
        %p344 = scmp.eq.s32.totalorder %s21, 0
        // Predicated region
        $region74: #{mri_3d_vit_forward.12} parent=68 // pred_check
          %p345 = pneg %p344
        $region75: #{mri_3d_vit_forward.12} parent=68 // pred_check_branch
          %347 = sbr.rel (%p345) target = $region77
        $region76: #{mri_3d_vit_forward.12} parent=68 // pred_region
          %348 = vst [vmem:[#allocation2] sm:$0xff] 0.0
          %349 = vst [vmem:[#allocation2 + $0x8] sm:$0xff] 0.0
          %350 = vst [vmem:[#allocation2 + $0x10] sm:$0xff] 0.0
        $region77: #{mri_3d_vit_forward.12} parent=68 // pred_fallthru
          _
        %v351 = vld [vmem:[#allocation2] sm:$0xff]
        %v352 = vld [vmem:[#allocation2 + $0x8] sm:$0xff]
        %v353 = vld [vmem:[#allocation2 + $0x10] sm:$0xff]
        %v354 = vld [vmem:[%s336] sm:$0xf]
        %v355 = vld [vmem:[%s336 + $0x4] sm:$0xf]
        %v356 = vld [vmem:[%s336 + $0x8] sm:$0xf]
        %v357 = vld [vmem:[%s298] sm:$0xf]
        %v358 = vld [vmem:[%s298 + $0x4] sm:$0xf]
        %v359 = vld [vmem:[%s298 + $0x8] sm:$0xf]
        %v360 = vld [vmem:[%s298 + $0xc] sm:$0xf]
        %v361 = vld [vmem:[%s298 + $0x10] sm:$0xf]
        %v362 = vld [vmem:[%s298 + $0x14] sm:$0xf]
        %v363 = vld [vmem:[%s298 + $0x18] sm:$0xf]
        %v364 = vld [vmem:[%s298 + $0x1c] sm:$0xf]
        %v365 = vld [vmem:[%s298 + $0x20] sm:$0xf]
        %v366 = vld [vmem:[%s298 + $0x24] sm:$0xf]
        %v367 = vld [vmem:[%s298 + $0x28] sm:$0xf]
        %v368 = vld [vmem:[%s298 + $0x2c] sm:$0xf]
        %v369 = vld [vmem:[%s298 + $0x30] sm:$0xf]
        %v370 = vld [vmem:[%s298 + $0x34] sm:$0xf]
        %v371 = vld [vmem:[%s298 + $0x38] sm:$0xf]
        %v372 = vld [vmem:[%s298 + $0x3c] sm:$0xf]
        %v376 = vunpack.c.l.b16 %v354
        %v377 = vunpack.c.l.b16 %v355
        %v378 = vunpack.c.l.b16 %v356
        %v379 = vpack.c.b16 %v377, %v376
        %v380 = vpack.c.b16 %v378, %v378
        %v399 = vunpack.c.l.b16 %v357
        %v400 = vunpack.c.l.b16 %v358
        %v401 = vunpack.c.l.b16 %v359
        %v402 = vunpack.c.l.b16 %v360
        %v403 = vunpack.c.l.b16 %v361
        %v404 = vunpack.c.l.b16 %v362
        %v405 = vunpack.c.l.b16 %v363
        %v406 = vunpack.c.l.b16 %v364
        %v407 = vunpack.c.l.b16 %v365
        %v408 = vunpack.c.l.b16 %v366
        %v409 = vunpack.c.l.b16 %v367
        %v410 = vunpack.c.l.b16 %v368
        %v411 = vunpack.c.l.b16 %v369
        %v412 = vunpack.c.l.b16 %v370
        %v413 = vunpack.c.l.b16 %v371
        %v414 = vunpack.c.l.b16 %v372
        %v415 = vpack.c.b16 %v400, %v399
        %v416 = vpack.c.b16 %v402, %v401
        %v417 = vpack.c.b16 %v404, %v403
        %v418 = vpack.c.b16 %v406, %v405
        %v419 = vpack.c.b16 %v408, %v407
        %v420 = vpack.c.b16 %v410, %v409
        %v421 = vpack.c.b16 %v412, %v411
        %v422 = vpack.c.b16 %v414, %v413
        %431 = vmatprep.subr.bf16.mxu0 0
        %432 = vmatpush1.bf16.msra.mxu0 %v422
        %433 = vmatprep.subr.bf16.mxu0 0
        %434 = vmatpush1.bf16.msra.mxu0 %v421
        %435 = vmatprep.subr.bf16.mxu0 0
        %436 = vmatpush1.bf16.msra.mxu0 %v420
        %437 = vmatprep.subr.bf16.mxu0 0
        %438 = vmatpush1.bf16.msra.mxu0 %v419
        %439 = vmatprep.subr.bf16.mxu0 0
        %440 = vmatpush1.bf16.msra.mxu0 %v418
        %441 = vmatprep.subr.bf16.mxu0 0
        %442 = vmatpush1.bf16.msra.mxu0 %v417
        %443 = vmatprep.subr.bf16.mxu0 0
        %444 = vmatpush1.bf16.msra.mxu0 %v416
        %445 = vmatprep.subr.bf16.mxu0 0
        %446 = vmatpush1.bf16.msra.mxu0 %v415
        %447 = vmatprep.subr.bf16.mxu0 0
        %448 = vmatpush2.bf16.msra.mxu0 0
        %449 = vmatprep.subr.bf16.mxu0 0
        %450 = vmatpush2.bf16.msra.mxu0 0
        %451 = vmatprep.subr.bf16.mxu0 0
        %452 = vmatpush2.bf16.msra.mxu0 0
        %453 = vmatprep.subr.bf16.mxu0 0
        %454 = vmatpush2.bf16.msra.mxu0 0
        %455 = vmatprep.subr.bf16.mxu0 0
        %456 = vmatpush2.bf16.msra.mxu0 0
        %457 = vmatprep.subr.bf16.mxu0 0
        %458 = vmatpush2.bf16.msra.mxu0 0
        %459 = vmatprep.subr.bf16.mxu0 0
        %460 = vmatpush2.bf16.msra.mxu0 0
        %461 = vmatprep.subr.bf16.mxu0 0
        %462 = vmatpush2.bf16.msra.mxu0 0
        %463 = vmatprep.mubr.bf16.mxu0 0
        %464 = vmatmul.mubr.bf16.gmra.mxu0 %v379
        %v465 = vpop.f32.mrf.mxu0
        %v466 = vadd.f32 0.0, %v465
        %v467 = vpop.f32.mrf.mxu0
        %v468 = vpop.f32.mrf.mxu0
        %v469 = vadd.f32 0.0, %v468
        %v470 = vpop.f32.mrf.mxu0
        %471 = vmatprep.mubr.bf16.mxu0 0
        %472 = vmatmul.mubr.bf16.gmra.mxu0 %v380
        %v473 = vpop.f32.mrf.mxu0
        %v474 = vadd.f32 0.0, %v473
        %v475 = vpop.f32.mrf.mxu0
        %v476 = vpop.f32.mrf.mxu0
        %v477 = vpop.f32.mrf.mxu0
        %478 = vdwg.mxu0
        %v479 = vadd.f32 %v351, %v466
        %v480 = vadd.f32 %v352, %v469
        %v481 = vadd.f32 %v353, %v474
        %482 = vst [vmem:[#allocation2] sm:$0xff] %v479
        %483 = vst [vmem:[#allocation2 + $0x8] sm:$0xff] %v480
        %484 = vst [vmem:[#allocation2 + $0x10] sm:$0xff] %v481
        // Predicated region
        $region78: #{mri_3d_vit_forward.12} parent=68 // pred_check
          %p485 = pneg %p344
        $region79: #{mri_3d_vit_forward.12} parent=68 // pred_check_branch
          %487 = sbr.rel (%p485) target = $region81
        $region80: #{mri_3d_vit_forward.12} parent=68 // pred_region
          %v488 = vld [vmem:[#allocation2] sm:$0xff]
          %v489 = vld [vmem:[#allocation2 + $0x8] sm:$0xff]
          %v490 = vld [vmem:[#allocation2 + $0x10] sm:$0xff]
          %v491 = vld [vmem:[%s341] sm:$0x1]
          %v493 = vlaneseq
          %v494 = vshrl.u32 %v493, 7
          %v495 = vsub.s32 0, %v494
          %v496 = vrot.slane %v491, %v495
          %v498 = vadd.f32 %v488, %v496
          %v499 = vadd.f32 %v489, %v496
          %v500 = vadd.f32 %v490, %v496
          %v501 = vpack.c.bf16 %v499, %v498
          %v502 = vpack.c.bf16 %v500, %v500
          %v505 = vunpack.c.l.b16 %v501
          %v506 = vunpack.c.h.b16 %v501
          %v507 = vunpack.c.l.b16 %v502
          %v508 = vpack.c.b16 %v505, %v505
          %v509 = vpack.c.b16 %v506, %v506
          %v510 = vpack.c.b16 %v507, %v507
          %514 = vst [vmem:[%s328] sm:$0xf] %v508
          %515 = vst [vmem:[%s328 + $0x4] sm:$0xf] %v509
          %516 = vst [vmem:[%s328 + $0x8] sm:$0xf] %v510
        $region81: #{mri_3d_vit_forward.12} parent=68 // pred_fallthru
          _
        %s517 = sand.u32 %s125, 1
        %s518 = sand.u32 %s125, 1
        %s519 = smul.addr %s518, 12
        %s520 = scalar_lea.vmem [#allocation4], %s519
        // Predicated region
        $region82: #{mri_3d_vit_forward.12} parent=68 // pred_check
          %p521 = pneg %p135
        $region83: #{mri_3d_vit_forward.12} parent=68 // pred_check_branch
          %523 = sbr.rel (%p521) target = $region85
        $region84: #{mri_3d_vit_forward.12} parent=68 // pred_region
          %s524 = smul.u32 3, %s19
          %s525 = smul.addr %s524, 3
          %s526 = sadd.s32 %s20, %s525
          %s527 = smul.addr %s526, 4
          %s528 = scalar_lea.vmem %s3, %s527
          // Predicated region
          $region86: #{mri_3d_vit_forward.12} parent=84 // pred_check
            _
          $region87: #{mri_3d_vit_forward.12} parent=84 // pred_check_branch
            %530 = sbr.rel (0) target = $region89
          $region88: #{mri_3d_vit_forward.12} parent=84 // pred_region
            // Predicated region
            $region90: #{mri_3d_vit_forward.12} parent=88 // pred_check
              _
            $region91: #{mri_3d_vit_forward.12} parent=88 // pred_check_branch
              %532 = sbr.rel target = $region93
            $region92: #{mri_3d_vit_forward.12} parent=88 // pred_region
              // Predicated region
              $region105: #{mri_3d_vit_forward.12} parent=92 // pred_check
                _
              $region106: #{mri_3d_vit_forward.12} parent=92 // pred_check_branch
                %552 = sbr.rel (0) target = $region108
              $region107: #{mri_3d_vit_forward.12} parent=92 // pred_region
                loop: start=0, step=1, limit=1
                $region109: #{mri_3d_vit_forward.12} parent=107 // loop_pre_header
                  _
                $region110: #{mri_3d_vit_forward.12} parent=107 // loop_header
                  %s554 = sphi 0, %s558
                  %p555 = scmp.ge.s32.totalorder %s554, 1
                  %s559 = sphi %s520, %s520
                  %s560 = sphi %s528, %s528
                $region111: #{mri_3d_vit_forward.12} parent=107 // loop_header_branch
                  %557 = sbr.rel (%p555) target = $region115
                $region112: #{mri_3d_vit_forward.12} parent=107 // loop_body
                  _
                $region113: #{mri_3d_vit_forward.12} parent=107 // loop_footer
                  %s558 = sadd.s32 1, %s554
                $region114: #{mri_3d_vit_forward.12} parent=107 // loop_footer_branch
                  %553 = sbr.rel target = $region110
                $region115: #{mri_3d_vit_forward.12} parent=107 // loop_exit
                  _
                %s562 = ssub.s32 16, 1
                loop: start=0, step=1, limit=1
                $region116: #{mri_3d_vit_forward.12} parent=107 // loop_pre_header
                  _
                $region117: #{mri_3d_vit_forward.12} parent=107 // loop_header
                  %s564 = sphi 0, %s568
                  %p565 = scmp.ge.s32.totalorder %s564, 1
                  %s569 = sphi %s520, %s520
                  %s570 = sphi %s528, %s528
                $region118: #{mri_3d_vit_forward.12} parent=107 // loop_header_branch
                  %567 = sbr.rel (%p565) target = $region122
                $region119: #{mri_3d_vit_forward.12} parent=107 // loop_body
                  %v571 = vld [vmem:[%s569] sm:%s562]
                  %572 = vst [vmem:[%s570] sm:%s562] %v571
                  %v573 = vld [vmem:[%s569 + $0x4] sm:%s562]
                  %574 = vst [vmem:[%s570 + $0xc] sm:%s562] %v573
                  %v575 = vld [vmem:[%s569 + $0x8] sm:%s562]
                  %576 = vst [vmem:[%s570 + $0x18] sm:%s562] %v575
                $region120: #{mri_3d_vit_forward.12} parent=107 // loop_footer
                  %s568 = sadd.s32 1, %s564
                $region121: #{mri_3d_vit_forward.12} parent=107 // loop_footer_branch
                  %563 = sbr.rel target = $region117
                $region122: #{mri_3d_vit_forward.12} parent=107 // loop_exit
                  _
              $region108: #{mri_3d_vit_forward.12} parent=92 // pred_fallthru
                _
            $region93: #{mri_3d_vit_forward.12} parent=88 // pred_fallthru
              _
            // Predicated region
            $region94: #{mri_3d_vit_forward.12} parent=88 // pred_check
              _
            $region95: #{mri_3d_vit_forward.12} parent=88 // pred_check_branch
              %534 = sbr.rel (0) target = $region97
            $region96: #{mri_3d_vit_forward.12} parent=88 // pred_region
              %s536 = ssub.s32 16, 1
              loop: start=0, step=1, limit=1
              $region98: #{mri_3d_vit_forward.12} parent=96 // loop_pre_header
                _
              $region99: #{mri_3d_vit_forward.12} parent=96 // loop_header
                %s538 = sphi 0, %s542
                %p539 = scmp.ge.s32.totalorder %s538, 1
                %s543 = sphi %s520, %s520
                %s544 = sphi %s528, %s528
              $region100: #{mri_3d_vit_forward.12} parent=96 // loop_header_branch
                %541 = sbr.rel (%p539) target = $region104
              $region101: #{mri_3d_vit_forward.12} parent=96 // loop_body
                %v545 = vld [vmem:[%s543] sm:%s536]
                %546 = vst [vmem:[%s544] sm:%s536] %v545
                %v547 = vld [vmem:[%s543 + $0x4] sm:%s536]
                %548 = vst [vmem:[%s544 + $0xc] sm:%s536] %v547
                %v549 = vld [vmem:[%s543 + $0x8] sm:%s536]
                %550 = vst [vmem:[%s544 + $0x18] sm:%s536] %v549
              $region102: #{mri_3d_vit_forward.12} parent=96 // loop_footer
                %s542 = sadd.s32 1, %s538
              $region103: #{mri_3d_vit_forward.12} parent=96 // loop_footer_branch
                %537 = sbr.rel target = $region99
              $region104: #{mri_3d_vit_forward.12} parent=96 // loop_exit
                _
            $region97: #{mri_3d_vit_forward.12} parent=88 // pred_fallthru
              _
          $region89: #{mri_3d_vit_forward.12} parent=84 // pred_fallthru
            _
          %577 = vnop
        $region85: #{mri_3d_vit_forward.12} parent=68 // pred_fallthru
          _
      $region69: #{mri_3d_vit_forward.12} parent=5 // pred_fallthru
        _
      %p578 = scmp.le.s32.totalorder 2, %s9
      // Predicated region
      $region123: #{mri_3d_vit_forward.12} parent=5 // pred_check
        %p579 = pneg %p578
      $region124: #{mri_3d_vit_forward.12} parent=5 // pred_check_branch
        %581 = sbr.rel (%p579) target = $region126
      $region125: #{mri_3d_vit_forward.12} parent=5 // pred_region
        %s582 = ssub.s32 %s9, 2
        // Predicated region
        $region127: #{mri_3d_vit_forward.12} parent=125 // pred_check
          %p583 = pneg %p141
        $region128: #{mri_3d_vit_forward.12} parent=125 // pred_check_branch
          %585 = sbr.rel (%p583) target = $region130
        $region129: #{mri_3d_vit_forward.12} parent=125 // pred_region
          %s586 = sand.u32 %s126, 1
          %s587 = sand.u32 %s126, 1
          %s588 = smul.addr %s587, 12
          %s589 = scalar_lea.vmem [#allocation4], %s588
        $region130: #{mri_3d_vit_forward.12} parent=125 // pred_fallthru
          _
      $region126: #{mri_3d_vit_forward.12} parent=5 // pred_fallthru
        _
    $region6: #{mri_3d_vit_forward.12} parent=1 // loop_footer
      %s13 = sadd.s32 1, %s9
    $region7: #{mri_3d_vit_forward.12} parent=1 // loop_footer_branch
      %8 = sbr.rel target = $region3
    $region8: #{mri_3d_vit_forward.12} parent=1 // loop_exit
      _

// kernel: mri_3d_vit_forward.13
$region0: #{mri_3d_vit_forward.13}
  #allocation0 [shape = 'u32[]', space=smem, size = 0x4, offset = 0x4, fixed_abs, tag = 'smem constant byte address 0x4 - core index']
  #allocation1 [shape = 'u32[144,128]{1,0:T(1,128)}', space=vmem, size = 0x12000, scoped, tag = 'internal scratch']
  %s0 = inlined_call_operand.vmem [shape: bf16[2,9,384], index: 0, kind: input, shape index: {}, may-alias: {0,1,2}]
  %s1 = inlined_call_operand.vmem [shape: bf16[2,9,384], index: 1, kind: input, shape index: {}, may-alias: {0,1,2}]
  %s2 = inlined_call_operand.vmem [shape: bf16[2,9,384], index: 2, kind: input, shape index: {}, may-alias: {0,1,2}]
  %s3 = inlined_call_operand.vmem [shape: bf16[2,9,128], index: 3, kind: output, shape index: {}]
  %s4 = sld [smem:[#allocation0]]
  $region168: #{mri_3d_vit_forward.13} parent=0
    _
  %s6 = ssub.s32 1, %s4
  %s7 = scalar_select 0, %s6, %s4
  $region1: #{mri_3d_vit_forward.13} parent=0
    #allocation2 [shape = 'u8[8192]{0}', space=vmem, size = 0x2000, scoped, tag = 'input window, operand 0']
    #allocation3 [shape = 'u8[8192]{0}', space=vmem, size = 0x2000, scoped, tag = 'input window, operand 1']
    #allocation4 [shape = 'u8[8192]{0}', space=vmem, size = 0x2000, scoped, tag = 'input window, operand 2']
    loop: start=0, step=1, limit=4
    $region2: #{mri_3d_vit_forward.13} parent=1 // loop_pre_header
      _
    $region3: #{mri_3d_vit_forward.13} parent=1 // loop_header
      %s9 = sphi 0, %s13
      %p10 = scmp.ge.s32.totalorder %s9, 4
      %s19 = sphi 0, %s21
      %s22 = sphi 0, %s19
      %s23 = sphi 0, %s22
      %s39 = sphi 0, %s23
      %s45 = sphi 0, %s47
      %s48 = sphi 0, %s45
      %s49 = sphi 0, %s48
      %s65 = sphi 0, %s49
      %s71 = sphi 0, %s73
      %s74 = sphi 0, %s71
      %s75 = sphi 0, %s74
      %s91 = sphi 0, %s75
      %s97 = sphi 0, %s99
      %s100 = sphi 0, %s97
      %s101 = sphi 0, %s100
      %s117 = sphi 0, %s101
    $region4: #{mri_3d_vit_forward.13} parent=1 // loop_header_branch
      %12 = sbr.rel (%p10) target = $region8
    $region5: #{mri_3d_vit_forward.13} parent=1 // loop_body
      %s14 = ssub.s32 %s9, 1
      %s15 = ssub.s32 %s9, 2
      %s16 = sadd.s32 %s9, 1
      %s17 = ssub.s32 %s9, %s16
      %p18 = scmp.eq.s32.totalorder %s17, 0
      %s20 = sadd.s32 %s19, 1
      %s21 = scalar_select %p18, %s19, %s20
      %p24 = pneg %p18
      %p25 = scmp.eq.s32.totalorder %s9, 1
      %p26 = por %p24, %p25
      %p27 = scmp.ne.s32.totalorder %s19, %s22
      %p28 = scmp.eq.s32.totalorder %s9, 0
      %p29 = por %p27, %p28
      %p30 = scmp.ne.s32.totalorder %s19, %s22
      %p31 = scmp.eq.s32.totalorder %s14, 1
      %p32 = por %p30, %p31
      %p33 = scmp.ne.s32.totalorder %s22, %s23
      %p34 = scmp.eq.s32.totalorder %s14, 0
      %p35 = por %p33, %p34
      %p36 = scmp.ne.s32.totalorder %s22, %s23
      %p37 = scmp.eq.s32.totalorder %s15, 1
      %p38 = por %p36, %p37
      %p40 = scmp.ne.s32.totalorder %s23, %s39
      %p41 = scmp.eq.s32.totalorder %s15, 0
      %p42 = por %p40, %p41
      %s43 = ssub.s32 %s9, %s16
      %p44 = scmp.eq.s32.totalorder %s43, 0
      %s46 = sadd.s32 %s45, 1
      %s47 = scalar_select %p44, %s45, %s46
      %p50 = pneg %p44
      %p51 = scmp.eq.s32.totalorder %s9, 1
      %p52 = por %p50, %p51
      %p53 = scmp.ne.s32.totalorder %s45, %s48
      %p54 = scmp.eq.s32.totalorder %s9, 0
      %p55 = por %p53, %p54
      %p56 = scmp.ne.s32.totalorder %s45, %s48
      %p57 = scmp.eq.s32.totalorder %s14, 1
      %p58 = por %p56, %p57
      %p59 = scmp.ne.s32.totalorder %s48, %s49
      %p60 = scmp.eq.s32.totalorder %s14, 0
      %p61 = por %p59, %p60
      %p62 = scmp.ne.s32.totalorder %s48, %s49
      %p63 = scmp.eq.s32.totalorder %s15, 1
      %p64 = por %p62, %p63
      %p66 = scmp.ne.s32.totalorder %s49, %s65
      %p67 = scmp.eq.s32.totalorder %s15, 0
      %p68 = por %p66, %p67
      %s69 = ssub.s32 %s9, %s16
      %p70 = scmp.eq.s32.totalorder %s69, 0
      %s72 = sadd.s32 %s71, 1
      %s73 = scalar_select %p70, %s71, %s72
      %p76 = pneg %p70
      %p77 = scmp.eq.s32.totalorder %s9, 1
      %p78 = por %p76, %p77
      %p79 = scmp.ne.s32.totalorder %s71, %s74
      %p80 = scmp.eq.s32.totalorder %s9, 0
      %p81 = por %p79, %p80
      %p82 = scmp.ne.s32.totalorder %s71, %s74
      %p83 = scmp.eq.s32.totalorder %s14, 1
      %p84 = por %p82, %p83
      %p85 = scmp.ne.s32.totalorder %s74, %s75
      %p86 = scmp.eq.s32.totalorder %s14, 0
      %p87 = por %p85, %p86
      %p88 = scmp.ne.s32.totalorder %s74, %s75
      %p89 = scmp.eq.s32.totalorder %s15, 1
      %p90 = por %p88, %p89
      %p92 = scmp.ne.s32.totalorder %s75, %s91
      %p93 = scmp.eq.s32.totalorder %s15, 0
      %p94 = por %p92, %p93
      %s95 = ssub.s32 %s9, %s16
      %p96 = scmp.eq.s32.totalorder %s95, 0
      %s98 = sadd.s32 %s97, 1
      %s99 = scalar_select %p96, %s97, %s98
      %p102 = pneg %p96
      %p103 = scmp.eq.s32.totalorder %s9, 1
      %p104 = por %p102, %p103
      %p105 = scmp.ne.s32.totalorder %s97, %s100
      %p106 = scmp.eq.s32.totalorder %s9, 0
      %p107 = por %p105, %p106
      %p108 = scmp.ne.s32.totalorder %s97, %s100
      %p109 = scmp.eq.s32.totalorder %s14, 1
      %p110 = por %p108, %p109
      %p111 = scmp.ne.s32.totalorder %s100, %s101
      %p112 = scmp.eq.s32.totalorder %s14, 0
      %p113 = por %p111, %p112
      %p114 = scmp.ne.s32.totalorder %s100, %s101
      %p115 = scmp.eq.s32.totalorder %s15, 1
      %p116 = por %p114, %p115
      %p118 = scmp.ne.s32.totalorder %s101, %s117
      %p119 = scmp.eq.s32.totalorder %s15, 0
      %p120 = por %p118, %p119
      %p121 = scmp.le.s32.totalorder 1, %s9
      %p122 = scmp.lt.s32.totalorder %s9, 3
      %p123 = pnand %p121, %p122
      %p124 = pneg %p123
      // Predicated region
      $region9: #{mri_3d_vit_forward.13} parent=5 // pred_check
        _
      $region10: #{mri_3d_vit_forward.13} parent=5 // pred_check_branch
        %126 = sbr.rel (%p123) target = $region12
      $region11: #{mri_3d_vit_forward.13} parent=5 // pred_region
        %s127 = ssub.s32 %s9, 1
      $region12: #{mri_3d_vit_forward.13} parent=5 // pred_fallthru
        _
      %p128 = scmp.lt.s32.totalorder %s9, 2
      // Predicated region
      $region13: #{mri_3d_vit_forward.13} parent=5 // pred_check
        %p129 = pneg %p128
      $region14: #{mri_3d_vit_forward.13} parent=5 // pred_check_branch
        %131 = sbr.rel (%p129) target = $region16
      $region15: #{mri_3d_vit_forward.13} parent=5 // pred_region
        // Predicated region
        $region17: #{mri_3d_vit_forward.13} parent=15 // pred_check
          %p132 = pneg %p29
        $region18: #{mri_3d_vit_forward.13} parent=15 // pred_check_branch
          %134 = sbr.rel (%p132) target = $region20
        $region19: #{mri_3d_vit_forward.13} parent=15 // pred_region
          %s135 = sand.u32 %s19, 1
          %s136 = sand.u32 %s19, 1
          %s137 = smul.addr %s136, 8
          %s138 = scalar_lea.vmem [#allocation2], %s137
          %s139 = smul.addr %s9, 6
          %s140 = smul.addr %s139, 4
          %s141 = scalar_lea.vmem %s0, %s140
          // Predicated region
          $region21: #{mri_3d_vit_forward.13} parent=19 // pred_check
            _
          $region22: #{mri_3d_vit_forward.13} parent=19 // pred_check_branch
            %143 = sbr.rel (0) target = $region24
          $region23: #{mri_3d_vit_forward.13} parent=19 // pred_region
            // Predicated region
            $region25: #{mri_3d_vit_forward.13} parent=23 // pred_check
              _
            $region26: #{mri_3d_vit_forward.13} parent=23 // pred_check_branch
              %145 = sbr.rel target = $region28
            $region27: #{mri_3d_vit_forward.13} parent=23 // pred_region
              // Predicated region
              $region40: #{mri_3d_vit_forward.13} parent=27 // pred_check
                _
              $region41: #{mri_3d_vit_forward.13} parent=27 // pred_check_branch
                %163 = sbr.rel (0) target = $region43
              $region42: #{mri_3d_vit_forward.13} parent=27 // pred_region
                loop: start=0, step=1, limit=1
                $region44: #{mri_3d_vit_forward.13} parent=42 // loop_pre_header
                  _
                $region45: #{mri_3d_vit_forward.13} parent=42 // loop_header
                  %s165 = sphi 0, %s169
                  %p166 = scmp.ge.s32.totalorder %s165, 1
                  %s170 = sphi %s141, %s141
                  %s171 = sphi %s138, %s138
                $region46: #{mri_3d_vit_forward.13} parent=42 // loop_header_branch
                  %168 = sbr.rel (%p166) target = $region50
                $region47: #{mri_3d_vit_forward.13} parent=42 // loop_body
                  _
                $region48: #{mri_3d_vit_forward.13} parent=42 // loop_footer
                  %s169 = sadd.s32 1, %s165
                $region49: #{mri_3d_vit_forward.13} parent=42 // loop_footer_branch
                  %164 = sbr.rel target = $region45
                $region50: #{mri_3d_vit_forward.13} parent=42 // loop_exit
                  _
                %s173 = ssub.s32 16, 1
                loop: start=0, step=1, limit=1
                $region51: #{mri_3d_vit_forward.13} parent=42 // loop_pre_header
                  _
                $region52: #{mri_3d_vit_forward.13} parent=42 // loop_header
                  %s175 = sphi 0, %s179
                  %p176 = scmp.ge.s32.totalorder %s175, 1
                  %s180 = sphi %s141, %s141
                  %s181 = sphi %s138, %s138
                $region53: #{mri_3d_vit_forward.13} parent=42 // loop_header_branch
                  %178 = sbr.rel (%p176) target = $region57
                $region54: #{mri_3d_vit_forward.13} parent=42 // loop_body
                  %v182 = vld [vmem:[%s180] sm:%s173]
                  %183 = vst [vmem:[%s181] sm:%s173] %v182
                  %v184 = vld [vmem:[%s180 + $0xc] sm:%s173]
                  %185 = vst [vmem:[%s181 + $0x4] sm:%s173] %v184
                $region55: #{mri_3d_vit_forward.13} parent=42 // loop_footer
                  %s179 = sadd.s32 1, %s175
                $region56: #{mri_3d_vit_forward.13} parent=42 // loop_footer_branch
                  %174 = sbr.rel target = $region52
                $region57: #{mri_3d_vit_forward.13} parent=42 // loop_exit
                  _
              $region43: #{mri_3d_vit_forward.13} parent=27 // pred_fallthru
                _
            $region28: #{mri_3d_vit_forward.13} parent=23 // pred_fallthru
              _
            // Predicated region
            $region29: #{mri_3d_vit_forward.13} parent=23 // pred_check
              _
            $region30: #{mri_3d_vit_forward.13} parent=23 // pred_check_branch
              %147 = sbr.rel (0) target = $region32
            $region31: #{mri_3d_vit_forward.13} parent=23 // pred_region
              %s149 = ssub.s32 16, 1
              loop: start=0, step=1, limit=1
              $region33: #{mri_3d_vit_forward.13} parent=31 // loop_pre_header
                _
              $region34: #{mri_3d_vit_forward.13} parent=31 // loop_header
                %s151 = sphi 0, %s155
                %p152 = scmp.ge.s32.totalorder %s151, 1
                %s156 = sphi %s141, %s141
                %s157 = sphi %s138, %s138
              $region35: #{mri_3d_vit_forward.13} parent=31 // loop_header_branch
                %154 = sbr.rel (%p152) target = $region39
              $region36: #{mri_3d_vit_forward.13} parent=31 // loop_body
                %v158 = vld [vmem:[%s156] sm:%s149]
                %159 = vst [vmem:[%s157] sm:%s149] %v158
                %v160 = vld [vmem:[%s156 + $0xc] sm:%s149]
                %161 = vst [vmem:[%s157 + $0x4] sm:%s149] %v160
              $region37: #{mri_3d_vit_forward.13} parent=31 // loop_footer
                %s155 = sadd.s32 1, %s151
              $region38: #{mri_3d_vit_forward.13} parent=31 // loop_footer_branch
                %150 = sbr.rel target = $region34
              $region39: #{mri_3d_vit_forward.13} parent=31 // loop_exit
                _
            $region32: #{mri_3d_vit_forward.13} parent=23 // pred_fallthru
              _
          $region24: #{mri_3d_vit_forward.13} parent=19 // pred_fallthru
            _
          %186 = vnop
        $region20: #{mri_3d_vit_forward.13} parent=15 // pred_fallthru
          _
        // Predicated region
        $region58: #{mri_3d_vit_forward.13} parent=15 // pred_check
          %p187 = pneg %p55
        $region59: #{mri_3d_vit_forward.13} parent=15 // pred_check_branch
          %189 = sbr.rel (%p187) target = $region61
        $region60: #{mri_3d_vit_forward.13} parent=15 // pred_region
          %s190 = sand.u32 %s45, 1
          %s191 = sand.u32 %s45, 1
          %s192 = smul.addr %s191, 8
          %s193 = scalar_lea.vmem [#allocation3], %s192
          %s194 = smul.addr %s9, 6
          %s195 = sadd.s32 1, %s194
          %s196 = smul.addr %s195, 4
          %s197 = scalar_lea.vmem %s1, %s196
          // Predicated region
          $region62: #{mri_3d_vit_forward.13} parent=60 // pred_check
            _
          $region63: #{mri_3d_vit_forward.13} parent=60 // pred_check_branch
            %199 = sbr.rel (0) target = $region65
          $region64: #{mri_3d_vit_forward.13} parent=60 // pred_region
            // Predicated region
            $region66: #{mri_3d_vit_forward.13} parent=64 // pred_check
              _
            $region67: #{mri_3d_vit_forward.13} parent=64 // pred_check_branch
              %201 = sbr.rel target = $region69
            $region68: #{mri_3d_vit_forward.13} parent=64 // pred_region
              // Predicated region
              $region81: #{mri_3d_vit_forward.13} parent=68 // pred_check
                _
              $region82: #{mri_3d_vit_forward.13} parent=68 // pred_check_branch
                %219 = sbr.rel (0) target = $region84
              $region83: #{mri_3d_vit_forward.13} parent=68 // pred_region
                loop: start=0, step=1, limit=1
                $region85: #{mri_3d_vit_forward.13} parent=83 // loop_pre_header
                  _
                $region86: #{mri_3d_vit_forward.13} parent=83 // loop_header
                  %s221 = sphi 0, %s225
                  %p222 = scmp.ge.s32.totalorder %s221, 1
                  %s226 = sphi %s197, %s197
                  %s227 = sphi %s193, %s193
                $region87: #{mri_3d_vit_forward.13} parent=83 // loop_header_branch
                  %224 = sbr.rel (%p222) target = $region91
                $region88: #{mri_3d_vit_forward.13} parent=83 // loop_body
                  _
                $region89: #{mri_3d_vit_forward.13} parent=83 // loop_footer
                  %s225 = sadd.s32 1, %s221
                $region90: #{mri_3d_vit_forward.13} parent=83 // loop_footer_branch
                  %220 = sbr.rel target = $region86
                $region91: #{mri_3d_vit_forward.13} parent=83 // loop_exit
                  _
                %s229 = ssub.s32 16, 1
                loop: start=0, step=1, limit=1
                $region92: #{mri_3d_vit_forward.13} parent=83 // loop_pre_header
                  _
                $region93: #{mri_3d_vit_forward.13} parent=83 // loop_header
                  %s231 = sphi 0, %s235
                  %p232 = scmp.ge.s32.totalorder %s231, 1
                  %s236 = sphi %s197, %s197
                  %s237 = sphi %s193, %s193
                $region94: #{mri_3d_vit_forward.13} parent=83 // loop_header_branch
                  %234 = sbr.rel (%p232) target = $region98
                $region95: #{mri_3d_vit_forward.13} parent=83 // loop_body
                  %v238 = vld [vmem:[%s236] sm:%s229]
                  %239 = vst [vmem:[%s237] sm:%s229] %v238
                  %v240 = vld [vmem:[%s236 + $0xc] sm:%s229]
                  %241 = vst [vmem:[%s237 + $0x4] sm:%s229] %v240
                $region96: #{mri_3d_vit_forward.13} parent=83 // loop_footer
                  %s235 = sadd.s32 1, %s231
                $region97: #{mri_3d_vit_forward.13} parent=83 // loop_footer_branch
                  %230 = sbr.rel target = $region93
                $region98: #{mri_3d_vit_forward.13} parent=83 // loop_exit
                  _
              $region84: #{mri_3d_vit_forward.13} parent=68 // pred_fallthru
                _
            $region69: #{mri_3d_vit_forward.13} parent=64 // pred_fallthru
              _
            // Predicated region
            $region70: #{mri_3d_vit_forward.13} parent=64 // pred_check
              _
            $region71: #{mri_3d_vit_forward.13} parent=64 // pred_check_branch
              %203 = sbr.rel (0) target = $region73
            $region72: #{mri_3d_vit_forward.13} parent=64 // pred_region
              %s205 = ssub.s32 16, 1
              loop: start=0, step=1, limit=1
              $region74: #{mri_3d_vit_forward.13} parent=72 // loop_pre_header
                _
              $region75: #{mri_3d_vit_forward.13} parent=72 // loop_header
                %s207 = sphi 0, %s211
                %p208 = scmp.ge.s32.totalorder %s207, 1
                %s212 = sphi %s197, %s197
                %s213 = sphi %s193, %s193
              $region76: #{mri_3d_vit_forward.13} parent=72 // loop_header_branch
                %210 = sbr.rel (%p208) target = $region80
              $region77: #{mri_3d_vit_forward.13} parent=72 // loop_body
                %v214 = vld [vmem:[%s212] sm:%s205]
                %215 = vst [vmem:[%s213] sm:%s205] %v214
                %v216 = vld [vmem:[%s212 + $0xc] sm:%s205]
                %217 = vst [vmem:[%s213 + $0x4] sm:%s205] %v216
              $region78: #{mri_3d_vit_forward.13} parent=72 // loop_footer
                %s211 = sadd.s32 1, %s207
              $region79: #{mri_3d_vit_forward.13} parent=72 // loop_footer_branch
                %206 = sbr.rel target = $region75
              $region80: #{mri_3d_vit_forward.13} parent=72 // loop_exit
                _
            $region73: #{mri_3d_vit_forward.13} parent=64 // pred_fallthru
              _
          $region65: #{mri_3d_vit_forward.13} parent=60 // pred_fallthru
            _
          %242 = vnop
        $region61: #{mri_3d_vit_forward.13} parent=15 // pred_fallthru
          _
        // Predicated region
        $region99: #{mri_3d_vit_forward.13} parent=15 // pred_check
          %p243 = pneg %p81
        $region100: #{mri_3d_vit_forward.13} parent=15 // pred_check_branch
          %245 = sbr.rel (%p243) target = $region102
        $region101: #{mri_3d_vit_forward.13} parent=15 // pred_region
          %s246 = sand.u32 %s71, 1
          %s247 = sand.u32 %s71, 1
          %s248 = smul.addr %s247, 8
          %s249 = scalar_lea.vmem [#allocation4], %s248
          %s250 = smul.addr %s9, 6
          %s251 = sadd.s32 2, %s250
          %s252 = smul.addr %s251, 4
          %s253 = scalar_lea.vmem %s2, %s252
          // Predicated region
          $region103: #{mri_3d_vit_forward.13} parent=101 // pred_check
            _
          $region104: #{mri_3d_vit_forward.13} parent=101 // pred_check_branch
            %255 = sbr.rel (0) target = $region106
          $region105: #{mri_3d_vit_forward.13} parent=101 // pred_region
            // Predicated region
            $region107: #{mri_3d_vit_forward.13} parent=105 // pred_check
              _
            $region108: #{mri_3d_vit_forward.13} parent=105 // pred_check_branch
              %257 = sbr.rel target = $region110
            $region109: #{mri_3d_vit_forward.13} parent=105 // pred_region
              // Predicated region
              $region122: #{mri_3d_vit_forward.13} parent=109 // pred_check
                _
              $region123: #{mri_3d_vit_forward.13} parent=109 // pred_check_branch
                %275 = sbr.rel (0) target = $region125
              $region124: #{mri_3d_vit_forward.13} parent=109 // pred_region
                loop: start=0, step=1, limit=1
                $region126: #{mri_3d_vit_forward.13} parent=124 // loop_pre_header
                  _
                $region127: #{mri_3d_vit_forward.13} parent=124 // loop_header
                  %s277 = sphi 0, %s281
                  %p278 = scmp.ge.s32.totalorder %s277, 1
                  %s282 = sphi %s253, %s253
                  %s283 = sphi %s249, %s249
                $region128: #{mri_3d_vit_forward.13} parent=124 // loop_header_branch
                  %280 = sbr.rel (%p278) target = $region132
                $region129: #{mri_3d_vit_forward.13} parent=124 // loop_body
                  _
                $region130: #{mri_3d_vit_forward.13} parent=124 // loop_footer
                  %s281 = sadd.s32 1, %s277
                $region131: #{mri_3d_vit_forward.13} parent=124 // loop_footer_branch
                  %276 = sbr.rel target = $region127
                $region132: #{mri_3d_vit_forward.13} parent=124 // loop_exit
                  _
                %s285 = ssub.s32 16, 1
                loop: start=0, step=1, limit=1
                $region133: #{mri_3d_vit_forward.13} parent=124 // loop_pre_header
                  _
                $region134: #{mri_3d_vit_forward.13} parent=124 // loop_header
                  %s287 = sphi 0, %s291
                  %p288 = scmp.ge.s32.totalorder %s287, 1
                  %s292 = sphi %s253, %s253
                  %s293 = sphi %s249, %s249
                $region135: #{mri_3d_vit_forward.13} parent=124 // loop_header_branch
                  %290 = sbr.rel (%p288) target = $region139
                $region136: #{mri_3d_vit_forward.13} parent=124 // loop_body
                  %v294 = vld [vmem:[%s292] sm:%s285]
                  %295 = vst [vmem:[%s293] sm:%s285] %v294
                  %v296 = vld [vmem:[%s292 + $0xc] sm:%s285]
                  %297 = vst [vmem:[%s293 + $0x4] sm:%s285] %v296
                $region137: #{mri_3d_vit_forward.13} parent=124 // loop_footer
                  %s291 = sadd.s32 1, %s287
                $region138: #{mri_3d_vit_forward.13} parent=124 // loop_footer_branch
                  %286 = sbr.rel target = $region134
                $region139: #{mri_3d_vit_forward.13} parent=124 // loop_exit
                  _
              $region125: #{mri_3d_vit_forward.13} parent=109 // pred_fallthru
                _
            $region110: #{mri_3d_vit_forward.13} parent=105 // pred_fallthru
              _
            // Predicated region
            $region111: #{mri_3d_vit_forward.13} parent=105 // pred_check
              _
            $region112: #{mri_3d_vit_forward.13} parent=105 // pred_check_branch
              %259 = sbr.rel (0) target = $region114
            $region113: #{mri_3d_vit_forward.13} parent=105 // pred_region
              %s261 = ssub.s32 16, 1
              loop: start=0, step=1, limit=1
              $region115: #{mri_3d_vit_forward.13} parent=113 // loop_pre_header
                _
              $region116: #{mri_3d_vit_forward.13} parent=113 // loop_header
                %s263 = sphi 0, %s267
                %p264 = scmp.ge.s32.totalorder %s263, 1
                %s268 = sphi %s253, %s253
                %s269 = sphi %s249, %s249
              $region117: #{mri_3d_vit_forward.13} parent=113 // loop_header_branch
                %266 = sbr.rel (%p264) target = $region121
              $region118: #{mri_3d_vit_forward.13} parent=113 // loop_body
                %v270 = vld [vmem:[%s268] sm:%s261]
                %271 = vst [vmem:[%s269] sm:%s261] %v270
                %v272 = vld [vmem:[%s268 + $0xc] sm:%s261]
                %273 = vst [vmem:[%s269 + $0x4] sm:%s261] %v272
              $region119: #{mri_3d_vit_forward.13} parent=113 // loop_footer
                %s267 = sadd.s32 1, %s263
              $region120: #{mri_3d_vit_forward.13} parent=113 // loop_footer_branch
                %262 = sbr.rel target = $region116
              $region121: #{mri_3d_vit_forward.13} parent=113 // loop_exit
                _
            $region114: #{mri_3d_vit_forward.13} parent=105 // pred_fallthru
              _
          $region106: #{mri_3d_vit_forward.13} parent=101 // pred_fallthru
            _
          %298 = vnop
        $region102: #{mri_3d_vit_forward.13} parent=15 // pred_fallthru
          _
      $region16: #{mri_3d_vit_forward.13} parent=5 // pred_fallthru
        _
      %p299 = scmp.le.s32.totalorder 1, %s9
      %p300 = scmp.lt.s32.totalorder %s9, 3
      %p301 = pnand %p299, %p300
      %p302 = pneg %p301
      // Predicated region
      $region140: #{mri_3d_vit_forward.13} parent=5 // pred_check
        _
      $region141: #{mri_3d_vit_forward.13} parent=5 // pred_check_branch
        %304 = sbr.rel (%p301) target = $region143
      $region142: #{mri_3d_vit_forward.13} parent=5 // pred_region
        %s305 = ssub.s32 %s9, 1
        %s306 = sand.u32 %s22, 1
        %s307 = sand.u32 %s22, 1
        %s308 = smul.addr %s307, 8
        %s309 = scalar_lea.vmem [#allocation2], %s308
        // Predicated region
        $region144: #{mri_3d_vit_forward.13} parent=142 // pred_check
          %p310 = pneg %p35
        $region145: #{mri_3d_vit_forward.13} parent=142 // pred_check_branch
          %312 = sbr.rel (%p310) target = $region147
        $region146: #{mri_3d_vit_forward.13} parent=142 // pred_region
          _
        $region147: #{mri_3d_vit_forward.13} parent=142 // pred_fallthru
          _
        %s313 = sand.u32 %s48, 1
        %s314 = sand.u32 %s48, 1
        %s315 = smul.addr %s314, 8
        %s316 = scalar_lea.vmem [#allocation3], %s315
        // Predicated region
        $region148: #{mri_3d_vit_forward.13} parent=142 // pred_check
          %p317 = pneg %p61
        $region149: #{mri_3d_vit_forward.13} parent=142 // pred_check_branch
          %319 = sbr.rel (%p317) target = $region151
        $region150: #{mri_3d_vit_forward.13} parent=142 // pred_region
          _
        $region151: #{mri_3d_vit_forward.13} parent=142 // pred_fallthru
          _
        %s320 = sand.u32 %s74, 1
        %s321 = sand.u32 %s74, 1
        %s322 = smul.addr %s321, 8
        %s323 = scalar_lea.vmem [#allocation4], %s322
        // Predicated region
        $region152: #{mri_3d_vit_forward.13} parent=142 // pred_check
          %p324 = pneg %p87
        $region153: #{mri_3d_vit_forward.13} parent=142 // pred_check_branch
          %326 = sbr.rel (%p324) target = $region155
        $region154: #{mri_3d_vit_forward.13} parent=142 // pred_region
          _
        $region155: #{mri_3d_vit_forward.13} parent=142 // pred_fallthru
          _
        %s327 = sand.u32 %s22, 1
        %s328 = sand.u32 %s22, 1
        %s329 = smul.addr %s328, 8
        %s330 = scalar_lea.vmem [#allocation2], %s329
        %p331 = pneg %p35
        %p332 = pneg %p32
        %s333 = sand.u32 %s48, 1
        %s334 = sand.u32 %s48, 1
        %s335 = smul.addr %s334, 8
        %s336 = scalar_lea.vmem [#allocation3], %s335
        %p337 = pneg %p61
        %p338 = pneg %p58
        %s339 = sand.u32 %s74, 1
        %s340 = sand.u32 %s74, 1
        %s341 = smul.addr %s340, 8
        %s342 = scalar_lea.vmem [#allocation4], %s341
        %p343 = pneg %p87
        %p344 = pneg %p84
        %p345 = pneg %p113
        %p346 = pneg %p110
        %p347 = scmp.lt.s32.totalorder %s14, 1
        %s348 = scalar_select %p347, %s14, 1
        %s349 = smul.addr %s348, 2
        %s350 = smul.addr %s349, 4
        %s351 = scalar_lea.vmem %s3, %s350
        %p352 = scmp.lt.s32.totalorder %s14, 1
        %s353 = scalar_select %p352, %s14, 1
        %s354 = smul.addr %s353, 2
        %s355 = smul.addr %s354, 4
        %s356 = scalar_lea.vmem %s3, %s355
        %v358 = vld [vmem:[%s309] sm:$0xf]
        %v359 = vld [vmem:[%s309 + $0x4] sm:$0x1]
        %v360 = vld [vmem:[%s316] sm:$0xf]
        %v361 = vld [vmem:[%s316 + $0x4] sm:$0x1]
        %v362 = vld [vmem:[%s323] sm:$0xf]
        %v363 = vld [vmem:[%s323 + $0x4] sm:$0x1]
        %v366 = vunpack.c.l.b16 %v358
        %v367 = vunpack.c.l.b16 %v359
        %v368 = vpack.c.b16 %v367, %v366
        %v371 = vunpack.c.l.b16 %v360
        %v372 = vunpack.c.l.b16 %v361
        %v373 = vpack.c.b16 %v372, %v371
        %vm374 = vcmask 523264
        %v376 = vsel %vm374, %v368, 0
        %v379 = vsel %vm374, %v373, 0
        %381 = vmatprep.subr.bf16.mxu0 0
        %382 = vmatpush1.bf16.xpose.msra.mxu0 0
        %383 = vmatprep.subr.bf16.mxu0 0
        %384 = vmatpush1.bf16.xpose.msra.mxu0 0
        %385 = vmatprep.subr.bf16.mxu0 0
        %386 = vmatpush1.bf16.xpose.msra.mxu0 0
        %387 = vmatprep.subr.bf16.mxu0 0
        %388 = vmatpush1.bf16.xpose.msra.mxu0 0
        %389 = vmatprep.subr.bf16.mxu0 0
        %390 = vmatpush1.bf16.xpose.msra.mxu0 0
        %391 = vmatprep.subr.bf16.mxu0 0
        %392 = vmatpush1.bf16.xpose.msra.mxu0 0
        %393 = vmatprep.subr.bf16.mxu0 0
        %394 = vmatpush1.bf16.xpose.msra.mxu0 0
        %395 = vmatprep.subr.bf16.mxu0 0
        %396 = vmatpush1.bf16.xpose.msra.mxu0 %v379
        %397 = vmatprep.subr.bf16.mxu0 0
        %398 = vmatpush2.bf16.xpose.msra.mxu0 0
        %399 = vmatprep.subr.bf16.mxu0 0
        %400 = vmatpush2.bf16.xpose.msra.mxu0 0
        %401 = vmatprep.subr.bf16.mxu0 0
        %402 = vmatpush2.bf16.xpose.msra.mxu0 0
        %403 = vmatprep.subr.bf16.mxu0 0
        %404 = vmatpush2.bf16.xpose.msra.mxu0 0
        %405 = vmatprep.subr.bf16.mxu0 0
        %406 = vmatpush2.bf16.xpose.msra.mxu0 0
        %407 = vmatprep.subr.bf16.mxu0 0
        %408 = vmatpush2.bf16.xpose.msra.mxu0 0
        %409 = vmatprep.subr.bf16.mxu0 0
        %410 = vmatpush2.bf16.xpose.msra.mxu0 0
        %411 = vmatprep.subr.bf16.mxu0 0
        %412 = vmatpush2.bf16.xpose.msra.mxu0 0
        %413 = vmatprep.mubr.bf16.mxu0 0
        %414 = vmatmul.mubr.bf16.gmra.mxu0 %v376
        %v415 = vpop.f32.mrf.mxu0
        %v416 = vadd.f32 0.0, %v415
        %v417 = vpop.f32.mrf.mxu0
        %v418 = vpop.f32.mrf.mxu0
        %v419 = vadd.f32 0.0, %v418
        %v420 = vpop.f32.mrf.mxu0
        %421 = vdwg.mxu0
        %vm422 = vcmask 72704
        %v423 = vsel %vm422, %v416, -inf
        %424 = vmax.xlane.f32.xlu0 %v423
        %v425 = vpop.xlane.xlu0 %424
        %vm426 = vcmask 65536
        %v427 = vsel %vm426, %v419, -inf
        %428 = vmax.xlane.f32.xlu0 %v427
        %v429 = vpop.xlane.xlu0 %428
        %v430 = vsub.f32 %v416, %v425
        %v431 = vsub.f32 %v419, %v429
        %v432 = vmul.f32 %v430, 1.442695
        %v433 = vpow.pop %v432
        %v434 = vmul.f32 %v431, 1.442695
        %v435 = vpow.pop %v434
        %v436 = vsel %vm422, %v433, 0.0
        %437 = vadd.xlane.f32.xlu0 %v436
        %v438 = vpop.xlane.xlu0 %437
        %v439 = vsel %vm426, %v435, 0.0
        %440 = vadd.xlane.f32.xlu0 %v439
        %v441 = vpop.xlane.xlu0 %440
        %v442 = vrcp.pop %v438
        %v443 = vmul.f32 %v433, %v442
        %v444 = vrcp.pop %v441
        %v445 = vmul.f32 %v435, %v444
        %v446 = vpack.c.bf16 %v445, %v443
        %v449 = vunpack.c.l.b16 %v362
        %v450 = vunpack.c.l.b16 %v363
        %v451 = vpack.c.b16 %v450, %v449
        %v453 = vsel %vm422, %v446, 0
        %vm455 = vcmask 1043456
        %vm456 = vcmask 1044480
        %v457 = vsel %vm455, 4294967295, 65535
        %v458 = vsel %vm456, %v457, 0
        %v460 = vand.u32 %v451, %v458
        %462 = vmatprep.subr.bf16.mxu0 0
        %463 = vmatpush1.bf16.msra.mxu0 0
        %464 = vmatprep.subr.bf16.mxu0 0
        %465 = vmatpush1.bf16.msra.mxu0 0
        %466 = vmatprep.subr.bf16.mxu0 0
        %467 = vmatpush1.bf16.msra.mxu0 0
        %468 = vmatprep.subr.bf16.mxu0 0
        %469 = vmatpush1.bf16.msra.mxu0 0
        %470 = vmatprep.subr.bf16.mxu0 0
        %471 = vmatpush1.bf16.msra.mxu0 0
        %472 = vmatprep.subr.bf16.mxu0 0
        %473 = vmatpush1.bf16.msra.mxu0 0
        %474 = vmatprep.subr.bf16.mxu0 0
        %475 = vmatpush1.bf16.msra.mxu0 0
        %476 = vmatprep.subr.bf16.mxu0 0
        %477 = vmatpush1.bf16.msra.mxu0 %v460
        %478 = vmatprep.subr.bf16.mxu0 0
        %479 = vmatpush2.bf16.msra.mxu0 0
        %480 = vmatprep.subr.bf16.mxu0 0
        %481 = vmatpush2.bf16.msra.mxu0 0
        %482 = vmatprep.subr.bf16.mxu0 0
        %483 = vmatpush2.bf16.msra.mxu0 0
        %484 = vmatprep.subr.bf16.mxu0 0
        %485 = vmatpush2.bf16.msra.mxu0 0
        %486 = vmatprep.subr.bf16.mxu0 0
        %487 = vmatpush2.bf16.msra.mxu0 0
        %488 = vmatprep.subr.bf16.mxu0 0
        %489 = vmatpush2.bf16.msra.mxu0 0
        %490 = vmatprep.subr.bf16.mxu0 0
        %491 = vmatpush2.bf16.msra.mxu0 0
        %492 = vmatprep.subr.bf16.mxu0 0
        %493 = vmatpush2.bf16.msra.mxu0 0
        %494 = vmatprep.mubr.bf16.mxu0 0
        %495 = vmatmul.mubr.bf16.gmra.mxu0 %v453
        %v496 = vpop.f32.mrf.mxu0
        %v497 = vadd.f32 0.0, %v496
        %v498 = vpop.f32.mrf.mxu0
        %v499 = vpop.f32.mrf.mxu0
        %v500 = vadd.f32 0.0, %v499
        %v501 = vpop.f32.mrf.mxu0
        %502 = vdwg.mxu0
        %v503 = vpack.c.bf16 %v500, %v497
        %v505 = vunpack.c.l.b16 %v503
        %v506 = vunpack.c.h.b16 %v503
        %v507 = vpack.c.b16 %v505, %v505
        %v508 = vpack.c.b16 %v506, %v506
        %vm511 = vcmask 519168
        %512 = vst.msk [vmem:[%s356] sm:$0xf] %vm511, %v507
        %vm513 = vcmask 516096
        %vm514 = vsmask.f32 256
        %vm515 = vmand %vm513, %vm514
        %v516 = vld [vmem:[%s356 + $0x4] sm:$0x1]
        %v517 = vsel %vm515, %v508, %v516
        %518 = vst [vmem:[%s356 + $0x4] sm:$0x1] %v517
        %519 = vrot.lane.b32.xlu0 %v368, 64
        %v520 = vpop.permute.xlu0 %519
        %521 = vrot.lane.b32.xlu0 %v373, 64
        %v522 = vpop.permute.xlu0 %521
        %v524 = vsel %vm374, %v520, 0
        %v527 = vsel %vm374, %v522, 0
        %529 = vmatprep.subr.bf16.mxu0 0
        %530 = vmatpush1.bf16.xpose.msra.mxu0 0
        %531 = vmatprep.subr.bf16.mxu0 0
        %532 = vmatpush1.bf16.xpose.msra.mxu0 0
        %533 = vmatprep.subr.bf16.mxu0 0
        %534 = vmatpush1.bf16.xpose.msra.mxu0 0
        %535 = vmatprep.subr.bf16.mxu0 0
        %536 = vmatpush1.bf16.xpose.msra.mxu0 0
        %537 = vmatprep.subr.bf16.mxu0 0
        %538 = vmatpush1.bf16.xpose.msra.mxu0 0
        %539 = vmatprep.subr.bf16.mxu0 0
        %540 = vmatpush1.bf16.xpose.msra.mxu0 0
        %541 = vmatprep.subr.bf16.mxu0 0
        %542 = vmatpush1.bf16.xpose.msra.mxu0 0
        %543 = vmatprep.subr.bf16.mxu0 0
        %544 = vmatpush1.bf16.xpose.msra.mxu0 %v527
        %545 = vmatprep.subr.bf16.mxu0 0
        %546 = vmatpush2.bf16.xpose.msra.mxu0 0
        %547 = vmatprep.subr.bf16.mxu0 0
        %548 = vmatpush2.bf16.xpose.msra.mxu0 0
        %549 = vmatprep.subr.bf16.mxu0 0
        %550 = vmatpush2.bf16.xpose.msra.mxu0 0
        %551 = vmatprep.subr.bf16.mxu0 0
        %552 = vmatpush2.bf16.xpose.msra.mxu0 0
        %553 = vmatprep.subr.bf16.mxu0 0
        %554 = vmatpush2.bf16.xpose.msra.mxu0 0
        %555 = vmatprep.subr.bf16.mxu0 0
        %556 = vmatpush2.bf16.xpose.msra.mxu0 0
        %557 = vmatprep.subr.bf16.mxu0 0
        %558 = vmatpush2.bf16.xpose.msra.mxu0 0
        %559 = vmatprep.subr.bf16.mxu0 0
        %560 = vmatpush2.bf16.xpose.msra.mxu0 0
        %561 = vmatprep.mubr.bf16.mxu0 0
        %562 = vmatmul.mubr.bf16.gmra.mxu0 %v524
        %v563 = vpop.f32.mrf.mxu0
        %v564 = vadd.f32 0.0, %v563
        %v565 = vpop.f32.mrf.mxu0
        %v566 = vpop.f32.mrf.mxu0
        %v567 = vadd.f32 0.0, %v566
        %v568 = vpop.f32.mrf.mxu0
        %569 = vdwg.mxu0
        %v570 = vsel %vm422, %v564, -inf
        %571 = vmax.xlane.f32.xlu0 %v570
        %v572 = vpop.xlane.xlu0 %571
        %v573 = vsel %vm426, %v567, -inf
        %574 = vmax.xlane.f32.xlu0 %v573
        %v575 = vpop.xlane.xlu0 %574
        %v576 = vsub.f32 %v564, %v572
        %v577 = vsub.f32 %v567, %v575
        %v578 = vmul.f32 %v576, 1.442695
        %v579 = vpow.pop %v578
        %v580 = vmul.f32 %v577, 1.442695
        %v581 = vpow.pop %v580
        %v582 = vsel %vm422, %v579, 0.0
        %583 = vadd.xlane.f32.xlu0 %v582
        %v584 = vpop.xlane.xlu0 %583
        %v585 = vsel %vm426, %v581, 0.0
        %586 = vadd.xlane.f32.xlu0 %v585
        %v587 = vpop.xlane.xlu0 %586
        %v588 = vrcp.pop %v584
        %v589 = vmul.f32 %v579, %v588
        %v590 = vrcp.pop %v587
        %v591 = vmul.f32 %v581, %v590
        %v592 = vpack.c.bf16 %v591, %v589
        %593 = vrot.lane.b32.xlu0 %v451, 64
        %v594 = vpop.permute.xlu0 %593
        %v596 = vsel %vm422, %v592, 0
        %v599 = vand.u32 %v594, %v458
        %601 = vmatprep.subr.bf16.mxu0 0
        %602 = vmatpush1.bf16.msra.mxu0 0
        %603 = vmatprep.subr.bf16.mxu0 0
        %604 = vmatpush1.bf16.msra.mxu0 0
        %605 = vmatprep.subr.bf16.mxu0 0
        %606 = vmatpush1.bf16.msra.mxu0 0
        %607 = vmatprep.subr.bf16.mxu0 0
        %608 = vmatpush1.bf16.msra.mxu0 0
        %609 = vmatprep.subr.bf16.mxu0 0
        %610 = vmatpush1.bf16.msra.mxu0 0
        %611 = vmatprep.subr.bf16.mxu0 0
        %612 = vmatpush1.bf16.msra.mxu0 0
        %613 = vmatprep.subr.bf16.mxu0 0
        %614 = vmatpush1.bf16.msra.mxu0 0
        %615 = vmatprep.subr.bf16.mxu0 0
        %616 = vmatpush1.bf16.msra.mxu0 %v599
        %617 = vmatprep.subr.bf16.mxu0 0
        %618 = vmatpush2.bf16.msra.mxu0 0
        %619 = vmatprep.subr.bf16.mxu0 0
        %620 = vmatpush2.bf16.msra.mxu0 0
        %621 = vmatprep.subr.bf16.mxu0 0
        %622 = vmatpush2.bf16.msra.mxu0 0
        %623 = vmatprep.subr.bf16.mxu0 0
        %624 = vmatpush2.bf16.msra.mxu0 0
        %625 = vmatprep.subr.bf16.mxu0 0
        %626 = vmatpush2.bf16.msra.mxu0 0
        %627 = vmatprep.subr.bf16.mxu0 0
        %628 = vmatpush2.bf16.msra.mxu0 0
        %629 = vmatprep.subr.bf16.mxu0 0
        %630 = vmatpush2.bf16.msra.mxu0 0
        %631 = vmatprep.subr.bf16.mxu0 0
        %632 = vmatpush2.bf16.msra.mxu0 0
        %633 = vmatprep.mubr.bf16.mxu0 0
        %634 = vmatmul.mubr.bf16.gmra.mxu0 %v596
        %v635 = vpop.f32.mrf.mxu0
        %v636 = vadd.f32 0.0, %v635
        %v637 = vpop.f32.mrf.mxu0
        %v638 = vpop.f32.mrf.mxu0
        %v639 = vadd.f32 0.0, %v638
        %v640 = vpop.f32.mrf.mxu0
        %641 = vdwg.mxu0
        %v642 = vpack.c.bf16 %v639, %v636
        %v644 = vunpack.c.l.b16 %v642
        %v645 = vunpack.c.h.b16 %v642
        %v646 = vpack.c.b16 %v644, %v644
        %v647 = vpack.c.b16 %v645, %v645
        %648 = vrot.lane.b32.xlu0 %v646, 64
        %v649 = vpop.permute.xlu0 %648
        %650 = vrot.lane.b32.xlu0 %v647, 64
        %v651 = vpop.permute.xlu0 %650
        %vm654 = vcmask 1043968
        %655 = vst.msk [vmem:[%s356] sm:$0xf] %vm654, %v649
        %vm656 = vcmask 1040896
        %vm657 = vmand %vm656, %vm514
        %v658 = vld [vmem:[%s356 + $0x4] sm:$0x1]
        %v659 = vsel %vm657, %v651, %v658
        %660 = vst [vmem:[%s356 + $0x4] sm:$0x1] %v659
        %p661 = scmp.lt.s32.totalorder %s14, 1
        %s662 = scalar_select %p661, %s14, 1
        %s663 = smul.addr %s662, 2
        %s664 = smul.addr %s663, 4
        %s665 = scalar_lea.vmem %s3, %s664
        // Predicated region
        $region156: #{mri_3d_vit_forward.13} parent=142 // pred_check
          %p666 = pneg %p110
        $region157: #{mri_3d_vit_forward.13} parent=142 // pred_check_branch
          %668 = sbr.rel (%p666) target = $region159
        $region158: #{mri_3d_vit_forward.13} parent=142 // pred_region
          _
        $region159: #{mri_3d_vit_forward.13} parent=142 // pred_fallthru
          _
      $region143: #{mri_3d_vit_forward.13} parent=5 // pred_fallthru
        _
      %p669 = scmp.le.s32.totalorder 2, %s9
      // Predicated region
      $region160: #{mri_3d_vit_forward.13} parent=5 // pred_check
        %p670 = pneg %p669
      $region161: #{mri_3d_vit_forward.13} parent=5 // pred_check_branch
        %672 = sbr.rel (%p670) target = $region163
      $region162: #{mri_3d_vit_forward.13} parent=5 // pred_region
        %s673 = ssub.s32 %s9, 2
        // Predicated region
        $region164: #{mri_3d_vit_forward.13} parent=162 // pred_check
          %p674 = pneg %p116
        $region165: #{mri_3d_vit_forward.13} parent=162 // pred_check_branch
          %676 = sbr.rel (%p674) target = $region167
        $region166: #{mri_3d_vit_forward.13} parent=162 // pred_region
          %p677 = scmp.lt.s32.totalorder %s15, 1
          %s678 = scalar_select %p677, %s15, 1
          %s679 = smul.addr %s678, 2
          %s680 = smul.addr %s679, 4
          %s681 = scalar_lea.vmem %s3, %s680
        $region167: #{mri_3d_vit_forward.13} parent=162 // pred_fallthru
          _
      $region163: #{mri_3d_vit_forward.13} parent=5 // pred_fallthru
        _
    $region6: #{mri_3d_vit_forward.13} parent=1 // loop_footer
      %s13 = sadd.s32 1, %s9
    $region7: #{mri_3d_vit_forward.13} parent=1 // loop_footer_branch
      %8 = sbr.rel target = $region3
    $region8: #{mri_3d_vit_forward.13} parent=1 // loop_exit
      _

// kernel: mri_3d_vit_forward.14
$region0: #{mri_3d_vit_forward.14}
  #allocation0 [shape = 'u32[]', space=smem, size = 0x4, offset = 0x4, fixed_abs, tag = 'smem constant byte address 0x4 - core index']
  #allocation1 [shape = 'u32[144,128]{1,0:T(1,128)}', space=vmem, size = 0x12000, scoped, tag = 'internal scratch']
  #allocation2 [shape = 'f32[24,128]{1,0:T(8,128)}', space=vmem, size = 0x3000, scoped, tag = 'scratch operand']
  %s0 = inlined_call_operand.vmem [shape: bf16[24,128], index: 0, kind: input, shape index: {}]
  %s1 = inlined_call_operand.vmem [shape: bf16[128,128], index: 1, kind: input, shape index: {}]
  %s2 = inlined_call_operand.vmem [shape: f32[1,128], index: 2, kind: input, shape index: {}]
  %s3 = inlined_call_operand.vmem [shape: bf16[24,128], index: 3, kind: input, shape index: {}]
  %s4 = inlined_call_operand.vmem [shape: f32[1,128], index: 4, kind: input, shape index: {}]
  %s5 = inlined_call_operand.vmem [shape: f32[1,128], index: 5, kind: input, shape index: {}]
  %s6 = inlined_call_operand.vmem [shape: bf16[24,128], index: 6, kind: output, shape index: {}]
  %s7 = sld [smem:[#allocation0]]
  $region42: #{mri_3d_vit_forward.14} parent=0
    _
  %s9 = ssub.s32 1, %s7
  %s10 = scalar_select 0, %s9, %s7
  // Predicated region
  $region2: #{mri_3d_vit_forward.14} parent=0 // pred_check
    _
  $region3: #{mri_3d_vit_forward.14} parent=0 // pred_check_branch
    %12 = sbr.rel (0) target = $region5
  $region4: #{mri_3d_vit_forward.14} parent=0 // pred_region
    _
  $region5: #{mri_3d_vit_forward.14} parent=0 // pred_fallthru
    _
  // Predicated region
  $region6: #{mri_3d_vit_forward.14} parent=0 // pred_check
    _
  $region7: #{mri_3d_vit_forward.14} parent=0 // pred_check_branch
    %14 = sbr.rel (0) target = $region9
  $region8: #{mri_3d_vit_forward.14} parent=0 // pred_region
    _
  $region9: #{mri_3d_vit_forward.14} parent=0 // pred_fallthru
    _
  // Predicated region
  $region10: #{mri_3d_vit_forward.14} parent=0 // pred_check
    _
  $region11: #{mri_3d_vit_forward.14} parent=0 // pred_check_branch
    %16 = sbr.rel (0) target = $region13
  $region12: #{mri_3d_vit_forward.14} parent=0 // pred_region
    _
  $region13: #{mri_3d_vit_forward.14} parent=0 // pred_fallthru
    _
  // Predicated region
  $region14: #{mri_3d_vit_forward.14} parent=0 // pred_check
    _
  $region15: #{mri_3d_vit_forward.14} parent=0 // pred_check_branch
    %18 = sbr.rel (0) target = $region17
  $region16: #{mri_3d_vit_forward.14} parent=0 // pred_region
    _
  $region17: #{mri_3d_vit_forward.14} parent=0 // pred_fallthru
    _
  // Predicated region
  $region18: #{mri_3d_vit_forward.14} parent=0 // pred_check
    _
  $region19: #{mri_3d_vit_forward.14} parent=0 // pred_check_branch
    %20 = sbr.rel (0) target = $region21
  $region20: #{mri_3d_vit_forward.14} parent=0 // pred_region
    _
  $region21: #{mri_3d_vit_forward.14} parent=0 // pred_fallthru
    _
  // Predicated region
  $region22: #{mri_3d_vit_forward.14} parent=0 // pred_check
    _
  $region23: #{mri_3d_vit_forward.14} parent=0 // pred_check_branch
    %22 = sbr.rel (0) target = $region25
  $region24: #{mri_3d_vit_forward.14} parent=0 // pred_region
    _
  $region25: #{mri_3d_vit_forward.14} parent=0 // pred_fallthru
    _
  %p24 = scmp.eq.s32.totalorder 0, 0
  // Predicated region
  $region26: #{mri_3d_vit_forward.14} parent=0 // pred_check
    %p25 = pneg %p24
  $region27: #{mri_3d_vit_forward.14} parent=0 // pred_check_branch
    %27 = sbr.rel (%p25) target = $region29
  $region28: #{mri_3d_vit_forward.14} parent=0 // pred_region
    %28 = vst [vmem:[#allocation2] sm:$0xff] 0.0
    %29 = vst [vmem:[#allocation2 + $0x8] sm:$0xff] 0.0
    %30 = vst [vmem:[#allocation2 + $0x10] sm:$0xff] 0.0
  $region29: #{mri_3d_vit_forward.14} parent=0 // pred_fallthru
    _
  %v31 = vld [vmem:[#allocation2] sm:$0xff]
  %v32 = vld [vmem:[#allocation2 + $0x8] sm:$0xff]
  %v33 = vld [vmem:[#allocation2 + $0x10] sm:$0xff]
  %v34 = vld [vmem:[%s0] sm:$0xf]
  %v35 = vld [vmem:[%s0 + $0x4] sm:$0xf]
  %v36 = vld [vmem:[%s0 + $0x8] sm:$0xf]
  %v37 = vld [vmem:[%s1] sm:$0xf]
  %v38 = vld [vmem:[%s1 + $0x4] sm:$0xf]
  %v39 = vld [vmem:[%s1 + $0x8] sm:$0xf]
  %v40 = vld [vmem:[%s1 + $0xc] sm:$0xf]
  %v41 = vld [vmem:[%s1 + $0x10] sm:$0xf]
  %v42 = vld [vmem:[%s1 + $0x14] sm:$0xf]
  %v43 = vld [vmem:[%s1 + $0x18] sm:$0xf]
  %v44 = vld [vmem:[%s1 + $0x1c] sm:$0xf]
  %v45 = vld [vmem:[%s1 + $0x20] sm:$0xf]
  %v46 = vld [vmem:[%s1 + $0x24] sm:$0xf]
  %v47 = vld [vmem:[%s1 + $0x28] sm:$0xf]
  %v48 = vld [vmem:[%s1 + $0x2c] sm:$0xf]
  %v49 = vld [vmem:[%s1 + $0x30] sm:$0xf]
  %v50 = vld [vmem:[%s1 + $0x34] sm:$0xf]
  %v51 = vld [vmem:[%s1 + $0x38] sm:$0xf]
  %v52 = vld [vmem:[%s1 + $0x3c] sm:$0xf]
  %v56 = vunpack.c.l.b16 %v34
  %v57 = vunpack.c.l.b16 %v35
  %v58 = vunpack.c.l.b16 %v36
  %v59 = vpack.c.b16 %v57, %v56
  %v60 = vpack.c.b16 %v58, %v58
  %v79 = vunpack.c.l.b16 %v37
  %v80 = vunpack.c.l.b16 %v38
  %v81 = vunpack.c.l.b16 %v39
  %v82 = vunpack.c.l.b16 %v40
  %v83 = vunpack.c.l.b16 %v41
  %v84 = vunpack.c.l.b16 %v42
  %v85 = vunpack.c.l.b16 %v43
  %v86 = vunpack.c.l.b16 %v44
  %v87 = vunpack.c.l.b16 %v45
  %v88 = vunpack.c.l.b16 %v46
  %v89 = vunpack.c.l.b16 %v47
  %v90 = vunpack.c.l.b16 %v48
  %v91 = vunpack.c.l.b16 %v49
  %v92 = vunpack.c.l.b16 %v50
  %v93 = vunpack.c.l.b16 %v51
  %v94 = vunpack.c.l.b16 %v52
  %v95 = vpack.c.b16 %v80, %v79
  %v96 = vpack.c.b16 %v82, %v81
  %v97 = vpack.c.b16 %v84, %v83
  %v98 = vpack.c.b16 %v86, %v85
  %v99 = vpack.c.b16 %v88, %v87
  %v100 = vpack.c.b16 %v90, %v89
  %v101 = vpack.c.b16 %v92, %v91
  %v102 = vpack.c.b16 %v94, %v93
  %111 = vmatprep.subr.bf16.mxu0 0
  %112 = vmatpush1.bf16.msra.mxu0 %v102
  %113 = vmatprep.subr.bf16.mxu0 0
  %114 = vmatpush1.bf16.msra.mxu0 %v101
  %115 = vmatprep.subr.bf16.mxu0 0
  %116 = vmatpush1.bf16.msra.mxu0 %v100
  %117 = vmatprep.subr.bf16.mxu0 0
  %118 = vmatpush1.bf16.msra.mxu0 %v99
  %119 = vmatprep.subr.bf16.mxu0 0
  %120 = vmatpush1.bf16.msra.mxu0 %v98
  %121 = vmatprep.subr.bf16.mxu0 0
  %122 = vmatpush1.bf16.msra.mxu0 %v97
  %123 = vmatprep.subr.bf16.mxu0 0
  %124 = vmatpush1.bf16.msra.mxu0 %v96
  %125 = vmatprep.subr.bf16.mxu0 0
  %126 = vmatpush1.bf16.msra.mxu0 %v95
  %127 = vmatprep.subr.bf16.mxu0 0
  %128 = vmatpush2.bf16.msra.mxu0 0
  %129 = vmatprep.subr.bf16.mxu0 0
  %130 = vmatpush2.bf16.msra.mxu0 0
  %131 = vmatprep.subr.bf16.mxu0 0
  %132 = vmatpush2.bf16.msra.mxu0 0
  %133 = vmatprep.subr.bf16.mxu0 0
  %134 = vmatpush2.bf16.msra.mxu0 0
  %135 = vmatprep.subr.bf16.mxu0 0
  %136 = vmatpush2.bf16.msra.mxu0 0
  %137 = vmatprep.subr.bf16.mxu0 0
  %138 = vmatpush2.bf16.msra.mxu0 0
  %139 = vmatprep.subr.bf16.mxu0 0
  %140 = vmatpush2.bf16.msra.mxu0 0
  %141 = vmatprep.subr.bf16.mxu0 0
  %142 = vmatpush2.bf16.msra.mxu0 0
  %143 = vmatprep.mubr.bf16.mxu0 0
  %144 = vmatmul.mubr.bf16.gmra.mxu0 %v59
  %v145 = vpop.f32.mrf.mxu0
  %v146 = vadd.f32 0.0, %v145
  %v147 = vpop.f32.mrf.mxu0
  %v148 = vpop.f32.mrf.mxu0
  %v149 = vadd.f32 0.0, %v148
  %v150 = vpop.f32.mrf.mxu0
  %151 = vmatprep.mubr.bf16.mxu0 0
  %152 = vmatmul.mubr.bf16.gmra.mxu0 %v60
  %v153 = vpop.f32.mrf.mxu0
  %v154 = vadd.f32 0.0, %v153
  %v155 = vpop.f32.mrf.mxu0
  %v156 = vpop.f32.mrf.mxu0
  %v157 = vpop.f32.mrf.mxu0
  %158 = vdwg.mxu0
  %v159 = vadd.f32 %v31, %v146
  %v160 = vadd.f32 %v32, %v149
  %v161 = vadd.f32 %v33, %v154
  %162 = vst [vmem:[#allocation2] sm:$0xff] %v159
  %163 = vst [vmem:[#allocation2 + $0x8] sm:$0xff] %v160
  %164 = vst [vmem:[#allocation2 + $0x10] sm:$0xff] %v161
  // Predicated region
  $region30: #{mri_3d_vit_forward.14} parent=0 // pred_check
    %p165 = pneg %p24
  $region31: #{mri_3d_vit_forward.14} parent=0 // pred_check_branch
    %167 = sbr.rel (%p165) target = $region33
  $region32: #{mri_3d_vit_forward.14} parent=0 // pred_region
    %v168 = vld [vmem:[#allocation2] sm:$0xff]
    %v169 = vld [vmem:[#allocation2 + $0x8] sm:$0xff]
    %v170 = vld [vmem:[#allocation2 + $0x10] sm:$0xff]
    %v171 = vld [vmem:[%s2] sm:$0x1]
    %v173 = vlaneseq
    %v174 = vshrl.u32 %v173, 7
    %v175 = vsub.s32 0, %v174
    %v176 = vrot.slane %v171, %v175
    %v178 = vadd.f32 %v168, %v176
    %v179 = vadd.f32 %v169, %v176
    %v180 = vadd.f32 %v170, %v176
    %v181 = vld [vmem:[%s3] sm:$0xf]
    %v182 = vld [vmem:[%s3 + $0x4] sm:$0xf]
    %v183 = vld [vmem:[%s3 + $0x8] sm:$0xf]
    %v184 = vunpack.c.l.bf16 %v181
    %v185 = vunpack.c.l.bf16 %v182
    %v186 = vunpack.c.l.bf16 %v183
    %v187 = vadd.f32 %v178, %v184
    %v188 = vadd.f32 %v179, %v185
    %v189 = vadd.f32 %v180, %v186
    %190 = vadd.xlane.f32.xlu0 %v187
    %v191 = vpop.xlane.xlu0 %190
    %192 = vadd.xlane.f32.xlu0 %v188
    %v193 = vpop.xlane.xlu0 %192
    %194 = vadd.xlane.f32.xlu0 %v189
    %v195 = vpop.xlane.xlu0 %194
    %v196 = vrcp.pop 128.0
    %v197 = vmul.f32 %v191, %v196
    %v198 = vmul.f32 %v193, %v196
    %v199 = vmul.f32 %v195, %v196
    %v200 = vsub.f32 %v187, %v197
    %v201 = vsub.f32 %v188, %v198
    %v202 = vsub.f32 %v189, %v199
    %v203 = vmul.f32 %v200, %v200
    %v204 = vmul.f32 %v201, %v201
    %v205 = vmul.f32 %v202, %v202
    %206 = vadd.xlane.f32.xlu0 %v203
    %v207 = vpop.xlane.xlu0 %206
    %208 = vadd.xlane.f32.xlu0 %v204
    %v209 = vpop.xlane.xlu0 %208
    %210 = vadd.xlane.f32.xlu0 %v205
    %v211 = vpop.xlane.xlu0 %210
    %v212 = vmul.f32 %v207, %v196
    %v213 = vmul.f32 %v209, %v196
    %v214 = vmul.f32 %v211, %v196
    %v215 = vadd.f32 %v212, 1e-05
    %v216 = vadd.f32 %v213, 1e-05
    %v217 = vadd.f32 %v214, 1e-05
    %v218 = vrsqrt.pop %v215
    %v219 = vrsqrt.pop %v216
    %v220 = vrsqrt.pop %v217
    %v221 = vmul.f32 %v200, %v218
    %v222 = vmul.f32 %v201, %v219
    %v223 = vmul.f32 %v202, %v220
    %v224 = vld [vmem:[%s4] sm:$0x1]
    %v226 = vlaneseq
    %v227 = vshrl.u32 %v226, 7
    %v228 = vsub.s32 0, %v227
    %v229 = vrot.slane %v224, %v228
    %v231 = vmul.f32 %v221, %v229
    %v232 = vmul.f32 %v222, %v229
    %v233 = vmul.f32 %v223, %v229
    %v234 = vld [vmem:[%s5] sm:$0x1]
    %v236 = vlaneseq
    %v237 = vshrl.u32 %v236, 7
    %v238 = vsub.s32 0, %v237
    %v239 = vrot.slane %v234, %v238
    %v241 = vadd.f32 %v231, %v239
    %v242 = vadd.f32 %v232, %v239
    %v243 = vadd.f32 %v233, %v239
    %v244 = vpack.c.bf16 %v242, %v241
    %v245 = vpack.c.bf16 %v243, %v243
    %v248 = vunpack.c.l.b16 %v244
    %v249 = vunpack.c.h.b16 %v244
    %v250 = vunpack.c.l.b16 %v245
    %v251 = vpack.c.b16 %v248, %v248
    %v252 = vpack.c.b16 %v249, %v249
    %v253 = vpack.c.b16 %v250, %v250
    %257 = vst [vmem:[%s6] sm:$0xf] %v251
    %258 = vst [vmem:[%s6 + $0x4] sm:$0xf] %v252
    %259 = vst [vmem:[%s6 + $0x8] sm:$0xf] %v253
  $region33: #{mri_3d_vit_forward.14} parent=0 // pred_fallthru
    _
  // Predicated region
  $region34: #{mri_3d_vit_forward.14} parent=0 // pred_check
    _
  $region35: #{mri_3d_vit_forward.14} parent=0 // pred_check_branch
    %261 = sbr.rel (0) target = $region37
  $region36: #{mri_3d_vit_forward.14} parent=0 // pred_region
    _
  $region37: #{mri_3d_vit_forward.14} parent=0 // pred_fallthru
    _
  // Predicated region
  $region38: #{mri_3d_vit_forward.14} parent=0 // pred_check
    _
  $region39: #{mri_3d_vit_forward.14} parent=0 // pred_check_branch
    %263 = sbr.rel (0) target = $region41
  $region40: #{mri_3d_vit_forward.14} parent=0 // pred_region
    _
  $region41: #{mri_3d_vit_forward.14} parent=0 // pred_fallthru
    _

// kernel: mri_3d_vit_forward.15
$region0: #{mri_3d_vit_forward.15}
  #allocation0 [shape = 'u32[]', space=smem, size = 0x4, offset = 0x4, fixed_abs, tag = 'smem constant byte address 0x4 - core index']
  #allocation1 [shape = 'u32[144,128]{1,0:T(1,128)}', space=vmem, size = 0x12000, scoped, tag = 'internal scratch']
  #allocation2 [shape = 'f32[24,256]{1,0:T(8,128)}', space=vmem, size = 0x6000, scoped, tag = 'scratch operand']
  %s0 = inlined_call_operand.vmem [shape: bf16[24,128], index: 0, kind: input, shape index: {}]
  %s1 = inlined_call_operand.vmem [shape: bf16[128,256], index: 1, kind: input, shape index: {}]
  %s2 = inlined_call_operand.vmem [shape: f32[1,256], index: 2, kind: input, shape index: {}]
  %s3 = inlined_call_operand.vmem [shape: bf16[24,256], index: 3, kind: output, shape index: {}]
  %s4 = sld [smem:[#allocation0]]
  $region30: #{mri_3d_vit_forward.15} parent=0
    _
  %s6 = ssub.s32 1, %s4
  %s7 = scalar_select 0, %s6, %s4
  // Predicated region
  $region2: #{mri_3d_vit_forward.15} parent=0 // pred_check
    _
  $region3: #{mri_3d_vit_forward.15} parent=0 // pred_check_branch
    %9 = sbr.rel (0) target = $region5
  $region4: #{mri_3d_vit_forward.15} parent=0 // pred_region
    _
  $region5: #{mri_3d_vit_forward.15} parent=0 // pred_fallthru
    _
  // Predicated region
  $region6: #{mri_3d_vit_forward.15} parent=0 // pred_check
    _
  $region7: #{mri_3d_vit_forward.15} parent=0 // pred_check_branch
    %11 = sbr.rel (0) target = $region9
  $region8: #{mri_3d_vit_forward.15} parent=0 // pred_region
    _
  $region9: #{mri_3d_vit_forward.15} parent=0 // pred_fallthru
    _
  // Predicated region
  $region10: #{mri_3d_vit_forward.15} parent=0 // pred_check
    _
  $region11: #{mri_3d_vit_forward.15} parent=0 // pred_check_branch
    %13 = sbr.rel (0) target = $region13
  $region12: #{mri_3d_vit_forward.15} parent=0 // pred_region
    _
  $region13: #{mri_3d_vit_forward.15} parent=0 // pred_fallthru
    _
  %p15 = scmp.eq.s32.totalorder 0, 0
  // Predicated region
  $region14: #{mri_3d_vit_forward.15} parent=0 // pred_check
    %p16 = pneg %p15
  $region15: #{mri_3d_vit_forward.15} parent=0 // pred_check_branch
    %18 = sbr.rel (%p16) target = $region17
  $region16: #{mri_3d_vit_forward.15} parent=0 // pred_region
    %19 = vst [vmem:[#allocation2] sm:$0xff] 0.0
    %20 = vst [vmem:[#allocation2 + $0x8] sm:$0xff] 0.0
    %21 = vst [vmem:[#allocation2 + $0x10] sm:$0xff] 0.0
    %22 = vst [vmem:[#allocation2 + $0x18] sm:$0xff] 0.0
    %23 = vst [vmem:[#allocation2 + $0x20] sm:$0xff] 0.0
    %24 = vst [vmem:[#allocation2 + $0x28] sm:$0xff] 0.0
  $region17: #{mri_3d_vit_forward.15} parent=0 // pred_fallthru
    _
  %v25 = vld [vmem:[#allocation2] sm:$0xff]
  %v26 = vld [vmem:[#allocation2 + $0x8] sm:$0xff]
  %v27 = vld [vmem:[#allocation2 + $0x10] sm:$0xff]
  %v28 = vld [vmem:[#allocation2 + $0x18] sm:$0xff]
  %v29 = vld [vmem:[#allocation2 + $0x20] sm:$0xff]
  %v30 = vld [vmem:[#allocation2 + $0x28] sm:$0xff]
  %v31 = vld [vmem:[%s0] sm:$0xf]
  %v32 = vld [vmem:[%s0 + $0x4] sm:$0xf]
  %v33 = vld [vmem:[%s0 + $0x8] sm:$0xf]
  %v34 = vld [vmem:[%s1] sm:$0xff]
  %v35 = vld [vmem:[%s1 + $0x8] sm:$0xff]
  %v36 = vld [vmem:[%s1 + $0x10] sm:$0xff]
  %v37 = vld [vmem:[%s1 + $0x18] sm:$0xff]
  %v38 = vld [vmem:[%s1 + $0x20] sm:$0xff]
  %v39 = vld [vmem:[%s1 + $0x28] sm:$0xff]
  %v40 = vld [vmem:[%s1 + $0x30] sm:$0xff]
  %v41 = vld [vmem:[%s1 + $0x38] sm:$0xff]
  %v42 = vld [vmem:[%s1 + $0x40] sm:$0xff]
  %v43 = vld [vmem:[%s1 + $0x48] sm:$0xff]
  %v44 = vld [vmem:[%s1 + $0x50] sm:$0xff]
  %v45 = vld [vmem:[%s1 + $0x58] sm:$0xff]
  %v46 = vld [vmem:[%s1 + $0x60] sm:$0xff]
  %v47 = vld [vmem:[%s1 + $0x68] sm:$0xff]
  %v48 = vld [vmem:[%s1 + $0x70] sm:$0xff]
  %v49 = vld [vmem:[%s1 + $0x78] sm:$0xff]
  %v53 = vunpack.c.l.b16 %v31
  %v54 = vunpack.c.l.b16 %v32
  %v55 = vunpack.c.l.b16 %v33
  %v56 = vpack.c.b16 %v54, %v53
  %v57 = vpack.c.b16 %v55, %v55
  %v76 = vunpack.c.l.b16 %v34
  %v77 = vunpack.c.h.b16 %v34
  %v78 = vunpack.c.l.b16 %v35
  %v79 = vunpack.c.h.b16 %v35
  %v80 = vunpack.c.l.b16 %v36
  %v81 = vunpack.c.h.b16 %v36
  %v82 = vunpack.c.l.b16 %v37
  %v83 = vunpack.c.h.b16 %v37
  %v84 = vunpack.c.l.b16 %v38
  %v85 = vunpack.c.h.b16 %v38
  %v86 = vunpack.c.l.b16 %v39
  %v87 = vunpack.c.h.b16 %v39
  %v88 = vunpack.c.l.b16 %v40
  %v89 = vunpack.c.h.b16 %v40
  %v90 = vunpack.c.l.b16 %v41
  %v91 = vunpack.c.h.b16 %v41
  %v92 = vunpack.c.l.b16 %v42
  %v93 = vunpack.c.h.b16 %v42
  %v94 = vunpack.c.l.b16 %v43
  %v95 = vunpack.c.h.b16 %v43
  %v96 = vunpack.c.l.b16 %v44
  %v97 = vunpack.c.h.b16 %v44
  %v98 = vunpack.c.l.b16 %v45
  %v99 = vunpack.c.h.b16 %v45
  %v100 = vunpack.c.l.b16 %v46
  %v101 = vunpack.c.h.b16 %v46
  %v102 = vunpack.c.l.b16 %v47
  %v103 = vunpack.c.h.b16 %v47
  %v104 = vunpack.c.l.b16 %v48
  %v105 = vunpack.c.h.b16 %v48
  %v106 = vunpack.c.l.b16 %v49
  %v107 = vunpack.c.h.b16 %v49
  %v108 = vpack.c.b16 %v78, %v76
  %v109 = vpack.c.b16 %v79, %v77
  %v110 = vpack.c.b16 %v82, %v80
  %v111 = vpack.c.b16 %v83, %v81
  %v112 = vpack.c.b16 %v86, %v84
  %v113 = vpack.c.b16 %v87, %v85
  %v114 = vpack.c.b16 %v90, %v88
  %v115 = vpack.c.b16 %v91, %v89
  %v116 = vpack.c.b16 %v94, %v92
  %v117 = vpack.c.b16 %v95, %v93
  %v118 = vpack.c.b16 %v98, %v96
  %v119 = vpack.c.b16 %v99, %v97
  %v120 = vpack.c.b16 %v102, %v100
  %v121 = vpack.c.b16 %v103, %v101
  %v122 = vpack.c.b16 %v106, %v104
  %v123 = vpack.c.b16 %v107, %v105
  %140 = vmatprep.subr.bf16.mxu0 %v123
  %141 = vmatpush1.bf16.msra.mxu0 %v122
  %142 = vmatprep.subr.bf16.mxu0 %v121
  %143 = vmatpush1.bf16.msra.mxu0 %v120
  %144 = vmatprep.subr.bf16.mxu0 %v119
  %145 = vmatpush1.bf16.msra.mxu0 %v118
  %146 = vmatprep.subr.bf16.mxu0 %v117
  %147 = vmatpush1.bf16.msra.mxu0 %v116
  %148 = vmatprep.subr.bf16.mxu0 %v115
  %149 = vmatpush1.bf16.msra.mxu0 %v114
  %150 = vmatprep.subr.bf16.mxu0 %v113
  %151 = vmatpush1.bf16.msra.mxu0 %v112
  %152 = vmatprep.subr.bf16.mxu0 %v111
  %153 = vmatpush1.bf16.msra.mxu0 %v110
  %154 = vmatprep.subr.bf16.mxu0 %v109
  %155 = vmatpush1.bf16.msra.mxu0 %v108
  %156 = vmatprep.subr.bf16.mxu0 0
  %157 = vmatpush2.bf16.msra.mxu0 0
  %158 = vmatprep.subr.bf16.mxu0 0
  %159 = vmatpush2.bf16.msra.mxu0 0
  %160 = vmatprep.subr.bf16.mxu0 0
  %161 = vmatpush2.bf16.msra.mxu0 0
  %162 = vmatprep.subr.bf16.mxu0 0
  %163 = vmatpush2.bf16.msra.mxu0 0
  %164 = vmatprep.subr.bf16.mxu0 0
  %165 = vmatpush2.bf16.msra.mxu0 0
  %166 = vmatprep.subr.bf16.mxu0 0
  %167 = vmatpush2.bf16.msra.mxu0 0
  %168 = vmatprep.subr.bf16.mxu0 0
  %169 = vmatpush2.bf16.msra.mxu0 0
  %170 = vmatprep.subr.bf16.mxu0 0
  %171 = vmatpush2.bf16.msra.mxu0 0
  %172 = vmatprep.mubr.bf16.mxu0 0
  %173 = vmatmul.mubr.bf16.gmra.mxu0 %v56
  %v174 = vpop.f32.mrf.mxu0
  %v175 = vadd.f32 0.0, %v174
  %v176 = vpop.f32.mrf.mxu0
  %v177 = vadd.f32 0.0, %v176
  %v178 = vpop.f32.mrf.mxu0
  %v179 = vadd.f32 0.0, %v178
  %v180 = vpop.f32.mrf.mxu0
  %v181 = vadd.f32 0.0, %v180
  %182 = vmatprep.mubr.bf16.mxu0 0
  %183 = vmatmul.mubr.bf16.gmra.mxu0 %v57
  %v184 = vpop.f32.mrf.mxu0
  %v185 = vadd.f32 0.0, %v184
  %v186 = vpop.f32.mrf.mxu0
  %v187 = vadd.f32 0.0, %v186
  %v188 = vpop.f32.mrf.mxu0
  %v189 = vpop.f32.mrf.mxu0
  %190 = vdwg.mxu0
  %v191 = vadd.f32 %v25, %v175
  %v192 = vadd.f32 %v26, %v177
  %v193 = vadd.f32 %v27, %v179
  %v194 = vadd.f32 %v28, %v181
  %v195 = vadd.f32 %v29, %v185
  %v196 = vadd.f32 %v30, %v187
  %197 = vst [vmem:[#allocation2] sm:$0xff] %v191
  %198 = vst [vmem:[#allocation2 + $0x8] sm:$0xff] %v192
  %199 = vst [vmem:[#allocation2 + $0x10] sm:$0xff] %v193
  %200 = vst [vmem:[#allocation2 + $0x18] sm:$0xff] %v194
  %201 = vst [vmem:[#allocation2 + $0x20] sm:$0xff] %v195
  %202 = vst [vmem:[#allocation2 + $0x28] sm:$0xff] %v196
  // Predicated region
  $region18: #{mri_3d_vit_forward.15} parent=0 // pred_check
    %p203 = pneg %p15
  $region19: #{mri_3d_vit_forward.15} parent=0 // pred_check_branch
    %205 = sbr.rel (%p203) target = $region21
  $region20: #{mri_3d_vit_forward.15} parent=0 // pred_region
    %v206 = vld [vmem:[#allocation2] sm:$0xff]
    %v207 = vld [vmem:[#allocation2 + $0x8] sm:$0xff]
    %v208 = vld [vmem:[#allocation2 + $0x10] sm:$0xff]
    %v209 = vld [vmem:[#allocation2 + $0x18] sm:$0xff]
    %v210 = vld [vmem:[#allocation2 + $0x20] sm:$0xff]
    %v211 = vld [vmem:[#allocation2 + $0x28] sm:$0xff]
    %v212 = vld [vmem:[%s2] sm:$0x3]
    %v214 = vlaneseq
    %v215 = vshrl.u32 %v214, 7
    %v216 = vsub.s32 0, %v215
    %v217 = vrot.slane %v212, %v216
    %v218 = vlaneseq
    %v219 = vshrl.u32 %v218, 7
    %v220 = vsub.s32 1, %v219
    %v221 = vrot.slane %v212, %v220
    %v224 = vadd.f32 %v206, %v217
    %v225 = vadd.f32 %v207, %v221
    %v226 = vadd.f32 %v208, %v217
    %v227 = vadd.f32 %v209, %v221
    %v228 = vadd.f32 %v210, %v217
    %v229 = vadd.f32 %v211, %v221
    %v230 = vmax.f32 %v224, 0.0
    %v231 = vmax.f32 %v225, 0.0
    %v232 = vmax.f32 %v226, 0.0
    %v233 = vmax.f32 %v227, 0.0
    %v234 = vmax.f32 %v228, 0.0
    %v235 = vmax.f32 %v229, 0.0
    %v236 = vpack.c.bf16 %v232, %v230
    %v237 = vpack.c.bf16 %v233, %v231
    %v238 = vpack.c.bf16 %v234, %v234
    %v239 = vpack.c.bf16 %v235, %v235
    %v244 = vunpack.c.l.b16 %v236
    %v245 = vunpack.c.l.b16 %v237
    %v246 = vunpack.c.h.b16 %v236
    %v247 = vunpack.c.h.b16 %v237
    %v248 = vunpack.c.l.b16 %v238
    %v249 = vunpack.c.l.b16 %v239
    %v250 = vpack.c.b16 %v245, %v244
    %v251 = vpack.c.b16 %v247, %v246
    %v252 = vpack.c.b16 %v249, %v248
    %256 = vst [vmem:[%s3] sm:$0xff] %v250
    %257 = vst [vmem:[%s3 + $0x8] sm:$0xff] %v251
    %258 = vst [vmem:[%s3 + $0x10] sm:$0xff] %v252
  $region21: #{mri_3d_vit_forward.15} parent=0 // pred_fallthru
    _
  // Predicated region
  $region22: #{mri_3d_vit_forward.15} parent=0 // pred_check
    _
  $region23: #{mri_3d_vit_forward.15} parent=0 // pred_check_branch
    %260 = sbr.rel (0) target = $region25
  $region24: #{mri_3d_vit_forward.15} parent=0 // pred_region
    _
  $region25: #{mri_3d_vit_forward.15} parent=0 // pred_fallthru
    _
  // Predicated region
  $region26: #{mri_3d_vit_forward.15} parent=0 // pred_check
    _
  $region27: #{mri_3d_vit_forward.15} parent=0 // pred_check_branch
    %262 = sbr.rel (0) target = $region29
  $region28: #{mri_3d_vit_forward.15} parent=0 // pred_region
    _
  $region29: #{mri_3d_vit_forward.15} parent=0 // pred_fallthru
    _

// kernel: mri_3d_vit_forward.16
$region0: #{mri_3d_vit_forward.16}
  #allocation0 [shape = 'u32[]', space=smem, size = 0x4, offset = 0x4, fixed_abs, tag = 'smem constant byte address 0x4 - core index']
  #allocation1 [shape = 'u32[144,128]{1,0:T(1,128)}', space=vmem, size = 0x12000, scoped, tag = 'internal scratch']
  #allocation2 [shape = 'f32[24,128]{1,0:T(8,128)}', space=vmem, size = 0x3000, scoped, tag = 'scratch operand']
  %s0 = inlined_call_operand.vmem [shape: bf16[24,256], index: 0, kind: input, shape index: {}]
  %s1 = inlined_call_operand.vmem [shape: bf16[256,128], index: 1, kind: input, shape index: {}]
  %s2 = inlined_call_operand.vmem [shape: f32[1,128], index: 2, kind: input, shape index: {}]
  %s3 = inlined_call_operand.vmem [shape: bf16[24,128], index: 3, kind: input, shape index: {}]
  %s4 = inlined_call_operand.vmem [shape: f32[1,128], index: 4, kind: input, shape index: {}]
  %s5 = inlined_call_operand.vmem [shape: f32[1,128], index: 5, kind: input, shape index: {}]
  %s6 = inlined_call_operand.vmem [shape: bf16[24,128], index: 6, kind: output, shape index: {}]
  %s7 = sld [smem:[#allocation0]]
  $region42: #{mri_3d_vit_forward.16} parent=0
    _
  %s9 = ssub.s32 1, %s7
  %s10 = scalar_select 0, %s9, %s7
  // Predicated region
  $region2: #{mri_3d_vit_forward.16} parent=0 // pred_check
    _
  $region3: #{mri_3d_vit_forward.16} parent=0 // pred_check_branch
    %12 = sbr.rel (0) target = $region5
  $region4: #{mri_3d_vit_forward.16} parent=0 // pred_region
    _
  $region5: #{mri_3d_vit_forward.16} parent=0 // pred_fallthru
    _
  // Predicated region
  $region6: #{mri_3d_vit_forward.16} parent=0 // pred_check
    _
  $region7: #{mri_3d_vit_forward.16} parent=0 // pred_check_branch
    %14 = sbr.rel (0) target = $region9
  $region8: #{mri_3d_vit_forward.16} parent=0 // pred_region
    _
  $region9: #{mri_3d_vit_forward.16} parent=0 // pred_fallthru
    _
  // Predicated region
  $region10: #{mri_3d_vit_forward.16} parent=0 // pred_check
    _
  $region11: #{mri_3d_vit_forward.16} parent=0 // pred_check_branch
    %16 = sbr.rel (0) target = $region13
  $region12: #{mri_3d_vit_forward.16} parent=0 // pred_region
    _
  $region13: #{mri_3d_vit_forward.16} parent=0 // pred_fallthru
    _
  // Predicated region
  $region14: #{mri_3d_vit_forward.16} parent=0 // pred_check
    _
  $region15: #{mri_3d_vit_forward.16} parent=0 // pred_check_branch
    %18 = sbr.rel (0) target = $region17
  $region16: #{mri_3d_vit_forward.16} parent=0 // pred_region
    _
  $region17: #{mri_3d_vit_forward.16} parent=0 // pred_fallthru
    _
  // Predicated region
  $region18: #{mri_3d_vit_forward.16} parent=0 // pred_check
    _
  $region19: #{mri_3d_vit_forward.16} parent=0 // pred_check_branch
    %20 = sbr.rel (0) target = $region21
  $region20: #{mri_3d_vit_forward.16} parent=0 // pred_region
    _
  $region21: #{mri_3d_vit_forward.16} parent=0 // pred_fallthru
    _
  // Predicated region
  $region22: #{mri_3d_vit_forward.16} parent=0 // pred_check
    _
  $region23: #{mri_3d_vit_forward.16} parent=0 // pred_check_branch
    %22 = sbr.rel (0) target = $region25
  $region24: #{mri_3d_vit_forward.16} parent=0 // pred_region
    _
  $region25: #{mri_3d_vit_forward.16} parent=0 // pred_fallthru
    _
  %p24 = scmp.eq.s32.totalorder 0, 0
  // Predicated region
  $region26: #{mri_3d_vit_forward.16} parent=0 // pred_check
    %p25 = pneg %p24
  $region27: #{mri_3d_vit_forward.16} parent=0 // pred_check_branch
    %27 = sbr.rel (%p25) target = $region29
  $region28: #{mri_3d_vit_forward.16} parent=0 // pred_region
    %28 = vst [vmem:[#allocation2] sm:$0xff] 0.0
    %29 = vst [vmem:[#allocation2 + $0x8] sm:$0xff] 0.0
    %30 = vst [vmem:[#allocation2 + $0x10] sm:$0xff] 0.0
  $region29: #{mri_3d_vit_forward.16} parent=0 // pred_fallthru
    _
  %v31 = vld [vmem:[#allocation2] sm:$0xff]
  %v32 = vld [vmem:[#allocation2 + $0x8] sm:$0xff]
  %v33 = vld [vmem:[#allocation2 + $0x10] sm:$0xff]
  %v34 = vld [vmem:[%s0] sm:$0xff]
  %v35 = vld [vmem:[%s0 + $0x8] sm:$0xff]
  %v36 = vld [vmem:[%s0 + $0x10] sm:$0xff]
  %v37 = vld [vmem:[%s1] sm:$0xf]
  %v38 = vld [vmem:[%s1 + $0x4] sm:$0xf]
  %v39 = vld [vmem:[%s1 + $0x8] sm:$0xf]
  %v40 = vld [vmem:[%s1 + $0xc] sm:$0xf]
  %v41 = vld [vmem:[%s1 + $0x10] sm:$0xf]
  %v42 = vld [vmem:[%s1 + $0x14] sm:$0xf]
  %v43 = vld [vmem:[%s1 + $0x18] sm:$0xf]
  %v44 = vld [vmem:[%s1 + $0x1c] sm:$0xf]
  %v45 = vld [vmem:[%s1 + $0x20] sm:$0xf]
  %v46 = vld [vmem:[%s1 + $0x24] sm:$0xf]
  %v47 = vld [vmem:[%s1 + $0x28] sm:$0xf]
  %v48 = vld [vmem:[%s1 + $0x2c] sm:$0xf]
  %v49 = vld [vmem:[%s1 + $0x30] sm:$0xf]
  %v50 = vld [vmem:[%s1 + $0x34] sm:$0xf]
  %v51 = vld [vmem:[%s1 + $0x38] sm:$0xf]
  %v52 = vld [vmem:[%s1 + $0x3c] sm:$0xf]
  %v53 = vld [vmem:[%s1 + $0x40] sm:$0xf]
  %v54 = vld [vmem:[%s1 + $0x44] sm:$0xf]
  %v55 = vld [vmem:[%s1 + $0x48] sm:$0xf]
  %v56 = vld [vmem:[%s1 + $0x4c] sm:$0xf]
  %v57 = vld [vmem:[%s1 + $0x50] sm:$0xf]
  %v58 = vld [vmem:[%s1 + $0x54] sm:$0xf]
  %v59 = vld [vmem:[%s1 + $0x58] sm:$0xf]
  %v60 = vld [vmem:[%s1 + $0x5c] sm:$0xf]
  %v61 = vld [vmem:[%s1 + $0x60] sm:$0xf]
  %v62 = vld [vmem:[%s1 + $0x64] sm:$0xf]
  %v63 = vld [vmem:[%s1 + $0x68] sm:$0xf]
  %v64 = vld [vmem:[%s1 + $0x6c] sm:$0xf]
  %v65 = vld [vmem:[%s1 + $0x70] sm:$0xf]
  %v66 = vld [vmem:[%s1 + $0x74] sm:$0xf]
  %v67 = vld [vmem:[%s1 + $0x78] sm:$0xf]
  %v68 = vld [vmem:[%s1 + $0x7c] sm:$0xf]
  %v72 = vunpack.c.l.b16 %v34
  %v73 = vunpack.c.h.b16 %v34
  %v74 = vunpack.c.l.b16 %v35
  %v75 = vunpack.c.h.b16 %v35
  %v76 = vunpack.c.l.b16 %v36
  %v77 = vunpack.c.h.b16 %v36
  %v78 = vpack.c.b16 %v74, %v72
  %v79 = vpack.c.b16 %v75, %v73
  %v80 = vpack.c.b16 %v76, %v76
  %v81 = vpack.c.b16 %v77, %v77
  %v118 = vunpack.c.l.b16 %v37
  %v119 = vunpack.c.l.b16 %v38
  %v120 = vunpack.c.l.b16 %v39
  %v121 = vunpack.c.l.b16 %v40
  %v122 = vunpack.c.l.b16 %v41
  %v123 = vunpack.c.l.b16 %v42
  %v124 = vunpack.c.l.b16 %v43
  %v125 = vunpack.c.l.b16 %v44
  %v126 = vunpack.c.l.b16 %v45
  %v127 = vunpack.c.l.b16 %v46
  %v128 = vunpack.c.l.b16 %v47
  %v129 = vunpack.c.l.b16 %v48
  %v130 = vunpack.c.l.b16 %v49
  %v131 = vunpack.c.l.b16 %v50
  %v132 = vunpack.c.l.b16 %v51
  %v133 = vunpack.c.l.b16 %v52
  %v134 = vunpack.c.l.b16 %v53
  %v135 = vunpack.c.l.b16 %v54
  %v136 = vunpack.c.l.b16 %v55
  %v137 = vunpack.c.l.b16 %v56
  %v138 = vunpack.c.l.b16 %v57
  %v139 = vunpack.c.l.b16 %v58
  %v140 = vunpack.c.l.b16 %v59
  %v141 = vunpack.c.l.b16 %v60
  %v142 = vunpack.c.l.b16 %v61
  %v143 = vunpack.c.l.b16 %v62
  %v144 = vunpack.c.l.b16 %v63
  %v145 = vunpack.c.l.b16 %v64
  %v146 = vunpack.c.l.b16 %v65
  %v147 = vunpack.c.l.b16 %v66
  %v148 = vunpack.c.l.b16 %v67
  %v149 = vunpack.c.l.b16 %v68
  %v150 = vpack.c.b16 %v119, %v118
  %v151 = vpack.c.b16 %v121, %v120
  %v152 = vpack.c.b16 %v123, %v122
  %v153 = vpack.c.b16 %v125, %v124
  %v154 = vpack.c.b16 %v127, %v126
  %v155 = vpack.c.b16 %v129, %v128
  %v156 = vpack.c.b16 %v131, %v130
  %v157 = vpack.c.b16 %v133, %v132
  %v158 = vpack.c.b16 %v135, %v134
  %v159 = vpack.c.b16 %v137, %v136
  %v160 = vpack.c.b16 %v139, %v138
  %v161 = vpack.c.b16 %v141, %v140
  %v162 = vpack.c.b16 %v143, %v142
  %v163 = vpack.c.b16 %v145, %v144
  %v164 = vpack.c.b16 %v147, %v146
  %v165 = vpack.c.b16 %v149, %v148
  %182 = vmatprep.subr.bf16.mxu0 0
  %183 = vmatpush1.bf16.msra.mxu0 %v157
  %184 = vmatprep.subr.bf16.mxu0 0
  %185 = vmatpush1.bf16.msra.mxu0 %v156
  %186 = vmatprep.subr.bf16.mxu0 0
  %187 = vmatpush1.bf16.msra.mxu0 %v155
  %188 = vmatprep.subr.bf16.mxu0 0
  %189 = vmatpush1.bf16.msra.mxu0 %v154
  %190 = vmatprep.subr.bf16.mxu0 0
  %191 = vmatpush1.bf16.msra.mxu0 %v153
  %192 = vmatprep.subr.bf16.mxu0 0
  %193 = vmatpush1.bf16.msra.mxu0 %v152
  %194 = vmatprep.subr.bf16.mxu0 0
  %195 = vmatpush1.bf16.msra.mxu0 %v151
  %196 = vmatprep.subr.bf16.mxu0 0
  %197 = vmatpush1.bf16.msra.mxu0 %v150
  %198 = vmatprep.subr.bf16.mxu0 0
  %199 = vmatpush2.bf16.msra.mxu0 %v165
  %200 = vmatprep.subr.bf16.mxu0 0
  %201 = vmatpush2.bf16.msra.mxu0 %v164
  %202 = vmatprep.subr.bf16.mxu0 0
  %203 = vmatpush2.bf16.msra.mxu0 %v163
  %204 = vmatprep.subr.bf16.mxu0 0
  %205 = vmatpush2.bf16.msra.mxu0 %v162
  %206 = vmatprep.subr.bf16.mxu0 0
  %207 = vmatpush2.bf16.msra.mxu0 %v161
  %208 = vmatprep.subr.bf16.mxu0 0
  %209 = vmatpush2.bf16.msra.mxu0 %v160
  %210 = vmatprep.subr.bf16.mxu0 0
  %211 = vmatpush2.bf16.msra.mxu0 %v159
  %212 = vmatprep.subr.bf16.mxu0 0
  %213 = vmatpush2.bf16.msra.mxu0 %v158
  %214 = vmatprep.mubr.bf16.mxu0 %v79
  %215 = vmatmul.mubr.bf16.gmra.mxu0 %v78
  %v216 = vpop.f32.mrf.mxu0
  %v217 = vadd.f32 0.0, %v216
  %v218 = vpop.f32.mrf.mxu0
  %v219 = vpop.f32.mrf.mxu0
  %v220 = vadd.f32 0.0, %v219
  %v221 = vpop.f32.mrf.mxu0
  %222 = vmatprep.mubr.bf16.mxu0 %v81
  %223 = vmatmul.mubr.bf16.gmra.mxu0 %v80
  %v224 = vpop.f32.mrf.mxu0
  %v225 = vadd.f32 0.0, %v224
  %v226 = vpop.f32.mrf.mxu0
  %v227 = vpop.f32.mrf.mxu0
  %v228 = vpop.f32.mrf.mxu0
  %229 = vdwg.mxu0
  %v230 = vadd.f32 %v31, %v217
  %v231 = vadd.f32 %v32, %v220
  %v232 = vadd.f32 %v33, %v225
  %233 = vst [vmem:[#allocation2] sm:$0xff] %v230
  %234 = vst [vmem:[#allocation2 + $0x8] sm:$0xff] %v231
  %235 = vst [vmem:[#allocation2 + $0x10] sm:$0xff] %v232
  // Predicated region
  $region30: #{mri_3d_vit_forward.16} parent=0 // pred_check
    %p236 = pneg %p24
  $region31: #{mri_3d_vit_forward.16} parent=0 // pred_check_branch
    %238 = sbr.rel (%p236) target = $region33
  $region32: #{mri_3d_vit_forward.16} parent=0 // pred_region
    %v239 = vld [vmem:[#allocation2] sm:$0xff]
    %v240 = vld [vmem:[#allocation2 + $0x8] sm:$0xff]
    %v241 = vld [vmem:[#allocation2 + $0x10] sm:$0xff]
    %v242 = vld [vmem:[%s2] sm:$0x1]
    %v244 = vlaneseq
    %v245 = vshrl.u32 %v244, 7
    %v246 = vsub.s32 0, %v245
    %v247 = vrot.slane %v242, %v246
    %v249 = vadd.f32 %v239, %v247
    %v250 = vadd.f32 %v240, %v247
    %v251 = vadd.f32 %v241, %v247
    %v252 = vld [vmem:[%s3] sm:$0xf]
    %v253 = vld [vmem:[%s3 + $0x4] sm:$0xf]
    %v254 = vld [vmem:[%s3 + $0x8] sm:$0xf]
    %v255 = vunpack.c.l.bf16 %v252
    %v256 = vunpack.c.l.bf16 %v253
    %v257 = vunpack.c.l.bf16 %v254
    %v258 = vadd.f32 %v249, %v255
    %v259 = vadd.f32 %v250, %v256
    %v260 = vadd.f32 %v251, %v257
    %261 = vadd.xlane.f32.xlu0 %v258
    %v262 = vpop.xlane.xlu0 %261
    %263 = vadd.xlane.f32.xlu0 %v259
    %v264 = vpop.xlane.xlu0 %263
    %265 = vadd.xlane.f32.xlu0 %v260
    %v266 = vpop.xlane.xlu0 %265
    %v267 = vrcp.pop 128.0
    %v268 = vmul.f32 %v262, %v267
    %v269 = vmul.f32 %v264, %v267
    %v270 = vmul.f32 %v266, %v267
    %v271 = vsub.f32 %v258, %v268
    %v272 = vsub.f32 %v259, %v269
    %v273 = vsub.f32 %v260, %v270
    %v274 = vmul.f32 %v271, %v271
    %v275 = vmul.f32 %v272, %v272
    %v276 = vmul.f32 %v273, %v273
    %277 = vadd.xlane.f32.xlu0 %v274
    %v278 = vpop.xlane.xlu0 %277
    %279 = vadd.xlane.f32.xlu0 %v275
    %v280 = vpop.xlane.xlu0 %279
    %281 = vadd.xlane.f32.xlu0 %v276
    %v282 = vpop.xlane.xlu0 %281
    %v283 = vmul.f32 %v278, %v267
    %v284 = vmul.f32 %v280, %v267
    %v285 = vmul.f32 %v282, %v267
    %v286 = vadd.f32 %v283, 1e-05
    %v287 = vadd.f32 %v284, 1e-05
    %v288 = vadd.f32 %v285, 1e-05
    %v289 = vrsqrt.pop %v286
    %v290 = vrsqrt.pop %v287
    %v291 = vrsqrt.pop %v288
    %v292 = vmul.f32 %v271, %v289
    %v293 = vmul.f32 %v272, %v290
    %v294 = vmul.f32 %v273, %v291
    %v295 = vld [vmem:[%s4] sm:$0x1]
    %v297 = vlaneseq
    %v298 = vshrl.u32 %v297, 7
    %v299 = vsub.s32 0, %v298
    %v300 = vrot.slane %v295, %v299
    %v302 = vmul.f32 %v292, %v300
    %v303 = vmul.f32 %v293, %v300
    %v304 = vmul.f32 %v294, %v300
    %v305 = vld [vmem:[%s5] sm:$0x1]
    %v307 = vlaneseq
    %v308 = vshrl.u32 %v307, 7
    %v309 = vsub.s32 0, %v308
    %v310 = vrot.slane %v305, %v309
    %v312 = vadd.f32 %v302, %v310
    %v313 = vadd.f32 %v303, %v310
    %v314 = vadd.f32 %v304, %v310
    %v315 = vpack.c.bf16 %v313, %v312
    %v316 = vpack.c.bf16 %v314, %v314
    %v319 = vunpack.c.l.b16 %v315
    %v320 = vunpack.c.h.b16 %v315
    %v321 = vunpack.c.l.b16 %v316
    %v322 = vpack.c.b16 %v319, %v319
    %v323 = vpack.c.b16 %v320, %v320
    %v324 = vpack.c.b16 %v321, %v321
    %328 = vst [vmem:[%s6] sm:$0xf] %v322
    %329 = vst [vmem:[%s6 + $0x4] sm:$0xf] %v323
    %330 = vst [vmem:[%s6 + $0x8] sm:$0xf] %v324
  $region33: #{mri_3d_vit_forward.16} parent=0 // pred_fallthru
    _
  // Predicated region
  $region34: #{mri_3d_vit_forward.16} parent=0 // pred_check
    _
  $region35: #{mri_3d_vit_forward.16} parent=0 // pred_check_branch
    %332 = sbr.rel (0) target = $region37
  $region36: #{mri_3d_vit_forward.16} parent=0 // pred_region
    _
  $region37: #{mri_3d_vit_forward.16} parent=0 // pred_fallthru
    _
  // Predicated region
  $region38: #{mri_3d_vit_forward.16} parent=0 // pred_check
    _
  $region39: #{mri_3d_vit_forward.16} parent=0 // pred_check_branch
    %334 = sbr.rel (0) target = $region41
  $region40: #{mri_3d_vit_forward.16} parent=0 // pred_region
    _
  $region41: #{mri_3d_vit_forward.16} parent=0 // pred_fallthru
    _

</llo_original>
